<compile_context>
chip_gen: v7x
topology: tpu7x:2x2x1
jax: 0.10.0
libtpu: 0.0.40
codegen_flags: <defaults>
</compile_context>

<pallas_src>
import functools

import jax
import jax.numpy as jnp
import numpy as np
from jax.experimental import pallas as pl
from jax.experimental.pallas import tpu as pltpu


def _resblock_kernel(mask_ref, x_ref, w1q_ref, w1l_ref, b1_ref,
                     w2q_ref, w2l_ref, b2_ref, o_ref, xb_ref, mid_ref, *, wp):
    # mask_ref : (M, 1)  f32   1.0 where a tall-result row is an interior
    #                          pixel of its image's padded grid, else 0.0.
    # x_ref    : (T, C)  f32   nb spatially padded images, row-major flattened
    #                          and stacked back-to-back (T = nb * Hp * Wp).
    # w*q_ref  : (2, 4C, C) bf16  conv taps 0-3 / 4-7 stacked along Cin.
    # w*l_ref  : (C, C)  bf16  lone tap 8 (dy=2, dx=2).
    # b*_ref   : (1, C)  f32
    # o_ref    : (T, C)  f32   output in the same stacked layout; only rows
    #                          [base, base+M) are written (all interior pixels
    #                          fall in that range; the wrapper slices).
    # xb_ref   : (T, C)  bf16  scratch: one-time bf16 copy of x (conv1 input).
    # mid_ref  : (T, C)  bf16  scratch: relu(conv1), re-used as conv2's input.
    T, C = x_ref.shape
    base = wp + 1
    M = T - 2 * base                      # tall-result rows == mask rows

    # One-time f32 -> bf16 cast of the conv input; the 9 overlapping window
    # reads below then load bf16 (half the vld bytes, no per-window casts).
    xb_ref[...] = x_ref[...].astype(jnp.bfloat16)

    # Only the scratch halos of `mid` need zeroing: rows [base, base+M) are
    # fully overwritten (with the mask re-zeroing every padding pixel) before
    # conv2 reads them.  Unconditional, so the batch axis stays "parallel".
    mid_ref[0:base, :] = jnp.zeros((base, C), jnp.bfloat16)
    mid_ref[T - base:T, :] = jnp.zeros((base, C), jnp.bfloat16)

    offs = [dy * wp + dx for dy in range(3) for dx in range(3)]

    def conv3x3(src_ref, wq_ref, wl_ref, b_ref):
        # Taps packed in quads along Cin -> K = 4C = 256 contractions (fills
        # the v6e/v7x MXU); 2 quad matmuls + 1 lone tap per conv, for the
        # whole nb-image slab at once.
        # TODO(synk): on v7x, if the f32 accumulate adds show up on the VALU
        # critical path, switch to explicit MRB accumulation via
        # pltpu.matmul_push_rhs / matmul_acc_lhs / matmul_pop.
        # TODO(synk): window starts (dy*Wp + dx) are sublane-misaligned; pad
        # Wp to a multiple of 8 if the bundle shows relayout pressure.
        acc = jnp.zeros((M, C), jnp.float32)
        for q in range(2):
            patch = jnp.concatenate(
                [src_ref[offs[4 * q + t]:offs[4 * q + t] + M, :]
                 for t in range(4)], axis=-1)              # (M, 4C) bf16
            acc = acc + jnp.dot(patch, wq_ref[q],
                                preferred_element_type=jnp.float32)
        acc = acc + jnp.dot(src_ref[offs[8]:offs[8] + M, :], wl_ref[...],
                            preferred_element_type=jnp.float32)
        return acc + b_ref[...]

    h = conv3x3(xb_ref, w1q_ref, w1l_ref, b1_ref)
    # ReLU, then zero every row that is not an interior pixel so the stored
    # slab is a correctly zero-padded input for conv2.
    h = jnp.maximum(h, 0.0) * mask_ref[...]
    mid_ref[base:base + M, :] = h.astype(jnp.bfloat16)

    out = conv3x3(mid_ref, w2q_ref, w2l_ref, b2_ref)
    o_ref[base:base + M, :] = x_ref[base:base + M, :] + out


def residual_block_nobn(x_nchw, w1, b1, w2, b2, *, nb=None):
    """x_nchw: (N, C, H, W) f32; w*: (3, 3, Cin, Cout) HWIO; b*: (C,)."""
    N, C, H, W = x_nchw.shape
    Hp, Wp = H + 2, W + 2
    L = Hp * Wp
    base = Wp + 1

    # Images per grid step: amortize the ~0.35us per-step overhead, but keep
    # at least 2 grid steps so both v7x TensorCores get work.
    # TODO(synk): for large H*W (real SR frames, v7x's 64 MiB VMEM) switch to
    # a row-stripe grid axis with a 2-row halo instead of whole-image slabs.
    if nb is None:
        nb = min(4, max(1, N // 2))
    nb = max(1, min(nb, N))
    while N % nb:
        nb -= 1
    G = N // nb
    T = nb * L
    M = T - 2 * base

    # NCHW -> NHWC, single spatial zero pad, flatten rows, stack nb images per
    # grid step back-to-back along the flat axis.
    # TODO(synk): keep activations NHWC end-to-end in the surrounding model to
    # drop these transposes and the post-kernel slice/transpose HBM passes.
    x = jnp.transpose(x_nchw, (0, 2, 3, 1))
    x_pad = jnp.pad(x, ((0, 0), (1, 1), (1, 1), (0, 0)))
    x_flat = x_pad.reshape(G, T, C)

    # (M, 1) interior mask, precomputed on the host: tall-result row r is
    # padded pixel base + (r % L) of image r // L; cross-image junk rows map
    # to p >= L and get 0 automatically.
    p = (np.arange(M) % L) + base
    rows, cols = p // Wp, p % Wp
    interior = ((rows >= 1) & (rows <= Hp - 2) &
                (cols >= 1) & (cols <= Wp - 2)).astype(np.float32)
    mask = jnp.asarray(interior[:, None])                      # (M, 1)

    # Conv taps (dy*3+dx, Cin, Cout); taps 0-3 / 4-7 stacked along Cin so the
    # MXU contracts K = 4C = 256; weights pre-cast to bf16.
    def prep(w):
        wr = w.reshape(9, C, C)
        quads = jnp.stack(
            [jnp.concatenate([wr[4 * q + t] for t in range(4)], axis=0)
             for q in range(2)])                               # (2, 4C, C)
        return quads.astype(jnp.bfloat16), wr[8].astype(jnp.bfloat16)

    w1q, w1l = prep(w1)
    w2q, w2l = prep(w2)
    b1r = b1.reshape(1, C).astype(jnp.float32)
    b2r = b2.reshape(1, C).astype(jnp.float32)

    kernel = functools.partial(_resblock_kernel, wp=Wp)

    # Explicit (generous but capped) scoped-VMEM budget.
    est = (2 * 2 * T * C * 4            # double-buffered x / out blocks (f32)
           + 2 * T * C * 2              # xb + mid scratch (bf16)
           + 4 * M * C * 4              # acc / patch temporaries (rough)
           + 2 * 2 * 9 * C * C * 2)     # double-buffered weights (bf16)
    vmem_limit = int(min(48 * 1024 * 1024, max(16 * 1024 * 1024, 2 * est)))

    out_flat = pl.pallas_call(
        kernel,
        out_shape=jax.ShapeDtypeStruct((G, T, C), jnp.float32),
        grid_spec=pltpu.PrefetchScalarGridSpec(
            num_scalar_prefetch=0,
            grid=(G,),
            in_specs=[
                pl.BlockSpec((M, 1), lambda g: (0, 0)),            # mask
                pl.BlockSpec((None, T, C), lambda g: (g, 0, 0)),   # x slab
                pl.BlockSpec((2, 4 * C, C), lambda g: (0, 0, 0)),  # w1 quads
                pl.BlockSpec((C, C), lambda g: (0, 0)),            # w1 tap 8
                pl.BlockSpec((1, C), lambda g: (0, 0)),            # b1
                pl.BlockSpec((2, 4 * C, C), lambda g: (0, 0, 0)),  # w2 quads
                pl.BlockSpec((C, C), lambda g: (0, 0)),            # w2 tap 8
                pl.BlockSpec((1, C), lambda g: (0, 0)),            # b2
            ],
            out_specs=pl.BlockSpec((None, T, C), lambda g: (g, 0, 0)),
            scratch_shapes=[pltpu.VMEM((T, C), jnp.bfloat16),      # xb
                            pltpu.VMEM((T, C), jnp.bfloat16)],     # mid
        ),
        compiler_params=pltpu.CompilerParams(
            dimension_semantics=("parallel",),
            vmem_limit_bytes=vmem_limit),
    )(mask, x_flat, w1q, w1l, b1r, w2q, w2l, b2r)

    # TODO(synk): C=64 < 128 lanes means o_ref stores are masked (vst.msk); a
    # lane-dense (..., 128) output repack is a possible further win (measure).
    out = out_flat.reshape(N, Hp, Wp, C)[:, 1:H + 1, 1:W + 1, :]
    return jnp.transpose(out, (0, 3, 1, 2))  # back to NCHW


def ref_forward(x_nchw, w1, b1, w2, b2):
    """Pure-JAX reference matching F.conv2d(3x3, stride 1, pad 1) semantics."""
    dn = ('NCHW', 'HWIO', 'NCHW')
    c1 = jax.lax.conv_general_dilated(x_nchw, w1, (1, 1), 'SAME',
                                      dimension_numbers=dn)
    c1 = jax.nn.relu(c1 + b1[None, :, None, None])
    c2 = jax.lax.conv_general_dilated(c1, w2, (1, 1), 'SAME',
                                      dimension_numbers=dn)
    c2 = c2 + b2[None, :, None, None]
    return x_nchw + c2


if __name__ == "__main__":
    # ResidualBlock_noBN(nf=64), small spatial extent.
    N, C, H, W = 2, 64, 16, 16
    key = jax.random.PRNGKey(0)
    kx, kw1, kw2 = jax.random.split(key, 3)

    x = jax.random.normal(kx, (N, C, H, W), jnp.float32)

    # Deterministic kaiming_normal_(a=0, mode='fan_in') * 0.1, zero bias.
    fan_in = C * 3 * 3
    std = (2.0 / fan_in) ** 0.5
    w1 = jax.random.normal(kw1, (3, 3, C, C), jnp.float32) * std * 0.1  # HWIO
    w2 = jax.random.normal(kw2, (3, 3, C, C), jnp.float32) * std * 0.1  # HWIO
    b1 = jnp.zeros((C,), jnp.float32)
    b2 = jnp.zeros((C,), jnp.float32)

    out = residual_block_nobn(x, w1, b1, w2, b2)
    out = jax.block_until_ready(out)

    ref = ref_forward(x, w1, b1, w2, b2)
    np.testing.assert_allclose(np.asarray(out), np.asarray(ref),
                               atol=1e-2, rtol=1e-2)
    print("KERNEL_OK")
</pallas_src>

<mosaic_0001>
module attributes {stable_mosaic.version = 11 : i64} {
  func.func @_resblock_kernel(%arg0: i32, %arg1: memref<286x1xf32, #tpu.memory_space<vmem>>, %arg2: memref<1x324x64xf32, #tpu.memory_space<vmem>>, %arg3: memref<2x256x64xbf16, #tpu.memory_space<vmem>>, %arg4: memref<64x64xbf16, #tpu.memory_space<vmem>>, %arg5: memref<1x64xf32, #tpu.memory_space<vmem>>, %arg6: memref<2x256x64xbf16, #tpu.memory_space<vmem>>, %arg7: memref<64x64xbf16, #tpu.memory_space<vmem>>, %arg8: memref<1x64xf32, #tpu.memory_space<vmem>>, %arg9: memref<1x324x64xf32, #tpu.memory_space<vmem>>, %arg10: memref<324x64xbf16, #tpu.memory_space<vmem>>, %arg11: memref<324x64xbf16, #tpu.memory_space<vmem>>) attributes {dimension_semantics = [#tpu.dimension_semantics<parallel>], iteration_bounds = array<i64: 2>, scalar_prefetch = 0 : i64, scratch_operands = 2 : i64, tpu.core_type = #tpu.core_type<tc>, window_params = [{pipeline_mode = #tpu.pipeline_mode<synchronous>, transform_indices = @transform_0, window_bounds = array<i64: 286, 1>}, {transform_indices = @transform_1, window_bounds = array<i64: 1, 324, 64>}, {pipeline_mode = #tpu.pipeline_mode<synchronous>, transform_indices = @transform_2, window_bounds = array<i64: 2, 256, 64>}, {pipeline_mode = #tpu.pipeline_mode<synchronous>, transform_indices = @transform_3, window_bounds = array<i64: 64, 64>}, {pipeline_mode = #tpu.pipeline_mode<synchronous>, transform_indices = @transform_4, window_bounds = array<i64: 1, 64>}, {pipeline_mode = #tpu.pipeline_mode<synchronous>, transform_indices = @transform_5, window_bounds = array<i64: 2, 256, 64>}, {pipeline_mode = #tpu.pipeline_mode<synchronous>, transform_indices = @transform_6, window_bounds = array<i64: 64, 64>}, {pipeline_mode = #tpu.pipeline_mode<synchronous>, transform_indices = @transform_7, window_bounds = array<i64: 1, 64>}, {transform_indices = @transform_8, window_bounds = array<i64: 1, 324, 64>}]} {
    %c0 = arith.constant 0 : index
    %c0_0 = arith.constant 0 : index
    %c0_1 = arith.constant 0 : index
    %0 = vector.load %arg2[%c0, %c0_0, %c0_1] : memref<1x324x64xf32, #tpu.memory_space<vmem>>, vector<1x324x64xf32>
    %1 = vector.shape_cast %0 : vector<1x324x64xf32> to vector<324x64xf32>
    %2 = arith.truncf %1 : vector<324x64xf32> to vector<324x64xbf16>
    %c0_2 = arith.constant 0 : index
    %c0_3 = arith.constant 0 : index
    %3 = vector.load %arg10[%c0_2, %c0_3] : memref<324x64xbf16, #tpu.memory_space<vmem>>, vector<324x64xbf16>
    tpu.vector_store %arg10[%c0_2, %c0_3], %2 {strides = array<i32>} : memref<324x64xbf16, #tpu.memory_space<vmem>>, vector<324x64xbf16>,
    %cst = arith.constant 0.000000e+00 : bf16
    %4 = vector.broadcast %cst : bf16 to vector<19x64xbf16>
    %c0_4 = arith.constant 0 : index
    %c0_5 = arith.constant 0 : index
    %5 = vector.load %arg11[%c0_4, %c0_5] : memref<324x64xbf16, #tpu.memory_space<vmem>>, vector<19x64xbf16>
    tpu.vector_store %arg11[%c0_4, %c0_5], %4 {strides = array<i32>} : memref<324x64xbf16, #tpu.memory_space<vmem>>, vector<19x64xbf16>,
    %cst_6 = arith.constant 0.000000e+00 : bf16
    %6 = vector.broadcast %cst_6 : bf16 to vector<19x64xbf16>
    %c305 = arith.constant 305 : index
    %c0_7 = arith.constant 0 : index
    %7 = vector.load %arg11[%c305, %c0_7] : memref<324x64xbf16, #tpu.memory_space<vmem>>, vector<19x64xbf16>
    tpu.vector_store %arg11[%c305, %c0_7], %6 {strides = array<i32>} : memref<324x64xbf16, #tpu.memory_space<vmem>>, vector<19x64xbf16>,
    %cst_8 = arith.constant 0.000000e+00 : f32
    %8 = vector.broadcast %cst_8 : f32 to vector<286x64xf32>
    %c0_9 = arith.constant 0 : index
    %c0_10 = arith.constant 0 : index
    %9 = vector.load %arg10[%c0_9, %c0_10] : memref<324x64xbf16, #tpu.memory_space<vmem>>, vector<286x64xbf16>
    %c1 = arith.constant 1 : index
    %c0_11 = arith.constant 0 : index
    %10 = vector.load %arg10[%c1, %c0_11] : memref<324x64xbf16, #tpu.memory_space<vmem>>, vector<286x64xbf16>
    %c2 = arith.constant 2 : index
    %c0_12 = arith.constant 0 : index
    %11 = vector.load %arg10[%c2, %c0_12] : memref<324x64xbf16, #tpu.memory_space<vmem>>, vector<286x64xbf16>
    %c18 = arith.constant 18 : index
    %c0_13 = arith.constant 0 : index
    %12 = vector.load %arg10[%c18, %c0_13] : memref<324x64xbf16, #tpu.memory_space<vmem>>, vector<286x64xbf16>
    %13 = tpu.concatenate %9, %10, %11, %12 in 1 : vector<286x64xbf16>, vector<286x64xbf16>, vector<286x64xbf16>, vector<286x64xbf16> -> vector<286x256xbf16>
    %c0_14 = arith.constant 0 : index
    %c0_15 = arith.constant 0 : index
    %c0_16 = arith.constant 0 : index
    %14 = vector.load %arg3[%c0_14, %c0_15, %c0_16] : memref<2x256x64xbf16, #tpu.memory_space<vmem>>, vector<1x256x64xbf16>
    %15 = vector.shape_cast %14 : vector<1x256x64xbf16> to vector<256x64xbf16>
    %cst_17 = arith.constant dense<0.000000e+00> : vector<286x64xf32>
    %16 = tpu.matmul %13, %15, %cst_17 {dimension_numbers = #tpu.dot_dimension_numbers<[1], [0], [0], [1], [0, 0, 1, 1], [], []>} : vector<286x256xbf16>, vector<256x64xbf16>, vector<286x64xf32> -> vector<286x64xf32>
    %17 = arith.addf %8, %16 : vector<286x64xf32>
    %c19 = arith.constant 19 : index
    %c0_18 = arith.constant 0 : index
    %18 = vector.load %arg10[%c19, %c0_18] : memref<324x64xbf16, #tpu.memory_space<vmem>>, vector<286x64xbf16>
    %c20 = arith.constant 20 : index
    %c0_19 = arith.constant 0 : index
    %19 = vector.load %arg10[%c20, %c0_19] : memref<324x64xbf16, #tpu.memory_space<vmem>>, vector<286x64xbf16>
    %c36 = arith.constant 36 : index
    %c0_20 = arith.constant 0 : index
    %20 = vector.load %arg10[%c36, %c0_20] : memref<324x64xbf16, #tpu.memory_space<vmem>>, vector<286x64xbf16>
    %c37 = arith.constant 37 : index
    %c0_21 = arith.constant 0 : index
    %21 = vector.load %arg10[%c37, %c0_21] : memref<324x64xbf16, #tpu.memory_space<vmem>>, vector<286x64xbf16>
    %22 = tpu.concatenate %18, %19, %20, %21 in 1 : vector<286x64xbf16>, vector<286x64xbf16>, vector<286x64xbf16>, vector<286x64xbf16> -> vector<286x256xbf16>
    %c1_22 = arith.constant 1 : index
    %c0_23 = arith.constant 0 : index
    %c0_24 = arith.constant 0 : index
    %23 = vector.load %arg3[%c1_22, %c0_23, %c0_24] : memref<2x256x64xbf16, #tpu.memory_space<vmem>>, vector<1x256x64xbf16>
    %24 = vector.shape_cast %23 : vector<1x256x64xbf16> to vector<256x64xbf16>
    %cst_25 = arith.constant dense<0.000000e+00> : vector<286x64xf32>
    %25 = tpu.matmul %22, %24, %cst_25 {dimension_numbers = #tpu.dot_dimension_numbers<[1], [0], [0], [1], [0, 0, 1, 1], [], []>} : vector<286x256xbf16>, vector<256x64xbf16>, vector<286x64xf32> -> vector<286x64xf32>
    %26 = arith.addf %17, %25 : vector<286x64xf32>
    %c38 = arith.constant 38 : index
    %c0_26 = arith.constant 0 : index
    %27 = vector.load %arg10[%c38, %c0_26] : memref<324x64xbf16, #tpu.memory_space<vmem>>, vector<286x64xbf16>
    %c0_27 = arith.constant 0 : index
    %c0_28 = arith.constant 0 : index
    %28 = vector.load %arg4[%c0_27, %c0_28] : memref<64x64xbf16, #tpu.memory_space<vmem>>, vector<64x64xbf16>
    %cst_29 = arith.constant dense<0.000000e+00> : vector<286x64xf32>
    %29 = tpu.matmul %27, %28, %cst_29 {dimension_numbers = #tpu.dot_dimension_numbers<[1], [0], [0], [1], [0, 0, 1, 1], [], []>} : vector<286x64xbf16>, vector<64x64xbf16>, vector<286x64xf32> -> vector<286x64xf32>
    %30 = arith.addf %26, %29 : vector<286x64xf32>
    %c0_30 = arith.constant 0 : index
    %c0_31 = arith.constant 0 : index
    %31 = vector.load %arg5[%c0_30, %c0_31] : memref<1x64xf32, #tpu.memory_space<vmem>>, vector<1x64xf32>
    %32 = vector.broadcast %31 : vector<1x64xf32> to vector<286x64xf32>
    %33 = arith.addf %30, %32 : vector<286x64xf32>
    %cst_32 = arith.constant 0.000000e+00 : f32
    %34 = vector.broadcast %cst_32 : f32 to vector<286x64xf32>
    %35 = arith.maximumf %33, %34 : vector<286x64xf32>
    %c0_33 = arith.constant 0 : index
    %c0_34 = arith.constant 0 : index
    %36 = vector.load %arg1[%c0_33, %c0_34] : memref<286x1xf32, #tpu.memory_space<vmem>>, vector<286x1xf32>
    %37 = vector.broadcast %36 : vector<286x1xf32> to vector<286x64xf32>
    %38 = arith.mulf %35, %37 : vector<286x64xf32>
    %39 = arith.truncf %38 : vector<286x64xf32> to vector<286x64xbf16>
    %c19_35 = arith.constant 19 : index
    %c0_36 = arith.constant 0 : index
    %40 = vector.load %arg11[%c19_35, %c0_36] : memref<324x64xbf16, #tpu.memory_space<vmem>>, vector<286x64xbf16>
    tpu.vector_store %arg11[%c19_35, %c0_36], %39 {strides = array<i32>} : memref<324x64xbf16, #tpu.memory_space<vmem>>, vector<286x64xbf16>,
    %cst_37 = arith.constant 0.000000e+00 : f32
    %41 = vector.broadcast %cst_37 : f32 to vector<286x64xf32>
    %c0_38 = arith.constant 0 : index
    %c0_39 = arith.constant 0 : index
    %42 = vector.load %arg11[%c0_38, %c0_39] : memref<324x64xbf16, #tpu.memory_space<vmem>>, vector<286x64xbf16>
    %c1_40 = arith.constant 1 : index
    %c0_41 = arith.constant 0 : index
    %43 = vector.load %arg11[%c1_40, %c0_41] : memref<324x64xbf16, #tpu.memory_space<vmem>>, vector<286x64xbf16>
    %c2_42 = arith.constant 2 : index
    %c0_43 = arith.constant 0 : index
    %44 = vector.load %arg11[%c2_42, %c0_43] : memref<324x64xbf16, #tpu.memory_space<vmem>>, vector<286x64xbf16>
    %c18_44 = arith.constant 18 : index
    %c0_45 = arith.constant 0 : index
    %45 = vector.load %arg11[%c18_44, %c0_45] : memref<324x64xbf16, #tpu.memory_space<vmem>>, vector<286x64xbf16>
    %46 = tpu.concatenate %42, %43, %44, %45 in 1 : vector<286x64xbf16>, vector<286x64xbf16>, vector<286x64xbf16>, vector<286x64xbf16> -> vector<286x256xbf16>
    %c0_46 = arith.constant 0 : index
    %c0_47 = arith.constant 0 : index
    %c0_48 = arith.constant 0 : index
    %47 = vector.load %arg6[%c0_46, %c0_47, %c0_48] : memref<2x256x64xbf16, #tpu.memory_space<vmem>>, vector<1x256x64xbf16>
    %48 = vector.shape_cast %47 : vector<1x256x64xbf16> to vector<256x64xbf16>
    %cst_49 = arith.constant dense<0.000000e+00> : vector<286x64xf32>
    %49 = tpu.matmul %46, %48, %cst_49 {dimension_numbers = #tpu.dot_dimension_numbers<[1], [0], [0], [1], [0, 0, 1, 1], [], []>} : vector<286x256xbf16>, vector<256x64xbf16>, vector<286x64xf32> -> vector<286x64xf32>
    %50 = arith.addf %41, %49 : vector<286x64xf32>
    %c19_50 = arith.constant 19 : index
    %c0_51 = arith.constant 0 : index
    %51 = vector.load %arg11[%c19_50, %c0_51] : memref<324x64xbf16, #tpu.memory_space<vmem>>, vector<286x64xbf16>
    %c20_52 = arith.constant 20 : index
    %c0_53 = arith.constant 0 : index
    %52 = vector.load %arg11[%c20_52, %c0_53] : memref<324x64xbf16, #tpu.memory_space<vmem>>, vector<286x64xbf16>
    %c36_54 = arith.constant 36 : index
    %c0_55 = arith.constant 0 : index
    %53 = vector.load %arg11[%c36_54, %c0_55] : memref<324x64xbf16, #tpu.memory_space<vmem>>, vector<286x64xbf16>
    %c37_56 = arith.constant 37 : index
    %c0_57 = arith.constant 0 : index
    %54 = vector.load %arg11[%c37_56, %c0_57] : memref<324x64xbf16, #tpu.memory_space<vmem>>, vector<286x64xbf16>
    %55 = tpu.concatenate %51, %52, %53, %54 in 1 : vector<286x64xbf16>, vector<286x64xbf16>, vector<286x64xbf16>, vector<286x64xbf16> -> vector<286x256xbf16>
    %c1_58 = arith.constant 1 : index
    %c0_59 = arith.constant 0 : index
    %c0_60 = arith.constant 0 : index
    %56 = vector.load %arg6[%c1_58, %c0_59, %c0_60] : memref<2x256x64xbf16, #tpu.memory_space<vmem>>, vector<1x256x64xbf16>
    %57 = vector.shape_cast %56 : vector<1x256x64xbf16> to vector<256x64xbf16>
    %cst_61 = arith.constant dense<0.000000e+00> : vector<286x64xf32>
    %58 = tpu.matmul %55, %57, %cst_61 {dimension_numbers = #tpu.dot_dimension_numbers<[1], [0], [0], [1], [0, 0, 1, 1], [], []>} : vector<286x256xbf16>, vector<256x64xbf16>, vector<286x64xf32> -> vector<286x64xf32>
    %59 = arith.addf %50, %58 : vector<286x64xf32>
    %c38_62 = arith.constant 38 : index
    %c0_63 = arith.constant 0 : index
    %60 = vector.load %arg11[%c38_62, %c0_63] : memref<324x64xbf16, #tpu.memory_space<vmem>>, vector<286x64xbf16>
    %c0_64 = arith.constant 0 : index
    %c0_65 = arith.constant 0 : index
    %61 = vector.load %arg7[%c0_64, %c0_65] : memref<64x64xbf16, #tpu.memory_space<vmem>>, vector<64x64xbf16>
    %cst_66 = arith.constant dense<0.000000e+00> : vector<286x64xf32>
    %62 = tpu.matmul %60, %61, %cst_66 {dimension_numbers = #tpu.dot_dimension_numbers<[1], [0], [0], [1], [0, 0, 1, 1], [], []>} : vector<286x64xbf16>, vector<64x64xbf16>, vector<286x64xf32> -> vector<286x64xf32>
    %63 = arith.addf %59, %62 : vector<286x64xf32>
    %c0_67 = arith.constant 0 : index
    %c0_68 = arith.constant 0 : index
    %64 = vector.load %arg8[%c0_67, %c0_68] : memref<1x64xf32, #tpu.memory_space<vmem>>, vector<1x64xf32>
    %65 = vector.broadcast %64 : vector<1x64xf32> to vector<286x64xf32>
    %66 = arith.addf %63, %65 : vector<286x64xf32>
    %c0_69 = arith.constant 0 : index
    %c19_70 = arith.constant 19 : index
    %c0_71 = arith.constant 0 : index
    %67 = vector.load %arg2[%c0_69, %c19_70, %c0_71] : memref<1x324x64xf32, #tpu.memory_space<vmem>>, vector<1x286x64xf32>
    %68 = vector.shape_cast %67 : vector<1x286x64xf32> to vector<286x64xf32>
    %69 = arith.addf %68, %66 : vector<286x64xf32>
    %c0_72 = arith.constant 0 : index
    %c19_73 = arith.constant 19 : index
    %c0_74 = arith.constant 0 : index
    %70 = vector.load %arg9[%c0_72, %c19_73, %c0_74] : memref<1x324x64xf32, #tpu.memory_space<vmem>>, vector<1x286x64xf32>
    %71 = vector.shape_cast %70 : vector<1x286x64xf32> to vector<286x64xf32>
    %72 = vector.shape_cast %69 : vector<286x64xf32> to vector<1x286x64xf32>
    tpu.vector_store %arg9[%c0_72, %c19_73, %c0_74], %72 {strides = array<i32>} : memref<1x324x64xf32, #tpu.memory_space<vmem>>, vector<1x286x64xf32>,
    return
  }
  func.func @transform_0(%arg0: i32) -> (i32, i32) {
    %c0_i32 = arith.constant 0 : i32
    %c0_i32_0 = arith.constant 0 : i32
    %c0_i32_1 = arith.constant 0 : i32
    return %c0_i32, %c0_i32_0 : i32, i32
  }
  func.func @transform_1(%arg0: i32) -> (i32, i32, i32) {
    %c0_i32 = arith.constant 0 : i32
    %c0_i32_0 = arith.constant 0 : i32
    %c0_i32_1 = arith.constant 0 : i32
    return %arg0, %c0_i32, %c0_i32_0 : i32, i32, i32
  }
  func.func @transform_2(%arg0: i32) -> (i32, i32, i32) {
    %c0_i32 = arith.constant 0 : i32
    %c0_i32_0 = arith.constant 0 : i32
    %c0_i32_1 = arith.constant 0 : i32
    %c0_i32_2 = arith.constant 0 : i32
    return %c0_i32, %c0_i32_0, %c0_i32_1 : i32, i32, i32
  }
  func.func @transform_3(%arg0: i32) -> (i32, i32) {
    %c0_i32 = arith.constant 0 : i32
    %c0_i32_0 = arith.constant 0 : i32
    %c0_i32_1 = arith.constant 0 : i32
    return %c0_i32, %c0_i32_0 : i32, i32
  }
  func.func @transform_4(%arg0: i32) -> (i32, i32) {
    %c0_i32 = arith.constant 0 : i32
    %c0_i32_0 = arith.constant 0 : i32
    %c0_i32_1 = arith.constant 0 : i32
    return %c0_i32, %c0_i32_0 : i32, i32
  }
  func.func @transform_5(%arg0: i32) -> (i32, i32, i32) {
    %c0_i32 = arith.constant 0 : i32
    %c0_i32_0 = arith.constant 0 : i32
    %c0_i32_1 = arith.constant 0 : i32
    %c0_i32_2 = arith.constant 0 : i32
    return %c0_i32, %c0_i32_0, %c0_i32_1 : i32, i32, i32
  }
  func.func @transform_6(%arg0: i32) -> (i32, i32) {
    %c0_i32 = arith.constant 0 : i32
    %c0_i32_0 = arith.constant 0 : i32
    %c0_i32_1 = arith.constant 0 : i32
    return %c0_i32, %c0_i32_0 : i32, i32
  }
  func.func @transform_7(%arg0: i32) -> (i32, i32) {
    %c0_i32 = arith.constant 0 : i32
    %c0_i32_0 = arith.constant 0 : i32
    %c0_i32_1 = arith.constant 0 : i32
    return %c0_i32, %c0_i32_0 : i32, i32
  }
  func.func @transform_8(%arg0: i32) -> (i32, i32, i32) {
    %c0_i32 = arith.constant 0 : i32
    %c0_i32_0 = arith.constant 0 : i32
    %c0_i32_1 = arith.constant 0 : i32
    return %arg0, %c0_i32, %c0_i32_0 : i32, i32, i32
  }
}

</mosaic_0001>

<llo_original>
// kernel: tpu_custom_call.1
$region0: #{tpu_custom_call.1}
  #allocation0 [shape = 'u32[]', space=smem, size = 0x4, offset = 0x4, fixed_abs, tag = 'smem constant byte address 0x4 - core index']
  #allocation1 [shape = 'u32[144,128]{1,0:T(1,128)}', space=vmem, size = 0x12000, scoped, tag = 'internal scratch']
  #allocation2 [shape = 'bf16[324,64]{1,0:T(8,128)(2,1)}', space=vmem, size = 0x14800, scoped, tag = 'scratch operand']
  #allocation3 [shape = 'bf16[324,64]{1,0:T(8,128)(2,1)}', space=vmem, size = 0x14800, scoped, tag = 'scratch operand']
  %s0 = inlined_call_operand.vmem [shape: f32[286,1], index: 0, kind: input, shape index: {}]
  %s1 = inlined_call_operand.vmem [shape: f32[2,324,64], index: 1, kind: input, shape index: {}]
  %s2 = inlined_call_operand.vmem [shape: bf16[2,256,64], index: 2, kind: input, shape index: {}]
  %s3 = inlined_call_operand.vmem [shape: bf16[64,64], index: 3, kind: input, shape index: {}]
  %s4 = inlined_call_operand.vmem [shape: f32[1,64], index: 4, kind: input, shape index: {}]
  %s5 = inlined_call_operand.vmem [shape: bf16[2,256,64], index: 5, kind: input, shape index: {}]
  %s6 = inlined_call_operand.vmem [shape: bf16[64,64], index: 6, kind: input, shape index: {}]
  %s7 = inlined_call_operand.vmem [shape: f32[1,64], index: 7, kind: input, shape index: {}]
  %s8 = inlined_call_operand.vmem [shape: f32[2,324,64], index: 8, kind: output, shape index: {}]
  %s9 = sld [smem:[#allocation0]]
  $region65: #{tpu_custom_call.1} parent=0
    _
  %s11 = ssub.s32 1, %s9
  %s12 = scalar_select 0, %s11, %s9
  loop: start=0, step=1, limit=4
  $region2: #{tpu_custom_call.1} parent=0 // loop_pre_header
    _
  $region3: #{tpu_custom_call.1} parent=0 // loop_header
    %s14 = sphi 0, %s18
    %p15 = scmp.ge.s32.totalorder %s14, 4
    %s22 = sphi 0, %s22
    %s24 = sphi 0, %s22
    %s25 = sphi 0, %s24
    %s39 = sphi 0, %s25
    %s45 = sphi 0, %s47
    %s48 = sphi 0, %s45
    %s49 = sphi 0, %s48
    %s65 = sphi 0, %s49
    %s69 = sphi 0, %s69
    %s71 = sphi 0, %s69
    %s72 = sphi 0, %s71
    %s86 = sphi 0, %s72
    %s90 = sphi 0, %s90
    %s92 = sphi 0, %s90
    %s93 = sphi 0, %s92
    %s107 = sphi 0, %s93
    %s111 = sphi 0, %s111
    %s113 = sphi 0, %s111
    %s114 = sphi 0, %s113
    %s128 = sphi 0, %s114
    %s132 = sphi 0, %s132
    %s134 = sphi 0, %s132
    %s135 = sphi 0, %s134
    %s149 = sphi 0, %s135
    %s153 = sphi 0, %s153
    %s155 = sphi 0, %s153
    %s156 = sphi 0, %s155
    %s170 = sphi 0, %s156
    %s174 = sphi 0, %s174
    %s176 = sphi 0, %s174
    %s177 = sphi 0, %s176
    %s191 = sphi 0, %s177
    %s197 = sphi 0, %s199
    %s200 = sphi 0, %s197
    %s201 = sphi 0, %s200
    %s217 = sphi 0, %s201
  $region4: #{tpu_custom_call.1} parent=0 // loop_header_branch
    %17 = sbr.rel (%p15) target = $region8
  $region5: #{tpu_custom_call.1} parent=0 // loop_body
    %s19 = ssub.s32 %s14, 1
    %s20 = ssub.s32 %s14, 2
    %s21 = sadd.s32 %s14, 1
    %s23 = sadd.s32 %s22, 1
    %p26 = scmp.eq.s32.totalorder %s14, 1
    %p27 = scmp.ne.s32.totalorder %s22, %s24
    %p28 = scmp.eq.s32.totalorder %s14, 0
    %p29 = por %p27, %p28
    %p30 = scmp.ne.s32.totalorder %s22, %s24
    %p31 = scmp.eq.s32.totalorder %s19, 1
    %p32 = por %p30, %p31
    %p33 = scmp.ne.s32.totalorder %s24, %s25
    %p34 = scmp.eq.s32.totalorder %s19, 0
    %p35 = por %p33, %p34
    %p36 = scmp.ne.s32.totalorder %s24, %s25
    %p37 = scmp.eq.s32.totalorder %s20, 1
    %p38 = por %p36, %p37
    %p40 = scmp.ne.s32.totalorder %s25, %s39
    %p41 = scmp.eq.s32.totalorder %s20, 0
    %p42 = por %p40, %p41
    %s43 = ssub.s32 %s14, %s21
    %p44 = scmp.eq.s32.totalorder %s43, 0
    %s46 = sadd.s32 %s45, 1
    %s47 = scalar_select %p44, %s45, %s46
    %p50 = pneg %p44
    %p51 = scmp.eq.s32.totalorder %s14, 1
    %p52 = por %p50, %p51
    %p53 = scmp.ne.s32.totalorder %s45, %s48
    %p54 = scmp.eq.s32.totalorder %s14, 0
    %p55 = por %p53, %p54
    %p56 = scmp.ne.s32.totalorder %s45, %s48
    %p57 = scmp.eq.s32.totalorder %s19, 1
    %p58 = por %p56, %p57
    %p59 = scmp.ne.s32.totalorder %s48, %s49
    %p60 = scmp.eq.s32.totalorder %s19, 0
    %p61 = por %p59, %p60
    %p62 = scmp.ne.s32.totalorder %s48, %s49
    %p63 = scmp.eq.s32.totalorder %s20, 1
    %p64 = por %p62, %p63
    %p66 = scmp.ne.s32.totalorder %s49, %s65
    %p67 = scmp.eq.s32.totalorder %s20, 0
    %p68 = por %p66, %p67
    %s70 = sadd.s32 %s69, 1
    %p73 = scmp.eq.s32.totalorder %s14, 1
    %p74 = scmp.ne.s32.totalorder %s69, %s71
    %p75 = scmp.eq.s32.totalorder %s14, 0
    %p76 = por %p74, %p75
    %p77 = scmp.ne.s32.totalorder %s69, %s71
    %p78 = scmp.eq.s32.totalorder %s19, 1
    %p79 = por %p77, %p78
    %p80 = scmp.ne.s32.totalorder %s71, %s72
    %p81 = scmp.eq.s32.totalorder %s19, 0
    %p82 = por %p80, %p81
    %p83 = scmp.ne.s32.totalorder %s71, %s72
    %p84 = scmp.eq.s32.totalorder %s20, 1
    %p85 = por %p83, %p84
    %p87 = scmp.ne.s32.totalorder %s72, %s86
    %p88 = scmp.eq.s32.totalorder %s20, 0
    %p89 = por %p87, %p88
    %s91 = sadd.s32 %s90, 1
    %p94 = scmp.eq.s32.totalorder %s14, 1
    %p95 = scmp.ne.s32.totalorder %s90, %s92
    %p96 = scmp.eq.s32.totalorder %s14, 0
    %p97 = por %p95, %p96
    %p98 = scmp.ne.s32.totalorder %s90, %s92
    %p99 = scmp.eq.s32.totalorder %s19, 1
    %p100 = por %p98, %p99
    %p101 = scmp.ne.s32.totalorder %s92, %s93
    %p102 = scmp.eq.s32.totalorder %s19, 0
    %p103 = por %p101, %p102
    %p104 = scmp.ne.s32.totalorder %s92, %s93
    %p105 = scmp.eq.s32.totalorder %s20, 1
    %p106 = por %p104, %p105
    %p108 = scmp.ne.s32.totalorder %s93, %s107
    %p109 = scmp.eq.s32.totalorder %s20, 0
    %p110 = por %p108, %p109
    %s112 = sadd.s32 %s111, 1
    %p115 = scmp.eq.s32.totalorder %s14, 1
    %p116 = scmp.ne.s32.totalorder %s111, %s113
    %p117 = scmp.eq.s32.totalorder %s14, 0
    %p118 = por %p116, %p117
    %p119 = scmp.ne.s32.totalorder %s111, %s113
    %p120 = scmp.eq.s32.totalorder %s19, 1
    %p121 = por %p119, %p120
    %p122 = scmp.ne.s32.totalorder %s113, %s114
    %p123 = scmp.eq.s32.totalorder %s19, 0
    %p124 = por %p122, %p123
    %p125 = scmp.ne.s32.totalorder %s113, %s114
    %p126 = scmp.eq.s32.totalorder %s20, 1
    %p127 = por %p125, %p126
    %p129 = scmp.ne.s32.totalorder %s114, %s128
    %p130 = scmp.eq.s32.totalorder %s20, 0
    %p131 = por %p129, %p130
    %s133 = sadd.s32 %s132, 1
    %p136 = scmp.eq.s32.totalorder %s14, 1
    %p137 = scmp.ne.s32.totalorder %s132, %s134
    %p138 = scmp.eq.s32.totalorder %s14, 0
    %p139 = por %p137, %p138
    %p140 = scmp.ne.s32.totalorder %s132, %s134
    %p141 = scmp.eq.s32.totalorder %s19, 1
    %p142 = por %p140, %p141
    %p143 = scmp.ne.s32.totalorder %s134, %s135
    %p144 = scmp.eq.s32.totalorder %s19, 0
    %p145 = por %p143, %p144
    %p146 = scmp.ne.s32.totalorder %s134, %s135
    %p147 = scmp.eq.s32.totalorder %s20, 1
    %p148 = por %p146, %p147
    %p150 = scmp.ne.s32.totalorder %s135, %s149
    %p151 = scmp.eq.s32.totalorder %s20, 0
    %p152 = por %p150, %p151
    %s154 = sadd.s32 %s153, 1
    %p157 = scmp.eq.s32.totalorder %s14, 1
    %p158 = scmp.ne.s32.totalorder %s153, %s155
    %p159 = scmp.eq.s32.totalorder %s14, 0
    %p160 = por %p158, %p159
    %p161 = scmp.ne.s32.totalorder %s153, %s155
    %p162 = scmp.eq.s32.totalorder %s19, 1
    %p163 = por %p161, %p162
    %p164 = scmp.ne.s32.totalorder %s155, %s156
    %p165 = scmp.eq.s32.totalorder %s19, 0
    %p166 = por %p164, %p165
    %p167 = scmp.ne.s32.totalorder %s155, %s156
    %p168 = scmp.eq.s32.totalorder %s20, 1
    %p169 = por %p167, %p168
    %p171 = scmp.ne.s32.totalorder %s156, %s170
    %p172 = scmp.eq.s32.totalorder %s20, 0
    %p173 = por %p171, %p172
    %s175 = sadd.s32 %s174, 1
    %p178 = scmp.eq.s32.totalorder %s14, 1
    %p179 = scmp.ne.s32.totalorder %s174, %s176
    %p180 = scmp.eq.s32.totalorder %s14, 0
    %p181 = por %p179, %p180
    %p182 = scmp.ne.s32.totalorder %s174, %s176
    %p183 = scmp.eq.s32.totalorder %s19, 1
    %p184 = por %p182, %p183
    %p185 = scmp.ne.s32.totalorder %s176, %s177
    %p186 = scmp.eq.s32.totalorder %s19, 0
    %p187 = por %p185, %p186
    %p188 = scmp.ne.s32.totalorder %s176, %s177
    %p189 = scmp.eq.s32.totalorder %s20, 1
    %p190 = por %p188, %p189
    %p192 = scmp.ne.s32.totalorder %s177, %s191
    %p193 = scmp.eq.s32.totalorder %s20, 0
    %p194 = por %p192, %p193
    %s195 = ssub.s32 %s14, %s21
    %p196 = scmp.eq.s32.totalorder %s195, 0
    %s198 = sadd.s32 %s197, 1
    %s199 = scalar_select %p196, %s197, %s198
    %p202 = pneg %p196
    %p203 = scmp.eq.s32.totalorder %s14, 1
    %p204 = por %p202, %p203
    %p205 = scmp.ne.s32.totalorder %s197, %s200
    %p206 = scmp.eq.s32.totalorder %s14, 0
    %p207 = por %p205, %p206
    %p208 = scmp.ne.s32.totalorder %s197, %s200
    %p209 = scmp.eq.s32.totalorder %s19, 1
    %p210 = por %p208, %p209
    %p211 = scmp.ne.s32.totalorder %s200, %s201
    %p212 = scmp.eq.s32.totalorder %s19, 0
    %p213 = por %p211, %p212
    %p214 = scmp.ne.s32.totalorder %s200, %s201
    %p215 = scmp.eq.s32.totalorder %s20, 1
    %p216 = por %p214, %p215
    %p218 = scmp.ne.s32.totalorder %s201, %s217
    %p219 = scmp.eq.s32.totalorder %s20, 0
    %p220 = por %p218, %p219
    %p221 = scmp.le.s32.totalorder 1, %s14
    %p222 = scmp.lt.s32.totalorder %s14, 3
    %p223 = pnand %p221, %p222
    %p224 = pneg %p223
    // Predicated region
    $region9: #{tpu_custom_call.1} parent=5 // pred_check
      _
    $region10: #{tpu_custom_call.1} parent=5 // pred_check_branch
      %226 = sbr.rel (%p223) target = $region12
    $region11: #{tpu_custom_call.1} parent=5 // pred_region
      %s227 = ssub.s32 %s14, 1
      // Predicated region
      $region13: #{tpu_custom_call.1} parent=11 // pred_check
        %p228 = pneg %p35
      $region14: #{tpu_custom_call.1} parent=11 // pred_check_branch
        %230 = sbr.rel (%p228) target = $region16
      $region15: #{tpu_custom_call.1} parent=11 // pred_region
        _
      $region16: #{tpu_custom_call.1} parent=11 // pred_fallthru
        _
      // Predicated region
      $region17: #{tpu_custom_call.1} parent=11 // pred_check
        %p231 = pneg %p82
      $region18: #{tpu_custom_call.1} parent=11 // pred_check_branch
        %233 = sbr.rel (%p231) target = $region20
      $region19: #{tpu_custom_call.1} parent=11 // pred_region
        _
      $region20: #{tpu_custom_call.1} parent=11 // pred_fallthru
        _
      // Predicated region
      $region21: #{tpu_custom_call.1} parent=11 // pred_check
        %p234 = pneg %p103
      $region22: #{tpu_custom_call.1} parent=11 // pred_check_branch
        %236 = sbr.rel (%p234) target = $region24
      $region23: #{tpu_custom_call.1} parent=11 // pred_region
        _
      $region24: #{tpu_custom_call.1} parent=11 // pred_fallthru
        _
      // Predicated region
      $region25: #{tpu_custom_call.1} parent=11 // pred_check
        %p237 = pneg %p124
      $region26: #{tpu_custom_call.1} parent=11 // pred_check_branch
        %239 = sbr.rel (%p237) target = $region28
      $region27: #{tpu_custom_call.1} parent=11 // pred_region
        _
      $region28: #{tpu_custom_call.1} parent=11 // pred_fallthru
        _
      // Predicated region
      $region29: #{tpu_custom_call.1} parent=11 // pred_check
        %p240 = pneg %p145
      $region30: #{tpu_custom_call.1} parent=11 // pred_check_branch
        %242 = sbr.rel (%p240) target = $region32
      $region31: #{tpu_custom_call.1} parent=11 // pred_region
        _
      $region32: #{tpu_custom_call.1} parent=11 // pred_fallthru
        _
      // Predicated region
      $region33: #{tpu_custom_call.1} parent=11 // pred_check
        %p243 = pneg %p166
      $region34: #{tpu_custom_call.1} parent=11 // pred_check_branch
        %245 = sbr.rel (%p243) target = $region36
      $region35: #{tpu_custom_call.1} parent=11 // pred_region
        _
      $region36: #{tpu_custom_call.1} parent=11 // pred_fallthru
        _
      // Predicated region
      $region37: #{tpu_custom_call.1} parent=11 // pred_check
        %p246 = pneg %p187
      $region38: #{tpu_custom_call.1} parent=11 // pred_check_branch
        %248 = sbr.rel (%p246) target = $region40
      $region39: #{tpu_custom_call.1} parent=11 // pred_region
        _
      $region40: #{tpu_custom_call.1} parent=11 // pred_fallthru
        _
    $region12: #{tpu_custom_call.1} parent=5 // pred_fallthru
      _
    %p249 = scmp.lt.s32.totalorder %s14, 2
    // Predicated region
    $region41: #{tpu_custom_call.1} parent=5 // pred_check
      %p250 = pneg %p249
    $region42: #{tpu_custom_call.1} parent=5 // pred_check_branch
      %252 = sbr.rel (%p250) target = $region44
    $region43: #{tpu_custom_call.1} parent=5 // pred_region
      // Predicated region
      $region45: #{tpu_custom_call.1} parent=43 // pred_check
        %p253 = pneg %p55
      $region46: #{tpu_custom_call.1} parent=43 // pred_check_branch
        %255 = sbr.rel (%p253) target = $region48
      $region47: #{tpu_custom_call.1} parent=43 // pred_region
        %p256 = scmp.lt.s32.totalorder %s14, 1
        %s257 = scalar_select %p256, %s14, 1
        %s258 = smul.addr %s257, 41
        %s259 = smul.addr %s258, 8
        %s260 = scalar_lea.vmem %s1, %s259
      $region48: #{tpu_custom_call.1} parent=43 // pred_fallthru
        _
    $region44: #{tpu_custom_call.1} parent=5 // pred_fallthru
      _
    %p261 = scmp.le.s32.totalorder 1, %s14
    %p262 = scmp.lt.s32.totalorder %s14, 3
    %p263 = pnand %p261, %p262
    %p264 = pneg %p263
    // Predicated region
    $region49: #{tpu_custom_call.1} parent=5 // pred_check
      _
    $region50: #{tpu_custom_call.1} parent=5 // pred_check_branch
      %266 = sbr.rel (%p263) target = $region52
    $region51: #{tpu_custom_call.1} parent=5 // pred_region
      %s267 = ssub.s32 %s14, 1
      %p268 = pneg %p35
      %p269 = pneg %p32
      %p270 = scmp.lt.s32.totalorder %s19, 1
      %s271 = scalar_select %p270, %s19, 1
      %s272 = smul.addr %s271, 41
      %s273 = smul.addr %s272, 8
      %s274 = scalar_lea.vmem %s1, %s273
      %p275 = pneg %p61
      %p276 = pneg %p58
      %p277 = pneg %p82
      %p278 = pneg %p79
      %p279 = pneg %p103
      %p280 = pneg %p100
      %p281 = pneg %p124
      %p282 = pneg %p121
      %p283 = pneg %p145
      %p284 = pneg %p142
      %p285 = pneg %p166
      %p286 = pneg %p163
      %p287 = pneg %p187
      %p288 = pneg %p184
      %p289 = pneg %p213
      %p290 = pneg %p210
      %p291 = scmp.lt.s32.totalorder %s19, 1
      %s292 = scalar_select %p291, %s19, 1
      %s293 = smul.addr %s292, 41
      %s294 = smul.addr %s293, 8
      %s295 = scalar_lea.vmem %s8, %s294
      %p296 = scmp.lt.s32.totalorder %s19, 1
      %s297 = scalar_select %p296, %s19, 1
      %s298 = smul.addr %s297, 41
      %s299 = smul.addr %s298, 8
      %s300 = scalar_lea.vmem %s1, %s299
      %p301 = scmp.lt.s32.totalorder %s19, 1
      %s302 = scalar_select %p301, %s19, 1
      %s303 = smul.addr %s302, 41
      %s304 = smul.addr %s303, 8
      %s305 = scalar_lea.vmem %s8, %s304
      %v307 = vld [vmem:[%s300] sm:$0xff]
      %v308 = vld [vmem:[%s300 + $0x8] sm:$0xff]
      %v309 = vld [vmem:[%s300 + $0x10] sm:$0xff]
      %v310 = vld [vmem:[%s300 + $0x18] sm:$0xff]
      %v311 = vld [vmem:[%s300 + $0x20] sm:$0xff]
      %v312 = vld [vmem:[%s300 + $0x28] sm:$0xff]
      %v313 = vld [vmem:[%s300 + $0x30] sm:$0xff]
      %v314 = vld [vmem:[%s300 + $0x38] sm:$0xff]
      %v315 = vld [vmem:[%s300 + $0x40] sm:$0xff]
      %v316 = vld [vmem:[%s300 + $0x48] sm:$0xff]
      %v317 = vld [vmem:[%s300 + $0x50] sm:$0xff]
      %v318 = vld [vmem:[%s300 + $0x58] sm:$0xff]
      %v319 = vld [vmem:[%s300 + $0x60] sm:$0xff]
      %v320 = vld [vmem:[%s300 + $0x68] sm:$0xff]
      %v321 = vld [vmem:[%s300 + $0x70] sm:$0xff]
      %v322 = vld [vmem:[%s300 + $0x78] sm:$0xff]
      %v323 = vld [vmem:[%s300 + $0x80] sm:$0xff]
      %v324 = vld [vmem:[%s300 + $0x88] sm:$0xff]
      %v325 = vld [vmem:[%s300 + $0x90] sm:$0xff]
      %v326 = vld [vmem:[%s300 + $0x98] sm:$0xff]
      %v327 = vld [vmem:[%s300 + $0xa0] sm:$0xff]
      %v328 = vld [vmem:[%s300 + $0xa8] sm:$0xff]
      %v329 = vld [vmem:[%s300 + $0xb0] sm:$0xff]
      %v330 = vld [vmem:[%s300 + $0xb8] sm:$0xff]
      %v331 = vld [vmem:[%s300 + $0xc0] sm:$0xff]
      %v332 = vld [vmem:[%s300 + $0xc8] sm:$0xff]
      %v333 = vld [vmem:[%s300 + $0xd0] sm:$0xff]
      %v334 = vld [vmem:[%s300 + $0xd8] sm:$0xff]
      %v335 = vld [vmem:[%s300 + $0xe0] sm:$0xff]
      %v336 = vld [vmem:[%s300 + $0xe8] sm:$0xff]
      %v337 = vld [vmem:[%s300 + $0xf0] sm:$0xff]
      %v338 = vld [vmem:[%s300 + $0xf8] sm:$0xff]
      %v339 = vld [vmem:[%s300 + $0x100] sm:$0xff]
      %v340 = vld [vmem:[%s300 + $0x108] sm:$0xff]
      %v341 = vld [vmem:[%s300 + $0x110] sm:$0xff]
      %v342 = vld [vmem:[%s300 + $0x118] sm:$0xff]
      %v343 = vld [vmem:[%s300 + $0x120] sm:$0xff]
      %v344 = vld [vmem:[%s300 + $0x128] sm:$0xff]
      %v345 = vld [vmem:[%s300 + $0x130] sm:$0xff]
      %v346 = vld [vmem:[%s300 + $0x138] sm:$0xff]
      %v347 = vld [vmem:[%s300 + $0x140] sm:$0xf]
      %v348 = vpack.c.bf16 %v308, %v307
      %v349 = vpack.c.bf16 %v310, %v309
      %v350 = vpack.c.bf16 %v312, %v311
      %v351 = vpack.c.bf16 %v314, %v313
      %v352 = vpack.c.bf16 %v316, %v315
      %v353 = vpack.c.bf16 %v318, %v317
      %v354 = vpack.c.bf16 %v320, %v319
      %v355 = vpack.c.bf16 %v322, %v321
      %v356 = vpack.c.bf16 %v324, %v323
      %v357 = vpack.c.bf16 %v326, %v325
      %v358 = vpack.c.bf16 %v328, %v327
      %v359 = vpack.c.bf16 %v330, %v329
      %v360 = vpack.c.bf16 %v332, %v331
      %v361 = vpack.c.bf16 %v334, %v333
      %v362 = vpack.c.bf16 %v336, %v335
      %v363 = vpack.c.bf16 %v338, %v337
      %v364 = vpack.c.bf16 %v340, %v339
      %v365 = vpack.c.bf16 %v342, %v341
      %v366 = vpack.c.bf16 %v344, %v343
      %v367 = vpack.c.bf16 %v346, %v345
      %v368 = vpack.c.bf16 %v347, %v347
      %v390 = vunpack.c.l.b16 %v348
      %v391 = vunpack.c.h.b16 %v348
      %v392 = vunpack.c.l.b16 %v349
      %v393 = vunpack.c.h.b16 %v349
      %v394 = vunpack.c.l.b16 %v350
      %v395 = vunpack.c.h.b16 %v350
      %v396 = vunpack.c.l.b16 %v351
      %v397 = vunpack.c.h.b16 %v351
      %v398 = vunpack.c.l.b16 %v352
      %v399 = vunpack.c.h.b16 %v352
      %v400 = vunpack.c.l.b16 %v353
      %v401 = vunpack.c.h.b16 %v353
      %v402 = vunpack.c.l.b16 %v354
      %v403 = vunpack.c.h.b16 %v354
      %v404 = vunpack.c.l.b16 %v355
      %v405 = vunpack.c.h.b16 %v355
      %v406 = vunpack.c.l.b16 %v356
      %v407 = vunpack.c.h.b16 %v356
      %v408 = vunpack.c.l.b16 %v357
      %v409 = vunpack.c.h.b16 %v357
      %v410 = vunpack.c.l.b16 %v358
      %v411 = vunpack.c.h.b16 %v358
      %v412 = vunpack.c.l.b16 %v359
      %v413 = vunpack.c.h.b16 %v359
      %v414 = vunpack.c.l.b16 %v360
      %v415 = vunpack.c.h.b16 %v360
      %v416 = vunpack.c.l.b16 %v361
      %v417 = vunpack.c.h.b16 %v361
      %v418 = vunpack.c.l.b16 %v362
      %v419 = vunpack.c.h.b16 %v362
      %v420 = vunpack.c.l.b16 %v363
      %v421 = vunpack.c.h.b16 %v363
      %v422 = vunpack.c.l.b16 %v364
      %v423 = vunpack.c.h.b16 %v364
      %v424 = vunpack.c.l.b16 %v365
      %v425 = vunpack.c.h.b16 %v365
      %v426 = vunpack.c.l.b16 %v366
      %v427 = vunpack.c.h.b16 %v366
      %v428 = vunpack.c.l.b16 %v367
      %v429 = vunpack.c.h.b16 %v367
      %v430 = vunpack.c.l.b16 %v368
      %v431 = vpack.c.b16 %v390, %v390
      %v432 = vpack.c.b16 %v391, %v391
      %v433 = vpack.c.b16 %v392, %v392
      %v434 = vpack.c.b16 %v393, %v393
      %v435 = vpack.c.b16 %v394, %v394
      %v436 = vpack.c.b16 %v395, %v395
      %v437 = vpack.c.b16 %v396, %v396
      %v438 = vpack.c.b16 %v397, %v397
      %v439 = vpack.c.b16 %v398, %v398
      %v440 = vpack.c.b16 %v399, %v399
      %v441 = vpack.c.b16 %v400, %v400
      %v442 = vpack.c.b16 %v401, %v401
      %v443 = vpack.c.b16 %v402, %v402
      %v444 = vpack.c.b16 %v403, %v403
      %v445 = vpack.c.b16 %v404, %v404
      %v446 = vpack.c.b16 %v405, %v405
      %v447 = vpack.c.b16 %v406, %v406
      %v448 = vpack.c.b16 %v407, %v407
      %v449 = vpack.c.b16 %v408, %v408
      %v450 = vpack.c.b16 %v409, %v409
      %v451 = vpack.c.b16 %v410, %v410
      %v452 = vpack.c.b16 %v411, %v411
      %v453 = vpack.c.b16 %v412, %v412
      %v454 = vpack.c.b16 %v413, %v413
      %v455 = vpack.c.b16 %v414, %v414
      %v456 = vpack.c.b16 %v415, %v415
      %v457 = vpack.c.b16 %v416, %v416
      %v458 = vpack.c.b16 %v417, %v417
      %v459 = vpack.c.b16 %v418, %v418
      %v460 = vpack.c.b16 %v419, %v419
      %v461 = vpack.c.b16 %v420, %v420
      %v462 = vpack.c.b16 %v421, %v421
      %v463 = vpack.c.b16 %v422, %v422
      %v464 = vpack.c.b16 %v423, %v423
      %v465 = vpack.c.b16 %v424, %v424
      %v466 = vpack.c.b16 %v425, %v425
      %v467 = vpack.c.b16 %v426, %v426
      %v468 = vpack.c.b16 %v427, %v427
      %v469 = vpack.c.b16 %v428, %v428
      %v470 = vpack.c.b16 %v429, %v429
      %v471 = vpack.c.b16 %v430, %v430
      %vm513 = vcmask 519168
      %514 = vst.msk [vmem:[#allocation2] sm:$0xf] %vm513, %v431
      %515 = vst.msk [vmem:[#allocation2 + $0x4] sm:$0xf] %vm513, %v432
      %516 = vst.msk [vmem:[#allocation2 + $0x8] sm:$0xf] %vm513, %v433
      %517 = vst.msk [vmem:[#allocation2 + $0xc] sm:$0xf] %vm513, %v434
      %518 = vst.msk [vmem:[#allocation2 + $0x10] sm:$0xf] %vm513, %v435
      %519 = vst.msk [vmem:[#allocation2 + $0x14] sm:$0xf] %vm513, %v436
      %520 = vst.msk [vmem:[#allocation2 + $0x18] sm:$0xf] %vm513, %v437
      %521 = vst.msk [vmem:[#allocation2 + $0x1c] sm:$0xf] %vm513, %v438
      %522 = vst.msk [vmem:[#allocation2 + $0x20] sm:$0xf] %vm513, %v439
      %523 = vst.msk [vmem:[#allocation2 + $0x24] sm:$0xf] %vm513, %v440
      %524 = vst.msk [vmem:[#allocation2 + $0x28] sm:$0xf] %vm513, %v441
      %525 = vst.msk [vmem:[#allocation2 + $0x2c] sm:$0xf] %vm513, %v442
      %526 = vst.msk [vmem:[#allocation2 + $0x30] sm:$0xf] %vm513, %v443
      %527 = vst.msk [vmem:[#allocation2 + $0x34] sm:$0xf] %vm513, %v444
      %528 = vst.msk [vmem:[#allocation2 + $0x38] sm:$0xf] %vm513, %v445
      %529 = vst.msk [vmem:[#allocation2 + $0x3c] sm:$0xf] %vm513, %v446
      %530 = vst.msk [vmem:[#allocation2 + $0x40] sm:$0xf] %vm513, %v447
      %531 = vst.msk [vmem:[#allocation2 + $0x44] sm:$0xf] %vm513, %v448
      %532 = vst.msk [vmem:[#allocation2 + $0x48] sm:$0xf] %vm513, %v449
      %533 = vst.msk [vmem:[#allocation2 + $0x4c] sm:$0xf] %vm513, %v450
      %534 = vst.msk [vmem:[#allocation2 + $0x50] sm:$0xf] %vm513, %v451
      %535 = vst.msk [vmem:[#allocation2 + $0x54] sm:$0xf] %vm513, %v452
      %536 = vst.msk [vmem:[#allocation2 + $0x58] sm:$0xf] %vm513, %v453
      %537 = vst.msk [vmem:[#allocation2 + $0x5c] sm:$0xf] %vm513, %v454
      %538 = vst.msk [vmem:[#allocation2 + $0x60] sm:$0xf] %vm513, %v455
      %539 = vst.msk [vmem:[#allocation2 + $0x64] sm:$0xf] %vm513, %v456
      %540 = vst.msk [vmem:[#allocation2 + $0x68] sm:$0xf] %vm513, %v457
      %541 = vst.msk [vmem:[#allocation2 + $0x6c] sm:$0xf] %vm513, %v458
      %542 = vst.msk [vmem:[#allocation2 + $0x70] sm:$0xf] %vm513, %v459
      %543 = vst.msk [vmem:[#allocation2 + $0x74] sm:$0xf] %vm513, %v460
      %544 = vst.msk [vmem:[#allocation2 + $0x78] sm:$0xf] %vm513, %v461
      %545 = vst.msk [vmem:[#allocation2 + $0x7c] sm:$0xf] %vm513, %v462
      %546 = vst.msk [vmem:[#allocation2 + $0x80] sm:$0xf] %vm513, %v463
      %547 = vst.msk [vmem:[#allocation2 + $0x84] sm:$0xf] %vm513, %v464
      %548 = vst.msk [vmem:[#allocation2 + $0x88] sm:$0xf] %vm513, %v465
      %549 = vst.msk [vmem:[#allocation2 + $0x8c] sm:$0xf] %vm513, %v466
      %550 = vst.msk [vmem:[#allocation2 + $0x90] sm:$0xf] %vm513, %v467
      %551 = vst.msk [vmem:[#allocation2 + $0x94] sm:$0xf] %vm513, %v468
      %552 = vst.msk [vmem:[#allocation2 + $0x98] sm:$0xf] %vm513, %v469
      %553 = vst.msk [vmem:[#allocation2 + $0x9c] sm:$0xf] %vm513, %v470
      %vm554 = vcmask 517120
      %555 = vst.msk [vmem:[#allocation2 + $0xa0] sm:$0x3] %vm554, %v471
      %556 = vst.msk [vmem:[#allocation3] sm:$0xf] %vm513, 0
      %557 = vst.msk [vmem:[#allocation3 + $0x4] sm:$0xf] %vm513, 0
      %vm558 = vcmask 517120
      %vm559 = vsmask.f32 1280
      %vm560 = vmand %vm558, %vm559
      %v561 = vld [vmem:[#allocation3 + $0x8] sm:$0x3]
      %v562 = vsel %vm560, 0, %v561
      %563 = vst [vmem:[#allocation3 + $0x8] sm:$0x3] %v562
      %vm564 = vcmask 519168
      %vm565 = vsmask.f32 7938
      %vm566 = vmand %vm564, %vm565
      %v567 = vld [vmem:[#allocation3 + $0x98] sm:$0xf]
      %v568 = vsel %vm566, 0, %v567
      %569 = vst [vmem:[#allocation3 + $0x98] sm:$0xf] %v568
      %570 = vst.msk [vmem:[#allocation3 + $0x9c] sm:$0xf] %vm513, 0
      %571 = vst.msk [vmem:[#allocation3 + $0xa0] sm:$0x3] %vm554, 0
      %v572 = vld [vmem:[#allocation2] sm:$0xf]
      %v573 = vld [vmem:[#allocation2 + $0x4] sm:$0xf]
      %v574 = vld [vmem:[#allocation2 + $0x8] sm:$0xf]
      %v575 = vld [vmem:[#allocation2 + $0xc] sm:$0xf]
      %v576 = vld [vmem:[#allocation2 + $0x10] sm:$0xf]
      %v577 = vld [vmem:[#allocation2 + $0x14] sm:$0xf]
      %v578 = vld [vmem:[#allocation2 + $0x18] sm:$0xf]
      %v579 = vld [vmem:[#allocation2 + $0x1c] sm:$0xf]
      %v580 = vld [vmem:[#allocation2 + $0x20] sm:$0xf]
      %v581 = vld [vmem:[#allocation2 + $0x24] sm:$0xf]
      %v582 = vld [vmem:[#allocation2 + $0x28] sm:$0xf]
      %v583 = vld [vmem:[#allocation2 + $0x2c] sm:$0xf]
      %v584 = vld [vmem:[#allocation2 + $0x30] sm:$0xf]
      %v585 = vld [vmem:[#allocation2 + $0x34] sm:$0xf]
      %v586 = vld [vmem:[#allocation2 + $0x38] sm:$0xf]
      %v587 = vld [vmem:[#allocation2 + $0x3c] sm:$0xf]
      %v588 = vld [vmem:[#allocation2 + $0x40] sm:$0xf]
      %v589 = vld [vmem:[#allocation2 + $0x44] sm:$0xf]
      %v590 = vld [vmem:[#allocation2 + $0x48] sm:$0xf]
      %v591 = vld [vmem:[#allocation2 + $0x4c] sm:$0xf]
      %v592 = vld [vmem:[#allocation2 + $0x50] sm:$0xf]
      %v593 = vld [vmem:[#allocation2 + $0x54] sm:$0xf]
      %v594 = vld [vmem:[#allocation2 + $0x58] sm:$0xf]
      %v595 = vld [vmem:[#allocation2 + $0x5c] sm:$0xf]
      %v596 = vld [vmem:[#allocation2 + $0x60] sm:$0xf]
      %v597 = vld [vmem:[#allocation2 + $0x64] sm:$0xf]
      %v598 = vld [vmem:[#allocation2 + $0x68] sm:$0xf]
      %v599 = vld [vmem:[#allocation2 + $0x6c] sm:$0xf]
      %v600 = vld [vmem:[#allocation2 + $0x70] sm:$0xf]
      %v601 = vld [vmem:[#allocation2 + $0x74] sm:$0xf]
      %v602 = vld [vmem:[#allocation2 + $0x78] sm:$0xf]
      %v603 = vld [vmem:[#allocation2 + $0x7c] sm:$0xf]
      %v604 = vld [vmem:[#allocation2 + $0x80] sm:$0xf]
      %v605 = vld [vmem:[#allocation2 + $0x84] sm:$0xf]
      %v606 = vld [vmem:[#allocation2 + $0x88] sm:$0xf]
      %v607 = vld [vmem:[#allocation2 + $0x8c] sm:$0x7]
      %v608 = vld [vmem:[#allocation2 + $0x8c] sm:$0xf]
      %v609 = vld [vmem:[#allocation2] sm:$0xe]
      %v610 = vld [vmem:[#allocation2 + $0x8] sm:$0xe]
      %v611 = vld [vmem:[#allocation2 + $0x90] sm:$0xf]
      %v612 = vld [vmem:[#allocation2 + $0x94] sm:$0xf]
      %v649 = vunpack.c.l.b16 %v572
      %v650 = vunpack.c.l.b16 %v573
      %v651 = vunpack.c.l.b16 %v574
      %v652 = vunpack.c.l.b16 %v575
      %v653 = vunpack.c.l.b16 %v576
      %v654 = vunpack.c.l.b16 %v577
      %v655 = vunpack.c.l.b16 %v578
      %v656 = vunpack.c.l.b16 %v579
      %v657 = vunpack.c.l.b16 %v580
      %v658 = vunpack.c.l.b16 %v581
      %v659 = vunpack.c.l.b16 %v582
      %v660 = vunpack.c.l.b16 %v583
      %v661 = vunpack.c.l.b16 %v584
      %v662 = vunpack.c.l.b16 %v585
      %v663 = vunpack.c.l.b16 %v586
      %v664 = vunpack.c.l.b16 %v587
      %v665 = vunpack.c.l.b16 %v588
      %v666 = vunpack.c.l.b16 %v589
      %v667 = vunpack.c.l.b16 %v590
      %v668 = vunpack.c.l.b16 %v591
      %v669 = vunpack.c.l.b16 %v592
      %v670 = vunpack.c.l.b16 %v593
      %v671 = vunpack.c.l.b16 %v594
      %v672 = vunpack.c.l.b16 %v595
      %v673 = vunpack.c.l.b16 %v596
      %v674 = vunpack.c.l.b16 %v597
      %v675 = vunpack.c.l.b16 %v598
      %v676 = vunpack.c.l.b16 %v599
      %v677 = vunpack.c.l.b16 %v600
      %v678 = vunpack.c.l.b16 %v601
      %v679 = vunpack.c.l.b16 %v602
      %v680 = vunpack.c.l.b16 %v603
      %v681 = vunpack.c.l.b16 %v604
      %v682 = vunpack.c.l.b16 %v605
      %v683 = vunpack.c.l.b16 %v606
      %v684 = vunpack.c.l.b16 %v607
      %v685 = vpack.c.b16 %v650, %v649
      %v686 = vpack.c.b16 %v652, %v651
      %v687 = vpack.c.b16 %v654, %v653
      %v688 = vpack.c.b16 %v656, %v655
      %v689 = vpack.c.b16 %v658, %v657
      %v690 = vpack.c.b16 %v660, %v659
      %v691 = vpack.c.b16 %v662, %v661
      %v692 = vpack.c.b16 %v664, %v663
      %v693 = vpack.c.b16 %v666, %v665
      %v694 = vpack.c.b16 %v668, %v667
      %v695 = vpack.c.b16 %v670, %v669
      %v696 = vpack.c.b16 %v672, %v671
      %v697 = vpack.c.b16 %v674, %v673
      %v698 = vpack.c.b16 %v676, %v675
      %v699 = vpack.c.b16 %v678, %v677
      %v700 = vpack.c.b16 %v680, %v679
      %v701 = vpack.c.b16 %v682, %v681
      %v702 = vpack.c.b16 %v684, %v683
      %v704 = vunpack.c.l.b16 %v608
      %v705 = vpack.c.b16 %v704, %v683
      %vm706 = vsmask.f32 7424
      %v708 = vshrl.u32 %v685, 16
      %v710 = vshll.u32 %v685, 16
      %v712 = vrot.slane %v710, 1
      %v713 = vor.u32 %v708, %v712
      %v715 = vshll.u32 %v686, 16
      %v717 = vrot.slane %v715, 1
      %v718 = vsel %vm706, %v713, %v717
      %v719 = vshrl.u32 %v686, 16
      %v721 = vor.u32 %v719, %v717
      %v723 = vshll.u32 %v687, 16
      %v725 = vrot.slane %v723, 1
      %v726 = vsel %vm706, %v721, %v725
      %v727 = vshrl.u32 %v687, 16
      %v729 = vor.u32 %v727, %v725
      %v731 = vshll.u32 %v688, 16
      %v733 = vrot.slane %v731, 1
      %v734 = vsel %vm706, %v729, %v733
      %v735 = vshrl.u32 %v688, 16
      %v737 = vor.u32 %v735, %v733
      %v739 = vshll.u32 %v689, 16
      %v741 = vrot.slane %v739, 1
      %v742 = vsel %vm706, %v737, %v741
      %v743 = vshrl.u32 %v689, 16
      %v745 = vor.u32 %v743, %v741
      %v747 = vshll.u32 %v690, 16
      %v749 = vrot.slane %v747, 1
      %v750 = vsel %vm706, %v745, %v749
      %v751 = vshrl.u32 %v690, 16
      %v753 = vor.u32 %v751, %v749
      %v755 = vshll.u32 %v691, 16
      %v757 = vrot.slane %v755, 1
      %v758 = vsel %vm706, %v753, %v757
      %v759 = vshrl.u32 %v691, 16
      %v761 = vor.u32 %v759, %v757
      %v763 = vshll.u32 %v692, 16
      %v765 = vrot.slane %v763, 1
      %v766 = vsel %vm706, %v761, %v765
      %v767 = vshrl.u32 %v692, 16
      %v769 = vor.u32 %v767, %v765
      %v771 = vshll.u32 %v693, 16
      %v773 = vrot.slane %v771, 1
      %v774 = vsel %vm706, %v769, %v773
      %v775 = vshrl.u32 %v693, 16
      %v777 = vor.u32 %v775, %v773
      %v779 = vshll.u32 %v694, 16
      %v781 = vrot.slane %v779, 1
      %v782 = vsel %vm706, %v777, %v781
      %v783 = vshrl.u32 %v694, 16
      %v785 = vor.u32 %v783, %v781
      %v787 = vshll.u32 %v695, 16
      %v789 = vrot.slane %v787, 1
      %v790 = vsel %vm706, %v785, %v789
      %v791 = vshrl.u32 %v695, 16
      %v793 = vor.u32 %v791, %v789
      %v795 = vshll.u32 %v696, 16
      %v797 = vrot.slane %v795, 1
      %v798 = vsel %vm706, %v793, %v797
      %v799 = vshrl.u32 %v696, 16
      %v801 = vor.u32 %v799, %v797
      %v803 = vshll.u32 %v697, 16
      %v805 = vrot.slane %v803, 1
      %v806 = vsel %vm706, %v801, %v805
      %v807 = vshrl.u32 %v697, 16
      %v809 = vor.u32 %v807, %v805
      %v811 = vshll.u32 %v698, 16
      %v813 = vrot.slane %v811, 1
      %v814 = vsel %vm706, %v809, %v813
      %v815 = vshrl.u32 %v698, 16
      %v817 = vor.u32 %v815, %v813
      %v819 = vshll.u32 %v699, 16
      %v821 = vrot.slane %v819, 1
      %v822 = vsel %vm706, %v817, %v821
      %v823 = vshrl.u32 %v699, 16
      %v825 = vor.u32 %v823, %v821
      %v827 = vshll.u32 %v700, 16
      %v829 = vrot.slane %v827, 1
      %v830 = vsel %vm706, %v825, %v829
      %v831 = vshrl.u32 %v700, 16
      %v833 = vor.u32 %v831, %v829
      %v835 = vshll.u32 %v701, 16
      %v837 = vrot.slane %v835, 1
      %v838 = vsel %vm706, %v833, %v837
      %v839 = vshrl.u32 %v701, 16
      %v841 = vor.u32 %v839, %v837
      %v843 = vshll.u32 %v705, 16
      %v845 = vrot.slane %v843, 1
      %v846 = vsel %vm706, %v841, %v845
      %v847 = vshrl.u32 %v705, 16
      %v849 = vor.u32 %v847, %v845
      %850 = vrot.lane.b32.xlu0 %v718, 64
      %v851 = vpop.permute.xlu0 %850
      %852 = vrot.lane.b32.xlu0 %v726, 64
      %v853 = vpop.permute.xlu0 %852
      %854 = vrot.lane.b32.xlu0 %v734, 64
      %v855 = vpop.permute.xlu0 %854
      %856 = vrot.lane.b32.xlu0 %v742, 64
      %v857 = vpop.permute.xlu0 %856
      %858 = vrot.lane.b32.xlu0 %v750, 64
      %v859 = vpop.permute.xlu0 %858
      %860 = vrot.lane.b32.xlu0 %v758, 64
      %v861 = vpop.permute.xlu0 %860
      %862 = vrot.lane.b32.xlu0 %v766, 64
      %v863 = vpop.permute.xlu0 %862
      %864 = vrot.lane.b32.xlu0 %v774, 64
      %v865 = vpop.permute.xlu0 %864
      %866 = vrot.lane.b32.xlu0 %v782, 64
      %v867 = vpop.permute.xlu0 %866
      %868 = vrot.lane.b32.xlu0 %v790, 64
      %v869 = vpop.permute.xlu0 %868
      %870 = vrot.lane.b32.xlu0 %v798, 64
      %v871 = vpop.permute.xlu0 %870
      %872 = vrot.lane.b32.xlu0 %v806, 64
      %v873 = vpop.permute.xlu0 %872
      %874 = vrot.lane.b32.xlu0 %v814, 64
      %v875 = vpop.permute.xlu0 %874
      %876 = vrot.lane.b32.xlu0 %v822, 64
      %v877 = vpop.permute.xlu0 %876
      %878 = vrot.lane.b32.xlu0 %v830, 64
      %v879 = vpop.permute.xlu0 %878
      %880 = vrot.lane.b32.xlu0 %v838, 64
      %v881 = vpop.permute.xlu0 %880
      %882 = vrot.lane.b32.xlu0 %v846, 64
      %v883 = vpop.permute.xlu0 %882
      %884 = vrot.lane.b32.xlu0 %v849, 64
      %v885 = vpop.permute.xlu0 %884
      %v887 = vunpack.c.l.b16 %v609
      %v888 = vpack.c.b16 %v650, %v887
      %vm889 = vcmask 1046528
      %v890 = vrot.slane %v888, 1
      %v891 = vrot.slane %v686, 1
      %v892 = vsel %vm889, %v890, %v891
      %v893 = vrot.slane %v687, 1
      %v894 = vsel %vm889, %v891, %v893
      %v895 = vrot.slane %v688, 1
      %v896 = vsel %vm889, %v893, %v895
      %v897 = vrot.slane %v689, 1
      %v898 = vsel %vm889, %v895, %v897
      %v899 = vrot.slane %v690, 1
      %v900 = vsel %vm889, %v897, %v899
      %v901 = vrot.slane %v691, 1
      %v902 = vsel %vm889, %v899, %v901
      %v903 = vrot.slane %v692, 1
      %v904 = vsel %vm889, %v901, %v903
      %v905 = vrot.slane %v693, 1
      %v906 = vsel %vm889, %v903, %v905
      %v907 = vrot.slane %v694, 1
      %v908 = vsel %vm889, %v905, %v907
      %v909 = vrot.slane %v695, 1
      %v910 = vsel %vm889, %v907, %v909
      %v911 = vrot.slane %v696, 1
      %v912 = vsel %vm889, %v909, %v911
      %v913 = vrot.slane %v697, 1
      %v914 = vsel %vm889, %v911, %v913
      %v915 = vrot.slane %v698, 1
      %v916 = vsel %vm889, %v913, %v915
      %v917 = vrot.slane %v699, 1
      %v918 = vsel %vm889, %v915, %v917
      %v919 = vrot.slane %v700, 1
      %v920 = vsel %vm889, %v917, %v919
      %v921 = vrot.slane %v701, 1
      %v922 = vsel %vm889, %v919, %v921
      %v923 = vrot.slane %v705, 1
      %v924 = vsel %vm889, %v921, %v923
      %v928 = vunpack.c.l.b16 %v610
      %v929 = vunpack.c.l.b16 %v611
      %v930 = vunpack.c.l.b16 %v612
      %v931 = vpack.c.b16 %v652, %v928
      %v932 = vpack.c.b16 %v930, %v929
      %v933 = vrot.slane %v931, 1
      %v934 = vsel %vm889, %v933, %v893
      %v935 = vrot.slane %v932, 1
      %v936 = vsel %vm889, %v923, %v935
      %937 = vrot.lane.b32.xlu0 %v934, 64
      %v938 = vpop.permute.xlu0 %937
      %939 = vrot.lane.b32.xlu0 %v896, 64
      %v940 = vpop.permute.xlu0 %939
      %941 = vrot.lane.b32.xlu0 %v898, 64
      %v942 = vpop.permute.xlu0 %941
      %943 = vrot.lane.b32.xlu0 %v900, 64
      %v944 = vpop.permute.xlu0 %943
      %945 = vrot.lane.b32.xlu0 %v902, 64
      %v946 = vpop.permute.xlu0 %945
      %947 = vrot.lane.b32.xlu0 %v904, 64
      %v948 = vpop.permute.xlu0 %947
      %949 = vrot.lane.b32.xlu0 %v906, 64
      %v950 = vpop.permute.xlu0 %949
      %951 = vrot.lane.b32.xlu0 %v908, 64
      %v952 = vpop.permute.xlu0 %951
      %953 = vrot.lane.b32.xlu0 %v910, 64
      %v954 = vpop.permute.xlu0 %953
      %955 = vrot.lane.b32.xlu0 %v912, 64
      %v956 = vpop.permute.xlu0 %955
      %957 = vrot.lane.b32.xlu0 %v914, 64
      %v958 = vpop.permute.xlu0 %957
      %959 = vrot.lane.b32.xlu0 %v916, 64
      %v960 = vpop.permute.xlu0 %959
      %961 = vrot.lane.b32.xlu0 %v918, 64
      %v962 = vpop.permute.xlu0 %961
      %963 = vrot.lane.b32.xlu0 %v920, 64
      %v964 = vpop.permute.xlu0 %963
      %965 = vrot.lane.b32.xlu0 %v922, 64
      %v966 = vpop.permute.xlu0 %965
      %967 = vrot.lane.b32.xlu0 %v924, 64
      %v968 = vpop.permute.xlu0 %967
      %969 = vrot.lane.b32.xlu0 %v936, 64
      %v970 = vpop.permute.xlu0 %969
      %971 = vrot.lane.b32.xlu0 %v935, 64
      %v972 = vpop.permute.xlu0 %971
      %vm973 = vcmask 523264
      %v975 = vsel %vm973, %v685, %v851
      %v978 = vsel %vm973, %v686, %v853
      %v981 = vsel %vm973, %v687, %v855
      %v984 = vsel %vm973, %v688, %v857
      %v987 = vsel %vm973, %v689, %v859
      %v990 = vsel %vm973, %v690, %v861
      %v993 = vsel %vm973, %v691, %v863
      %v996 = vsel %vm973, %v692, %v865
      %v999 = vsel %vm973, %v693, %v867
      %v1002 = vsel %vm973, %v694, %v869
      %v1005 = vsel %vm973, %v695, %v871
      %v1008 = vsel %vm973, %v696, %v873
      %v1011 = vsel %vm973, %v697, %v875
      %v1014 = vsel %vm973, %v698, %v877
      %v1017 = vsel %vm973, %v699, %v879
      %v1020 = vsel %vm973, %v700, %v881
      %v1023 = vsel %vm973, %v701, %v883
      %v1027 = vsel %vm973, %v702, %v885
      %v1031 = vsel %vm973, %v892, %v938
      %v1035 = vsel %vm973, %v894, %v940
      %v1039 = vsel %vm973, %v896, %v942
      %v1043 = vsel %vm973, %v898, %v944
      %v1047 = vsel %vm973, %v900, %v946
      %v1051 = vsel %vm973, %v902, %v948
      %v1055 = vsel %vm973, %v904, %v950
      %v1059 = vsel %vm973, %v906, %v952
      %v1063 = vsel %vm973, %v908, %v954
      %v1067 = vsel %vm973, %v910, %v956
      %v1071 = vsel %vm973, %v912, %v958
      %v1075 = vsel %vm973, %v914, %v960
      %v1079 = vsel %vm973, %v916, %v962
      %v1083 = vsel %vm973, %v918, %v964
      %v1087 = vsel %vm973, %v920, %v966
      %v1091 = vsel %vm973, %v922, %v968
      %v1095 = vsel %vm973, %v924, %v970
      %v1099 = vsel %vm973, %v923, %v972
      %v1101 = vld [vmem:[%s2] sm:$0xf]
      %v1102 = vld [vmem:[%s2 + $0x4] sm:$0xf]
      %v1103 = vld [vmem:[%s2 + $0x8] sm:$0xf]
      %v1104 = vld [vmem:[%s2 + $0xc] sm:$0xf]
      %v1105 = vld [vmem:[%s2 + $0x10] sm:$0xf]
      %v1106 = vld [vmem:[%s2 + $0x14] sm:$0xf]
      %v1107 = vld [vmem:[%s2 + $0x18] sm:$0xf]
      %v1108 = vld [vmem:[%s2 + $0x1c] sm:$0xf]
      %v1109 = vld [vmem:[%s2 + $0x20] sm:$0xf]
      %v1110 = vld [vmem:[%s2 + $0x24] sm:$0xf]
      %v1111 = vld [vmem:[%s2 + $0x28] sm:$0xf]
      %v1112 = vld [vmem:[%s2 + $0x2c] sm:$0xf]
      %v1113 = vld [vmem:[%s2 + $0x30] sm:$0xf]
      %v1114 = vld [vmem:[%s2 + $0x34] sm:$0xf]
      %v1115 = vld [vmem:[%s2 + $0x38] sm:$0xf]
      %v1116 = vld [vmem:[%s2 + $0x3c] sm:$0xf]
      %v1117 = vld [vmem:[%s2 + $0x40] sm:$0xf]
      %v1118 = vld [vmem:[%s2 + $0x44] sm:$0xf]
      %v1119 = vld [vmem:[%s2 + $0x48] sm:$0xf]
      %v1120 = vld [vmem:[%s2 + $0x4c] sm:$0xf]
      %v1121 = vld [vmem:[%s2 + $0x50] sm:$0xf]
      %v1122 = vld [vmem:[%s2 + $0x54] sm:$0xf]
      %v1123 = vld [vmem:[%s2 + $0x58] sm:$0xf]
      %v1124 = vld [vmem:[%s2 + $0x5c] sm:$0xf]
      %v1125 = vld [vmem:[%s2 + $0x60] sm:$0xf]
      %v1126 = vld [vmem:[%s2 + $0x64] sm:$0xf]
      %v1127 = vld [vmem:[%s2 + $0x68] sm:$0xf]
      %v1128 = vld [vmem:[%s2 + $0x6c] sm:$0xf]
      %v1129 = vld [vmem:[%s2 + $0x70] sm:$0xf]
      %v1130 = vld [vmem:[%s2 + $0x74] sm:$0xf]
      %v1131 = vld [vmem:[%s2 + $0x78] sm:$0xf]
      %v1132 = vld [vmem:[%s2 + $0x7c] sm:$0xf]
      %v1133 = vld [vmem:[#allocation2 + $0x98] sm:$0x1]
      %v1134 = vld [vmem:[#allocation2 + $0x8] sm:$0xc]
      %v1135 = vld [vmem:[#allocation2 + $0x10] sm:$0xc]
      %v1136 = vld [vmem:[#allocation2 + $0x98] sm:$0xf]
      %v1137 = vld [vmem:[#allocation2 + $0x9c] sm:$0xf]
      %v1138 = vld [vmem:[#allocation2 + $0xa0] sm:$0x1]
      %v1139 = vld [vmem:[#allocation2 + $0xa0] sm:$0x3]
      %v1141 = vunpack.c.l.b16 %v1133
      %v1142 = vpack.c.b16 %v1141, %v1141
      %v1144 = vunpack.c.l.b16 %v1134
      %v1145 = vpack.c.b16 %v652, %v1144
      %v1147 = vshrl.u32 %v1145, 16
      %v1149 = vshll.u32 %v1145, 16
      %v1151 = vrot.slane %v1149, 1
      %v1152 = vor.u32 %v1147, %v1151
      %v1153 = vsel %vm706, %v1152, %v725
      %v1155 = vshll.u32 %v932, 16
      %v1157 = vrot.slane %v1155, 1
      %v1158 = vsel %vm706, %v849, %v1157
      %v1159 = vshrl.u32 %v932, 16
      %v1161 = vor.u32 %v1159, %v1157
      %v1163 = vshll.u32 %v1142, 16
      %v1165 = vrot.slane %v1163, 1
      %v1166 = vsel %vm706, %v1161, %v1165
      %v1167 = vshrl.u32 %v1142, 16
      %1169 = vrot.lane.b32.xlu0 %v1153, 64
      %v1170 = vpop.permute.xlu0 %1169
      %1171 = vrot.lane.b32.xlu0 %v1158, 64
      %v1172 = vpop.permute.xlu0 %1171
      %1173 = vrot.lane.b32.xlu0 %v1166, 64
      %v1174 = vpop.permute.xlu0 %1173
      %1175 = vrot.lane.b32.xlu0 %v1167, 64
      %v1176 = vpop.permute.xlu0 %1175
      %v1181 = vunpack.c.l.b16 %v1135
      %v1182 = vunpack.c.l.b16 %v1136
      %v1183 = vunpack.c.l.b16 %v1137
      %v1184 = vunpack.c.l.b16 %v1138
      %v1185 = vpack.c.b16 %v654, %v1181
      %v1186 = vpack.c.b16 %v1183, %v1182
      %v1187 = vpack.c.b16 %v1184, %v1184
      %v1189 = vshrl.u32 %v1185, 16
      %v1191 = vshll.u32 %v1185, 16
      %v1193 = vrot.slane %v1191, 1
      %v1194 = vor.u32 %v1189, %v1193
      %v1195 = vsel %vm706, %v1194, %v733
      %v1197 = vshll.u32 %v1186, 16
      %v1199 = vrot.slane %v1197, 1
      %v1200 = vsel %vm706, %v1161, %v1199
      %v1201 = vshrl.u32 %v1186, 16
      %v1203 = vor.u32 %v1201, %v1199
      %v1205 = vshll.u32 %v1187, 16
      %v1207 = vrot.slane %v1205, 1
      %v1208 = vsel %vm706, %v1203, %v1207
      %v1209 = vshrl.u32 %v1187, 16
      %v1212 = vunpack.c.l.b16 %v1139
      %v1213 = vpack.c.b16 %v1212, %v1212
      %v1214 = vrot.slane %v1185, 1
      %v1215 = vsel %vm889, %v1214, %v895
      %v1216 = vrot.slane %v1186, 1
      %v1217 = vsel %vm889, %v935, %v1216
      %v1218 = vrot.slane %v1213, 1
      %v1219 = vsel %vm889, %v1216, %v1218
      %1220 = vrot.lane.b32.xlu0 %v1215, 64
      %v1221 = vpop.permute.xlu0 %1220
      %1222 = vrot.lane.b32.xlu0 %v1217, 64
      %v1223 = vpop.permute.xlu0 %1222
      %1224 = vrot.lane.b32.xlu0 %v1219, 64
      %v1225 = vpop.permute.xlu0 %1224
      %1226 = vrot.lane.b32.xlu0 %v1218, 64
      %v1227 = vpop.permute.xlu0 %1226
      %v1230 = vsel %vm973, %v931, %v1170
      %v1232 = vsel %vm973, %v705, %v1172
      %v1234 = vsel %vm973, %v932, %v1174
      %v1236 = vsel %vm973, %v1142, %v1176
      %v1239 = vsel %vm973, %v1195, %v1221
      %v1241 = vsel %vm973, %v742, %v942
      %v1243 = vsel %vm973, %v750, %v944
      %v1245 = vsel %vm973, %v758, %v946
      %v1247 = vsel %vm973, %v766, %v948
      %v1249 = vsel %vm973, %v774, %v950
      %v1251 = vsel %vm973, %v782, %v952
      %v1253 = vsel %vm973, %v790, %v954
      %v1255 = vsel %vm973, %v798, %v956
      %v1257 = vsel %vm973, %v806, %v958
      %v1259 = vsel %vm973, %v814, %v960
      %v1261 = vsel %vm973, %v822, %v962
      %v1263 = vsel %vm973, %v830, %v964
      %v1265 = vsel %vm973, %v838, %v966
      %v1267 = vsel %vm973, %v846, %v968
      %v1269 = vsel %vm973, %v1158, %v970
      %v1272 = vsel %vm973, %v1200, %v1223
      %v1275 = vsel %vm973, %v1208, %v1225
      %v1278 = vsel %vm973, %v1209, %v1227
      %s1279 = scalar_lea.vmem %s2, 128
      %v1280 = vld [vmem:[%s1279] sm:$0xf]
      %v1281 = vld [vmem:[%s1279 + $0x4] sm:$0xf]
      %v1282 = vld [vmem:[%s1279 + $0x8] sm:$0xf]
      %v1283 = vld [vmem:[%s1279 + $0xc] sm:$0xf]
      %v1284 = vld [vmem:[%s1279 + $0x10] sm:$0xf]
      %v1285 = vld [vmem:[%s1279 + $0x14] sm:$0xf]
      %v1286 = vld [vmem:[%s1279 + $0x18] sm:$0xf]
      %v1287 = vld [vmem:[%s1279 + $0x1c] sm:$0xf]
      %v1288 = vld [vmem:[%s1279 + $0x20] sm:$0xf]
      %v1289 = vld [vmem:[%s1279 + $0x24] sm:$0xf]
      %v1290 = vld [vmem:[%s1279 + $0x28] sm:$0xf]
      %v1291 = vld [vmem:[%s1279 + $0x2c] sm:$0xf]
      %v1292 = vld [vmem:[%s1279 + $0x30] sm:$0xf]
      %v1293 = vld [vmem:[%s1279 + $0x34] sm:$0xf]
      %v1294 = vld [vmem:[%s1279 + $0x38] sm:$0xf]
      %v1295 = vld [vmem:[%s1279 + $0x3c] sm:$0xf]
      %v1296 = vld [vmem:[%s1279 + $0x40] sm:$0xf]
      %v1297 = vld [vmem:[%s1279 + $0x44] sm:$0xf]
      %v1298 = vld [vmem:[%s1279 + $0x48] sm:$0xf]
      %v1299 = vld [vmem:[%s1279 + $0x4c] sm:$0xf]
      %v1300 = vld [vmem:[%s1279 + $0x50] sm:$0xf]
      %v1301 = vld [vmem:[%s1279 + $0x54] sm:$0xf]
      %v1302 = vld [vmem:[%s1279 + $0x58] sm:$0xf]
      %v1303 = vld [vmem:[%s1279 + $0x5c] sm:$0xf]
      %v1304 = vld [vmem:[%s1279 + $0x60] sm:$0xf]
      %v1305 = vld [vmem:[%s1279 + $0x64] sm:$0xf]
      %v1306 = vld [vmem:[%s1279 + $0x68] sm:$0xf]
      %v1307 = vld [vmem:[%s1279 + $0x6c] sm:$0xf]
      %v1308 = vld [vmem:[%s1279 + $0x70] sm:$0xf]
      %v1309 = vld [vmem:[%s1279 + $0x74] sm:$0xf]
      %v1310 = vld [vmem:[%s1279 + $0x78] sm:$0xf]
      %v1311 = vld [vmem:[%s1279 + $0x7c] sm:$0xf]
      %vm1312 = vsmask.f32 6400
      %v1313 = vshrl.u32 %v1230, 16
      %v1315 = vrot.slane %v1313, 1
      %v1316 = vshll.u32 %v1230, 16
      %v1318 = vrot.slane %v1316, 2
      %v1319 = vor.u32 %v1315, %v1318
      %v1320 = vshrl.u32 %v981, 16
      %v1322 = vrot.slane %v1320, 1
      %v1323 = vshll.u32 %v981, 16
      %v1325 = vrot.slane %v1323, 2
      %v1326 = vor.u32 %v1322, %v1325
      %v1327 = vsel %vm1312, %v1319, %v1326
      %v1328 = vshrl.u32 %v1239, 16
      %v1330 = vrot.slane %v1328, 1
      %v1331 = vshll.u32 %v1239, 16
      %v1333 = vrot.slane %v1331, 2
      %v1334 = vor.u32 %v1330, %v1333
      %v1335 = vshrl.u32 %v1241, 16
      %v1337 = vrot.slane %v1335, 1
      %v1338 = vshll.u32 %v1241, 16
      %v1340 = vrot.slane %v1338, 2
      %v1341 = vor.u32 %v1337, %v1340
      %v1342 = vsel %vm1312, %v1334, %v1341
      %v1343 = vshrl.u32 %v984, 16
      %v1345 = vrot.slane %v1343, 1
      %v1346 = vshll.u32 %v984, 16
      %v1348 = vrot.slane %v1346, 2
      %v1349 = vor.u32 %v1345, %v1348
      %v1350 = vsel %vm1312, %v1326, %v1349
      %v1351 = vshrl.u32 %v1243, 16
      %v1353 = vrot.slane %v1351, 1
      %v1354 = vshll.u32 %v1243, 16
      %v1356 = vrot.slane %v1354, 2
      %v1357 = vor.u32 %v1353, %v1356
      %v1358 = vsel %vm1312, %v1341, %v1357
      %v1359 = vshrl.u32 %v987, 16
      %v1361 = vrot.slane %v1359, 1
      %v1362 = vshll.u32 %v987, 16
      %v1364 = vrot.slane %v1362, 2
      %v1365 = vor.u32 %v1361, %v1364
      %v1366 = vsel %vm1312, %v1349, %v1365
      %v1367 = vshrl.u32 %v1245, 16
      %v1369 = vrot.slane %v1367, 1
      %v1370 = vshll.u32 %v1245, 16
      %v1372 = vrot.slane %v1370, 2
      %v1373 = vor.u32 %v1369, %v1372
      %v1374 = vsel %vm1312, %v1357, %v1373
      %v1375 = vshrl.u32 %v990, 16
      %v1377 = vrot.slane %v1375, 1
      %v1378 = vshll.u32 %v990, 16
      %v1380 = vrot.slane %v1378, 2
      %v1381 = vor.u32 %v1377, %v1380
      %v1382 = vsel %vm1312, %v1365, %v1381
      %v1383 = vshrl.u32 %v1247, 16
      %v1385 = vrot.slane %v1383, 1
      %v1386 = vshll.u32 %v1247, 16
      %v1388 = vrot.slane %v1386, 2
      %v1389 = vor.u32 %v1385, %v1388
      %v1390 = vsel %vm1312, %v1373, %v1389
      %v1391 = vshrl.u32 %v993, 16
      %v1393 = vrot.slane %v1391, 1
      %v1394 = vshll.u32 %v993, 16
      %v1396 = vrot.slane %v1394, 2
      %v1397 = vor.u32 %v1393, %v1396
      %v1398 = vsel %vm1312, %v1381, %v1397
      %v1399 = vshrl.u32 %v1249, 16
      %v1401 = vrot.slane %v1399, 1
      %v1402 = vshll.u32 %v1249, 16
      %v1404 = vrot.slane %v1402, 2
      %v1405 = vor.u32 %v1401, %v1404
      %v1406 = vsel %vm1312, %v1389, %v1405
      %v1407 = vshrl.u32 %v996, 16
      %v1409 = vrot.slane %v1407, 1
      %v1410 = vshll.u32 %v996, 16
      %v1412 = vrot.slane %v1410, 2
      %v1413 = vor.u32 %v1409, %v1412
      %v1414 = vsel %vm1312, %v1397, %v1413
      %v1415 = vshrl.u32 %v1251, 16
      %v1417 = vrot.slane %v1415, 1
      %v1418 = vshll.u32 %v1251, 16
      %v1420 = vrot.slane %v1418, 2
      %v1421 = vor.u32 %v1417, %v1420
      %v1422 = vsel %vm1312, %v1405, %v1421
      %v1423 = vshrl.u32 %v999, 16
      %v1425 = vrot.slane %v1423, 1
      %v1426 = vshll.u32 %v999, 16
      %v1428 = vrot.slane %v1426, 2
      %v1429 = vor.u32 %v1425, %v1428
      %v1430 = vsel %vm1312, %v1413, %v1429
      %v1431 = vshrl.u32 %v1253, 16
      %v1433 = vrot.slane %v1431, 1
      %v1434 = vshll.u32 %v1253, 16
      %v1436 = vrot.slane %v1434, 2
      %v1437 = vor.u32 %v1433, %v1436
      %v1438 = vsel %vm1312, %v1421, %v1437
      %v1439 = vshrl.u32 %v1002, 16
      %v1441 = vrot.slane %v1439, 1
      %v1442 = vshll.u32 %v1002, 16
      %v1444 = vrot.slane %v1442, 2
      %v1445 = vor.u32 %v1441, %v1444
      %v1446 = vsel %vm1312, %v1429, %v1445
      %v1447 = vshrl.u32 %v1255, 16
      %v1449 = vrot.slane %v1447, 1
      %v1450 = vshll.u32 %v1255, 16
      %v1452 = vrot.slane %v1450, 2
      %v1453 = vor.u32 %v1449, %v1452
      %v1454 = vsel %vm1312, %v1437, %v1453
      %v1455 = vshrl.u32 %v1005, 16
      %v1457 = vrot.slane %v1455, 1
      %v1458 = vshll.u32 %v1005, 16
      %v1460 = vrot.slane %v1458, 2
      %v1461 = vor.u32 %v1457, %v1460
      %v1462 = vsel %vm1312, %v1445, %v1461
      %v1463 = vshrl.u32 %v1257, 16
      %v1465 = vrot.slane %v1463, 1
      %v1466 = vshll.u32 %v1257, 16
      %v1468 = vrot.slane %v1466, 2
      %v1469 = vor.u32 %v1465, %v1468
      %v1470 = vsel %vm1312, %v1453, %v1469
      %v1471 = vshrl.u32 %v1008, 16
      %v1473 = vrot.slane %v1471, 1
      %v1474 = vshll.u32 %v1008, 16
      %v1476 = vrot.slane %v1474, 2
      %v1477 = vor.u32 %v1473, %v1476
      %v1478 = vsel %vm1312, %v1461, %v1477
      %v1479 = vshrl.u32 %v1259, 16
      %v1481 = vrot.slane %v1479, 1
      %v1482 = vshll.u32 %v1259, 16
      %v1484 = vrot.slane %v1482, 2
      %v1485 = vor.u32 %v1481, %v1484
      %v1486 = vsel %vm1312, %v1469, %v1485
      %v1487 = vshrl.u32 %v1011, 16
      %v1489 = vrot.slane %v1487, 1
      %v1490 = vshll.u32 %v1011, 16
      %v1492 = vrot.slane %v1490, 2
      %v1493 = vor.u32 %v1489, %v1492
      %v1494 = vsel %vm1312, %v1477, %v1493
      %v1495 = vshrl.u32 %v1261, 16
      %v1497 = vrot.slane %v1495, 1
      %v1498 = vshll.u32 %v1261, 16
      %v1500 = vrot.slane %v1498, 2
      %v1501 = vor.u32 %v1497, %v1500
      %v1502 = vsel %vm1312, %v1485, %v1501
      %v1503 = vshrl.u32 %v1014, 16
      %v1505 = vrot.slane %v1503, 1
      %v1506 = vshll.u32 %v1014, 16
      %v1508 = vrot.slane %v1506, 2
      %v1509 = vor.u32 %v1505, %v1508
      %v1510 = vsel %vm1312, %v1493, %v1509
      %v1511 = vshrl.u32 %v1263, 16
      %v1513 = vrot.slane %v1511, 1
      %v1514 = vshll.u32 %v1263, 16
      %v1516 = vrot.slane %v1514, 2
      %v1517 = vor.u32 %v1513, %v1516
      %v1518 = vsel %vm1312, %v1501, %v1517
      %v1519 = vshrl.u32 %v1017, 16
      %v1521 = vrot.slane %v1519, 1
      %v1522 = vshll.u32 %v1017, 16
      %v1524 = vrot.slane %v1522, 2
      %v1525 = vor.u32 %v1521, %v1524
      %v1526 = vsel %vm1312, %v1509, %v1525
      %v1527 = vshrl.u32 %v1265, 16
      %v1529 = vrot.slane %v1527, 1
      %v1530 = vshll.u32 %v1265, 16
      %v1532 = vrot.slane %v1530, 2
      %v1533 = vor.u32 %v1529, %v1532
      %v1534 = vsel %vm1312, %v1517, %v1533
      %v1535 = vshrl.u32 %v1020, 16
      %v1537 = vrot.slane %v1535, 1
      %v1538 = vshll.u32 %v1020, 16
      %v1540 = vrot.slane %v1538, 2
      %v1541 = vor.u32 %v1537, %v1540
      %v1542 = vsel %vm1312, %v1525, %v1541
      %v1543 = vshrl.u32 %v1267, 16
      %v1545 = vrot.slane %v1543, 1
      %v1546 = vshll.u32 %v1267, 16
      %v1548 = vrot.slane %v1546, 2
      %v1549 = vor.u32 %v1545, %v1548
      %v1550 = vsel %vm1312, %v1533, %v1549
      %v1551 = vshrl.u32 %v1023, 16
      %v1553 = vrot.slane %v1551, 1
      %v1554 = vshll.u32 %v1023, 16
      %v1556 = vrot.slane %v1554, 2
      %v1557 = vor.u32 %v1553, %v1556
      %v1558 = vsel %vm1312, %v1541, %v1557
      %v1559 = vshrl.u32 %v1269, 16
      %v1561 = vrot.slane %v1559, 1
      %v1562 = vshll.u32 %v1269, 16
      %v1564 = vrot.slane %v1562, 2
      %v1565 = vor.u32 %v1561, %v1564
      %v1566 = vsel %vm1312, %v1549, %v1565
      %v1567 = vshrl.u32 %v1232, 16
      %v1569 = vrot.slane %v1567, 1
      %v1570 = vshll.u32 %v1232, 16
      %v1572 = vrot.slane %v1570, 2
      %v1573 = vor.u32 %v1569, %v1572
      %v1574 = vsel %vm1312, %v1557, %v1573
      %v1575 = vshrl.u32 %v1272, 16
      %v1577 = vrot.slane %v1575, 1
      %v1578 = vshll.u32 %v1272, 16
      %v1580 = vrot.slane %v1578, 2
      %v1581 = vor.u32 %v1577, %v1580
      %v1582 = vsel %vm1312, %v1565, %v1581
      %v1583 = vshrl.u32 %v1234, 16
      %v1585 = vrot.slane %v1583, 1
      %v1586 = vshll.u32 %v1234, 16
      %v1588 = vrot.slane %v1586, 2
      %v1589 = vor.u32 %v1585, %v1588
      %v1590 = vsel %vm1312, %v1573, %v1589
      %v1591 = vshrl.u32 %v1275, 16
      %v1593 = vrot.slane %v1591, 1
      %v1594 = vshll.u32 %v1275, 16
      %v1596 = vrot.slane %v1594, 2
      %v1597 = vor.u32 %v1593, %v1596
      %v1598 = vsel %vm1312, %v1581, %v1597
      %v1599 = vshll.u32 %v1236, 16
      %v1601 = vrot.slane %v1599, 2
      %v1602 = vsel %vm1312, %v1589, %v1601
      %v1603 = vshll.u32 %v1278, 16
      %v1605 = vrot.slane %v1603, 2
      %v1606 = vsel %vm1312, %v1597, %v1605
      %v1675 = vunpack.c.l.b16 %v1280
      %v1676 = vunpack.c.l.b16 %v1281
      %v1677 = vunpack.c.l.b16 %v1282
      %v1678 = vunpack.c.l.b16 %v1283
      %v1679 = vunpack.c.l.b16 %v1284
      %v1680 = vunpack.c.l.b16 %v1285
      %v1681 = vunpack.c.l.b16 %v1286
      %v1682 = vunpack.c.l.b16 %v1287
      %v1683 = vunpack.c.l.b16 %v1288
      %v1684 = vunpack.c.l.b16 %v1289
      %v1685 = vunpack.c.l.b16 %v1290
      %v1686 = vunpack.c.l.b16 %v1291
      %v1687 = vunpack.c.l.b16 %v1292
      %v1688 = vunpack.c.l.b16 %v1293
      %v1689 = vunpack.c.l.b16 %v1294
      %v1690 = vunpack.c.l.b16 %v1295
      %v1691 = vunpack.c.l.b16 %v1296
      %v1692 = vunpack.c.l.b16 %v1297
      %v1693 = vunpack.c.l.b16 %v1298
      %v1694 = vunpack.c.l.b16 %v1299
      %v1695 = vunpack.c.l.b16 %v1300
      %v1696 = vunpack.c.l.b16 %v1301
      %v1697 = vunpack.c.l.b16 %v1302
      %v1698 = vunpack.c.l.b16 %v1303
      %v1699 = vunpack.c.l.b16 %v1304
      %v1700 = vunpack.c.l.b16 %v1305
      %v1701 = vunpack.c.l.b16 %v1306
      %v1702 = vunpack.c.l.b16 %v1307
      %v1703 = vunpack.c.l.b16 %v1308
      %v1704 = vunpack.c.l.b16 %v1309
      %v1705 = vunpack.c.l.b16 %v1310
      %v1706 = vunpack.c.l.b16 %v1311
      %v1707 = vpack.c.b16 %v1676, %v1675
      %v1708 = vpack.c.b16 %v1678, %v1677
      %v1709 = vpack.c.b16 %v1680, %v1679
      %v1710 = vpack.c.b16 %v1682, %v1681
      %v1711 = vpack.c.b16 %v1684, %v1683
      %v1712 = vpack.c.b16 %v1686, %v1685
      %v1713 = vpack.c.b16 %v1688, %v1687
      %v1714 = vpack.c.b16 %v1690, %v1689
      %v1715 = vpack.c.b16 %v1692, %v1691
      %v1716 = vpack.c.b16 %v1694, %v1693
      %v1717 = vpack.c.b16 %v1696, %v1695
      %v1718 = vpack.c.b16 %v1698, %v1697
      %v1719 = vpack.c.b16 %v1700, %v1699
      %v1720 = vpack.c.b16 %v1702, %v1701
      %v1721 = vpack.c.b16 %v1704, %v1703
      %v1722 = vpack.c.b16 %v1706, %v1705
      %1739 = vmatprep.subr.bf16.mxu0 0
      %1740 = vmatpush1.bf16.msra.mxu0 %v1707
      %1741 = vmatprep.subr.bf16.mxu0 0
      %1742 = vmatpush1.bf16.msra.mxu0 %v1708
      %1743 = vmatprep.subr.bf16.mxu0 0
      %1744 = vmatpush1.bf16.msra.mxu0 %v1709
      %1745 = vmatprep.subr.bf16.mxu0 0
      %1746 = vmatpush1.bf16.msra.mxu0 %v1710
      %1747 = vmatprep.subr.bf16.mxu0 0
      %1748 = vmatpush1.bf16.msra.mxu0 %v1711
      %1749 = vmatprep.subr.bf16.mxu0 0
      %1750 = vmatpush1.bf16.msra.mxu0 %v1712
      %1751 = vmatprep.subr.bf16.mxu0 0
      %1752 = vmatpush1.bf16.msra.mxu0 %v1713
      %1753 = vmatprep.subr.bf16.mxu0 0
      %1754 = vmatpush1.bf16.msra.mxu0 %v1714
      %1755 = vmatprep.subr.bf16.mxu0 0
      %1756 = vmatpush1.bf16.msra.mxu0 %v1715
      %1757 = vmatprep.subr.bf16.mxu0 0
      %1758 = vmatpush1.bf16.msra.mxu0 %v1716
      %1759 = vmatprep.subr.bf16.mxu0 0
      %1760 = vmatpush1.bf16.msra.mxu0 %v1717
      %1761 = vmatprep.subr.bf16.mxu0 0
      %1762 = vmatpush1.bf16.msra.mxu0 %v1718
      %1763 = vmatprep.subr.bf16.mxu0 0
      %1764 = vmatpush1.bf16.msra.mxu0 %v1719
      %1765 = vmatprep.subr.bf16.mxu0 0
      %1766 = vmatpush1.bf16.msra.mxu0 %v1720
      %1767 = vmatprep.subr.bf16.mxu0 0
      %1768 = vmatpush1.bf16.msra.mxu0 %v1721
      %1769 = vmatprep.subr.bf16.mxu0 0
      %1770 = vmatpush1.bf16.msra.mxu0 %v1722
      %1771 = vmatprep.mubr.bf16.mxu0 %v1342
      %1772 = vmatmul.mubr.bf16.gmra.mrb[0].mxu0 %v1327
      %v1773 = vpop.f32.mrb[0].mxu0
      %v1774 = vadd.f32 0.0, %v1773
      %v1775 = vpop.f32.mrb[0].mxu0
      %v1776 = vpop.f32.mrb[0].mxu0
      %v1777 = vadd.f32 0.0, %v1776
      %v1778 = vpop.f32.mrb[0].mxu0
      %1779 = vmatprep.mubr.bf16.mxu0 %v1358
      %1780 = vmatmul.mubr.bf16.gmra.mrb[0].mxu0 %v1350
      %v1781 = vpop.f32.mrb[0].mxu0
      %v1782 = vadd.f32 0.0, %v1781
      %v1783 = vpop.f32.mrb[0].mxu0
      %v1784 = vpop.f32.mrb[0].mxu0
      %v1785 = vadd.f32 0.0, %v1784
      %v1786 = vpop.f32.mrb[0].mxu0
      %1787 = vmatprep.mubr.bf16.mxu0 %v1374
      %1788 = vmatmul.mubr.bf16.gmra.mrb[0].mxu0 %v1366
      %v1789 = vpop.f32.mrb[0].mxu0
      %v1790 = vadd.f32 0.0, %v1789
      %v1791 = vpop.f32.mrb[0].mxu0
      %v1792 = vpop.f32.mrb[0].mxu0
      %v1793 = vadd.f32 0.0, %v1792
      %v1794 = vpop.f32.mrb[0].mxu0
      %1795 = vmatprep.mubr.bf16.mxu0 %v1390
      %1796 = vmatmul.mubr.bf16.gmra.mrb[0].mxu0 %v1382
      %v1797 = vpop.f32.mrb[0].mxu0
      %v1798 = vadd.f32 0.0, %v1797
      %v1799 = vpop.f32.mrb[0].mxu0
      %v1800 = vpop.f32.mrb[0].mxu0
      %v1801 = vadd.f32 0.0, %v1800
      %v1802 = vpop.f32.mrb[0].mxu0
      %1803 = vmatprep.mubr.bf16.mxu0 %v1406
      %1804 = vmatmul.mubr.bf16.gmra.mrb[0].mxu0 %v1398
      %v1805 = vpop.f32.mrb[0].mxu0
      %v1806 = vadd.f32 0.0, %v1805
      %v1807 = vpop.f32.mrb[0].mxu0
      %v1808 = vpop.f32.mrb[0].mxu0
      %v1809 = vadd.f32 0.0, %v1808
      %v1810 = vpop.f32.mrb[0].mxu0
      %1811 = vmatprep.mubr.bf16.mxu0 %v1422
      %1812 = vmatmul.mubr.bf16.gmra.mrb[0].mxu0 %v1414
      %v1813 = vpop.f32.mrb[0].mxu0
      %v1814 = vadd.f32 0.0, %v1813
      %v1815 = vpop.f32.mrb[0].mxu0
      %v1816 = vpop.f32.mrb[0].mxu0
      %v1817 = vadd.f32 0.0, %v1816
      %v1818 = vpop.f32.mrb[0].mxu0
      %1819 = vmatprep.mubr.bf16.mxu0 %v1438
      %1820 = vmatmul.mubr.bf16.gmra.mrb[0].mxu0 %v1430
      %v1821 = vpop.f32.mrb[0].mxu0
      %v1822 = vadd.f32 0.0, %v1821
      %v1823 = vpop.f32.mrb[0].mxu0
      %v1824 = vpop.f32.mrb[0].mxu0
      %v1825 = vadd.f32 0.0, %v1824
      %v1826 = vpop.f32.mrb[0].mxu0
      %1827 = vmatprep.mubr.bf16.mxu0 %v1454
      %1828 = vmatmul.mubr.bf16.gmra.mrb[0].mxu0 %v1446
      %v1829 = vpop.f32.mrb[0].mxu0
      %v1830 = vadd.f32 0.0, %v1829
      %v1831 = vpop.f32.mrb[0].mxu0
      %v1832 = vpop.f32.mrb[0].mxu0
      %v1833 = vadd.f32 0.0, %v1832
      %v1834 = vpop.f32.mrb[0].mxu0
      %1835 = vmatprep.mubr.bf16.mxu0 %v1470
      %1836 = vmatmul.mubr.bf16.gmra.mrb[0].mxu0 %v1462
      %v1837 = vpop.f32.mrb[0].mxu0
      %v1838 = vadd.f32 0.0, %v1837
      %v1839 = vpop.f32.mrb[0].mxu0
      %v1840 = vpop.f32.mrb[0].mxu0
      %v1841 = vadd.f32 0.0, %v1840
      %v1842 = vpop.f32.mrb[0].mxu0
      %1843 = vmatprep.mubr.bf16.mxu0 %v1486
      %1844 = vmatmul.mubr.bf16.gmra.mrb[0].mxu0 %v1478
      %v1845 = vpop.f32.mrb[0].mxu0
      %v1846 = vadd.f32 0.0, %v1845
      %v1847 = vpop.f32.mrb[0].mxu0
      %v1848 = vpop.f32.mrb[0].mxu0
      %v1849 = vadd.f32 0.0, %v1848
      %v1850 = vpop.f32.mrb[0].mxu0
      %1851 = vmatprep.mubr.bf16.mxu0 %v1502
      %1852 = vmatmul.mubr.bf16.gmra.mrb[0].mxu0 %v1494
      %v1853 = vpop.f32.mrb[0].mxu0
      %v1854 = vadd.f32 0.0, %v1853
      %v1855 = vpop.f32.mrb[0].mxu0
      %v1856 = vpop.f32.mrb[0].mxu0
      %v1857 = vadd.f32 0.0, %v1856
      %v1858 = vpop.f32.mrb[0].mxu0
      %1859 = vmatprep.mubr.bf16.mxu0 %v1518
      %1860 = vmatmul.mubr.bf16.gmra.mrb[0].mxu0 %v1510
      %v1861 = vpop.f32.mrb[0].mxu0
      %v1862 = vadd.f32 0.0, %v1861
      %v1863 = vpop.f32.mrb[0].mxu0
      %v1864 = vpop.f32.mrb[0].mxu0
      %v1865 = vadd.f32 0.0, %v1864
      %v1866 = vpop.f32.mrb[0].mxu0
      %1867 = vmatprep.mubr.bf16.mxu0 %v1534
      %1868 = vmatmul.mubr.bf16.gmra.mrb[0].mxu0 %v1526
      %v1869 = vpop.f32.mrb[0].mxu0
      %v1870 = vadd.f32 0.0, %v1869
      %v1871 = vpop.f32.mrb[0].mxu0
      %v1872 = vpop.f32.mrb[0].mxu0
      %v1873 = vadd.f32 0.0, %v1872
      %v1874 = vpop.f32.mrb[0].mxu0
      %1875 = vmatprep.mubr.bf16.mxu0 %v1550
      %1876 = vmatmul.mubr.bf16.gmra.mrb[0].mxu0 %v1542
      %v1877 = vpop.f32.mrb[0].mxu0
      %v1878 = vadd.f32 0.0, %v1877
      %v1879 = vpop.f32.mrb[0].mxu0
      %v1880 = vpop.f32.mrb[0].mxu0
      %v1881 = vadd.f32 0.0, %v1880
      %v1882 = vpop.f32.mrb[0].mxu0
      %1883 = vmatprep.mubr.bf16.mxu0 %v1566
      %1884 = vmatmul.mubr.bf16.gmra.mrb[0].mxu0 %v1558
      %v1885 = vpop.f32.mrb[0].mxu0
      %v1886 = vadd.f32 0.0, %v1885
      %v1887 = vpop.f32.mrb[0].mxu0
      %v1888 = vpop.f32.mrb[0].mxu0
      %v1889 = vadd.f32 0.0, %v1888
      %v1890 = vpop.f32.mrb[0].mxu0
      %1891 = vmatprep.mubr.bf16.mxu0 %v1582
      %1892 = vmatmul.mubr.bf16.gmra.mrb[0].mxu0 %v1574
      %v1893 = vpop.f32.mrb[0].mxu0
      %v1894 = vadd.f32 0.0, %v1893
      %v1895 = vpop.f32.mrb[0].mxu0
      %v1896 = vpop.f32.mrb[0].mxu0
      %v1897 = vadd.f32 0.0, %v1896
      %v1898 = vpop.f32.mrb[0].mxu0
      %1899 = vmatprep.mubr.bf16.mxu0 %v1598
      %1900 = vmatmul.mubr.bf16.gmra.mrb[0].mxu0 %v1590
      %v1901 = vpop.f32.mrb[0].mxu0
      %v1902 = vadd.f32 0.0, %v1901
      %v1903 = vpop.f32.mrb[0].mxu0
      %v1904 = vpop.f32.mrb[0].mxu0
      %v1905 = vadd.f32 0.0, %v1904
      %v1906 = vpop.f32.mrb[0].mxu0
      %1907 = vmatprep.mubr.bf16.mxu0 %v1606
      %1908 = vmatmul.mubr.bf16.gmra.mrb[0].mxu0 %v1602
      %v1909 = vpop.f32.mrb[0].mxu0
      %v1910 = vadd.f32 0.0, %v1909
      %v1911 = vpop.f32.mrb[0].mxu0
      %v1912 = vpop.f32.mrb[0].mxu0
      %v1913 = vadd.f32 0.0, %v1912
      %v1914 = vpop.f32.mrb[0].mxu0
      %1915 = vdwg.mxu0
      %v1948 = vunpack.c.l.b16 %v1101
      %v1949 = vunpack.c.l.b16 %v1102
      %v1950 = vunpack.c.l.b16 %v1103
      %v1951 = vunpack.c.l.b16 %v1104
      %v1952 = vunpack.c.l.b16 %v1105
      %v1953 = vunpack.c.l.b16 %v1106
      %v1954 = vunpack.c.l.b16 %v1107
      %v1955 = vunpack.c.l.b16 %v1108
      %v1956 = vunpack.c.l.b16 %v1109
      %v1957 = vunpack.c.l.b16 %v1110
      %v1958 = vunpack.c.l.b16 %v1111
      %v1959 = vunpack.c.l.b16 %v1112
      %v1960 = vunpack.c.l.b16 %v1113
      %v1961 = vunpack.c.l.b16 %v1114
      %v1962 = vunpack.c.l.b16 %v1115
      %v1963 = vunpack.c.l.b16 %v1116
      %v1964 = vunpack.c.l.b16 %v1117
      %v1965 = vunpack.c.l.b16 %v1118
      %v1966 = vunpack.c.l.b16 %v1119
      %v1967 = vunpack.c.l.b16 %v1120
      %v1968 = vunpack.c.l.b16 %v1121
      %v1969 = vunpack.c.l.b16 %v1122
      %v1970 = vunpack.c.l.b16 %v1123
      %v1971 = vunpack.c.l.b16 %v1124
      %v1972 = vunpack.c.l.b16 %v1125
      %v1973 = vunpack.c.l.b16 %v1126
      %v1974 = vunpack.c.l.b16 %v1127
      %v1975 = vunpack.c.l.b16 %v1128
      %v1976 = vunpack.c.l.b16 %v1129
      %v1977 = vunpack.c.l.b16 %v1130
      %v1978 = vunpack.c.l.b16 %v1131
      %v1979 = vunpack.c.l.b16 %v1132
      %v1980 = vpack.c.b16 %v1949, %v1948
      %v1981 = vpack.c.b16 %v1951, %v1950
      %v1982 = vpack.c.b16 %v1953, %v1952
      %v1983 = vpack.c.b16 %v1955, %v1954
      %v1984 = vpack.c.b16 %v1957, %v1956
      %v1985 = vpack.c.b16 %v1959, %v1958
      %v1986 = vpack.c.b16 %v1961, %v1960
      %v1987 = vpack.c.b16 %v1963, %v1962
      %v1988 = vpack.c.b16 %v1965, %v1964
      %v1989 = vpack.c.b16 %v1967, %v1966
      %v1990 = vpack.c.b16 %v1969, %v1968
      %v1991 = vpack.c.b16 %v1971, %v1970
      %v1992 = vpack.c.b16 %v1973, %v1972
      %v1993 = vpack.c.b16 %v1975, %v1974
      %v1994 = vpack.c.b16 %v1977, %v1976
      %v1995 = vpack.c.b16 %v1979, %v1978
      %2012 = vmatprep.subr.bf16.mxu0 0
      %2013 = vmatpush1.bf16.msra.mxu0 %v1980
      %2014 = vmatprep.subr.bf16.mxu0 0
      %2015 = vmatpush1.bf16.msra.mxu0 %v1981
      %2016 = vmatprep.subr.bf16.mxu0 0
      %2017 = vmatpush1.bf16.msra.mxu0 %v1982
      %2018 = vmatprep.subr.bf16.mxu0 0
      %2019 = vmatpush1.bf16.msra.mxu0 %v1983
      %2020 = vmatprep.subr.bf16.mxu0 0
      %2021 = vmatpush1.bf16.msra.mxu0 %v1984
      %2022 = vmatprep.subr.bf16.mxu0 0
      %2023 = vmatpush1.bf16.msra.mxu0 %v1985
      %2024 = vmatprep.subr.bf16.mxu0 0
      %2025 = vmatpush1.bf16.msra.mxu0 %v1986
      %2026 = vmatprep.subr.bf16.mxu0 0
      %2027 = vmatpush1.bf16.msra.mxu0 %v1987
      %2028 = vmatprep.subr.bf16.mxu0 0
      %2029 = vmatpush1.bf16.msra.mxu0 %v1988
      %2030 = vmatprep.subr.bf16.mxu0 0
      %2031 = vmatpush1.bf16.msra.mxu0 %v1989
      %2032 = vmatprep.subr.bf16.mxu0 0
      %2033 = vmatpush1.bf16.msra.mxu0 %v1990
      %2034 = vmatprep.subr.bf16.mxu0 0
      %2035 = vmatpush1.bf16.msra.mxu0 %v1991
      %2036 = vmatprep.subr.bf16.mxu0 0
      %2037 = vmatpush1.bf16.msra.mxu0 %v1992
      %2038 = vmatprep.subr.bf16.mxu0 0
      %2039 = vmatpush1.bf16.msra.mxu0 %v1993
      %2040 = vmatprep.subr.bf16.mxu0 0
      %2041 = vmatpush1.bf16.msra.mxu0 %v1994
      %2042 = vmatprep.subr.bf16.mxu0 0
      %2043 = vmatpush1.bf16.msra.mxu0 %v1995
      %2044 = vmatprep.mubr.bf16.mxu0 %v1031
      %2045 = vmatmul.mubr.bf16.gmra.mrb[0].mxu0 %v975
      %v2046 = vpop.f32.mrb[0].mxu0
      %v2047 = vadd.f32 %v1774, %v2046
      %v2048 = vpop.f32.mrb[0].mxu0
      %v2049 = vpop.f32.mrb[0].mxu0
      %v2050 = vadd.f32 %v1777, %v2049
      %v2051 = vpop.f32.mrb[0].mxu0
      %2052 = vmatprep.mubr.bf16.mxu0 %v1035
      %2053 = vmatmul.mubr.bf16.gmra.mrb[0].mxu0 %v978
      %v2054 = vpop.f32.mrb[0].mxu0
      %v2055 = vadd.f32 %v1782, %v2054
      %v2056 = vpop.f32.mrb[0].mxu0
      %v2057 = vpop.f32.mrb[0].mxu0
      %v2058 = vadd.f32 %v1785, %v2057
      %v2059 = vpop.f32.mrb[0].mxu0
      %2060 = vmatprep.mubr.bf16.mxu0 %v1039
      %2061 = vmatmul.mubr.bf16.gmra.mrb[0].mxu0 %v981
      %v2062 = vpop.f32.mrb[0].mxu0
      %v2063 = vadd.f32 %v1790, %v2062
      %v2064 = vpop.f32.mrb[0].mxu0
      %v2065 = vpop.f32.mrb[0].mxu0
      %v2066 = vadd.f32 %v1793, %v2065
      %v2067 = vpop.f32.mrb[0].mxu0
      %2068 = vmatprep.mubr.bf16.mxu0 %v1043
      %2069 = vmatmul.mubr.bf16.gmra.mrb[0].mxu0 %v984
      %v2070 = vpop.f32.mrb[0].mxu0
      %v2071 = vadd.f32 %v1798, %v2070
      %v2072 = vpop.f32.mrb[0].mxu0
      %v2073 = vpop.f32.mrb[0].mxu0
      %v2074 = vadd.f32 %v1801, %v2073
      %v2075 = vpop.f32.mrb[0].mxu0
      %2076 = vmatprep.mubr.bf16.mxu0 %v1047
      %2077 = vmatmul.mubr.bf16.gmra.mrb[0].mxu0 %v987
      %v2078 = vpop.f32.mrb[0].mxu0
      %v2079 = vadd.f32 %v1806, %v2078
      %v2080 = vpop.f32.mrb[0].mxu0
      %v2081 = vpop.f32.mrb[0].mxu0
      %v2082 = vadd.f32 %v1809, %v2081
      %v2083 = vpop.f32.mrb[0].mxu0
      %2084 = vmatprep.mubr.bf16.mxu0 %v1051
      %2085 = vmatmul.mubr.bf16.gmra.mrb[0].mxu0 %v990
      %v2086 = vpop.f32.mrb[0].mxu0
      %v2087 = vadd.f32 %v1814, %v2086
      %v2088 = vpop.f32.mrb[0].mxu0
      %v2089 = vpop.f32.mrb[0].mxu0
      %v2090 = vadd.f32 %v1817, %v2089
      %v2091 = vpop.f32.mrb[0].mxu0
      %2092 = vmatprep.mubr.bf16.mxu0 %v1055
      %2093 = vmatmul.mubr.bf16.gmra.mrb[0].mxu0 %v993
      %v2094 = vpop.f32.mrb[0].mxu0
      %v2095 = vadd.f32 %v1822, %v2094
      %v2096 = vpop.f32.mrb[0].mxu0
      %v2097 = vpop.f32.mrb[0].mxu0
      %v2098 = vadd.f32 %v1825, %v2097
      %v2099 = vpop.f32.mrb[0].mxu0
      %2100 = vmatprep.mubr.bf16.mxu0 %v1059
      %2101 = vmatmul.mubr.bf16.gmra.mrb[0].mxu0 %v996
      %v2102 = vpop.f32.mrb[0].mxu0
      %v2103 = vadd.f32 %v1830, %v2102
      %v2104 = vpop.f32.mrb[0].mxu0
      %v2105 = vpop.f32.mrb[0].mxu0
      %v2106 = vadd.f32 %v1833, %v2105
      %v2107 = vpop.f32.mrb[0].mxu0
      %2108 = vmatprep.mubr.bf16.mxu0 %v1063
      %2109 = vmatmul.mubr.bf16.gmra.mrb[0].mxu0 %v999
      %v2110 = vpop.f32.mrb[0].mxu0
      %v2111 = vadd.f32 %v1838, %v2110
      %v2112 = vpop.f32.mrb[0].mxu0
      %v2113 = vpop.f32.mrb[0].mxu0
      %v2114 = vadd.f32 %v1841, %v2113
      %v2115 = vpop.f32.mrb[0].mxu0
      %2116 = vmatprep.mubr.bf16.mxu0 %v1067
      %2117 = vmatmul.mubr.bf16.gmra.mrb[0].mxu0 %v1002
      %v2118 = vpop.f32.mrb[0].mxu0
      %v2119 = vadd.f32 %v1846, %v2118
      %v2120 = vpop.f32.mrb[0].mxu0
      %v2121 = vpop.f32.mrb[0].mxu0
      %v2122 = vadd.f32 %v1849, %v2121
      %v2123 = vpop.f32.mrb[0].mxu0
      %2124 = vmatprep.mubr.bf16.mxu0 %v1071
      %2125 = vmatmul.mubr.bf16.gmra.mrb[0].mxu0 %v1005
      %v2126 = vpop.f32.mrb[0].mxu0
      %v2127 = vadd.f32 %v1854, %v2126
      %v2128 = vpop.f32.mrb[0].mxu0
      %v2129 = vpop.f32.mrb[0].mxu0
      %v2130 = vadd.f32 %v1857, %v2129
      %v2131 = vpop.f32.mrb[0].mxu0
      %2132 = vmatprep.mubr.bf16.mxu0 %v1075
      %2133 = vmatmul.mubr.bf16.gmra.mrb[0].mxu0 %v1008
      %v2134 = vpop.f32.mrb[0].mxu0
      %v2135 = vadd.f32 %v1862, %v2134
      %v2136 = vpop.f32.mrb[0].mxu0
      %v2137 = vpop.f32.mrb[0].mxu0
      %v2138 = vadd.f32 %v1865, %v2137
      %v2139 = vpop.f32.mrb[0].mxu0
      %2140 = vmatprep.mubr.bf16.mxu0 %v1079
      %2141 = vmatmul.mubr.bf16.gmra.mrb[0].mxu0 %v1011
      %v2142 = vpop.f32.mrb[0].mxu0
      %v2143 = vadd.f32 %v1870, %v2142
      %v2144 = vpop.f32.mrb[0].mxu0
      %v2145 = vpop.f32.mrb[0].mxu0
      %v2146 = vadd.f32 %v1873, %v2145
      %v2147 = vpop.f32.mrb[0].mxu0
      %2148 = vmatprep.mubr.bf16.mxu0 %v1083
      %2149 = vmatmul.mubr.bf16.gmra.mrb[0].mxu0 %v1014
      %v2150 = vpop.f32.mrb[0].mxu0
      %v2151 = vadd.f32 %v1878, %v2150
      %v2152 = vpop.f32.mrb[0].mxu0
      %v2153 = vpop.f32.mrb[0].mxu0
      %v2154 = vadd.f32 %v1881, %v2153
      %v2155 = vpop.f32.mrb[0].mxu0
      %2156 = vmatprep.mubr.bf16.mxu0 %v1087
      %2157 = vmatmul.mubr.bf16.gmra.mrb[0].mxu0 %v1017
      %v2158 = vpop.f32.mrb[0].mxu0
      %v2159 = vadd.f32 %v1886, %v2158
      %v2160 = vpop.f32.mrb[0].mxu0
      %v2161 = vpop.f32.mrb[0].mxu0
      %v2162 = vadd.f32 %v1889, %v2161
      %v2163 = vpop.f32.mrb[0].mxu0
      %2164 = vmatprep.mubr.bf16.mxu0 %v1091
      %2165 = vmatmul.mubr.bf16.gmra.mrb[0].mxu0 %v1020
      %v2166 = vpop.f32.mrb[0].mxu0
      %v2167 = vadd.f32 %v1894, %v2166
      %v2168 = vpop.f32.mrb[0].mxu0
      %v2169 = vpop.f32.mrb[0].mxu0
      %v2170 = vadd.f32 %v1897, %v2169
      %v2171 = vpop.f32.mrb[0].mxu0
      %2172 = vmatprep.mubr.bf16.mxu0 %v1095
      %2173 = vmatmul.mubr.bf16.gmra.mrb[0].mxu0 %v1023
      %v2174 = vpop.f32.mrb[0].mxu0
      %v2175 = vadd.f32 %v1902, %v2174
      %v2176 = vpop.f32.mrb[0].mxu0
      %v2177 = vpop.f32.mrb[0].mxu0
      %v2178 = vadd.f32 %v1905, %v2177
      %v2179 = vpop.f32.mrb[0].mxu0
      %2180 = vmatprep.mubr.bf16.mxu0 %v1099
      %2181 = vmatmul.mubr.bf16.gmra.mrb[0].mxu0 %v1027
      %v2182 = vpop.f32.mrb[0].mxu0
      %v2183 = vadd.f32 %v1910, %v2182
      %v2184 = vpop.f32.mrb[0].mxu0
      %v2185 = vpop.f32.mrb[0].mxu0
      %v2186 = vadd.f32 %v1913, %v2185
      %v2187 = vpop.f32.mrb[0].mxu0
      %2188 = vdwg.mxu0
      %v2189 = vld [vmem:[#allocation2 + $0x10] sm:$0x8]
      %v2190 = vld [vmem:[%s3] sm:$0xf]
      %v2191 = vld [vmem:[%s3 + $0x4] sm:$0xf]
      %v2192 = vld [vmem:[%s3 + $0x8] sm:$0xf]
      %v2193 = vld [vmem:[%s3 + $0xc] sm:$0xf]
      %v2194 = vld [vmem:[%s3 + $0x10] sm:$0xf]
      %v2195 = vld [vmem:[%s3 + $0x14] sm:$0xf]
      %v2196 = vld [vmem:[%s3 + $0x18] sm:$0xf]
      %v2197 = vld [vmem:[%s3 + $0x1c] sm:$0xf]
      %v2199 = vunpack.c.l.b16 %v2189
      %v2200 = vpack.c.b16 %v654, %v2199
      %vm2201 = vcmask 1044480
      %v2202 = vrot.slane %v2200, 3
      %v2203 = vrot.slane %v688, 3
      %v2204 = vsel %vm2201, %v2202, %v2203
      %v2205 = vrot.slane %v689, 3
      %v2206 = vsel %vm2201, %v2203, %v2205
      %v2207 = vrot.slane %v690, 3
      %v2208 = vsel %vm2201, %v2205, %v2207
      %v2209 = vrot.slane %v691, 3
      %v2210 = vsel %vm2201, %v2207, %v2209
      %v2211 = vrot.slane %v692, 3
      %v2212 = vsel %vm2201, %v2209, %v2211
      %v2213 = vrot.slane %v693, 3
      %v2214 = vsel %vm2201, %v2211, %v2213
      %v2215 = vrot.slane %v694, 3
      %v2216 = vsel %vm2201, %v2213, %v2215
      %v2217 = vrot.slane %v695, 3
      %v2218 = vsel %vm2201, %v2215, %v2217
      %v2219 = vrot.slane %v696, 3
      %v2220 = vsel %vm2201, %v2217, %v2219
      %v2221 = vrot.slane %v697, 3
      %v2222 = vsel %vm2201, %v2219, %v2221
      %v2223 = vrot.slane %v698, 3
      %v2224 = vsel %vm2201, %v2221, %v2223
      %v2225 = vrot.slane %v699, 3
      %v2226 = vsel %vm2201, %v2223, %v2225
      %v2227 = vrot.slane %v700, 3
      %v2228 = vsel %vm2201, %v2225, %v2227
      %v2229 = vrot.slane %v701, 3
      %v2230 = vsel %vm2201, %v2227, %v2229
      %v2231 = vrot.slane %v705, 3
      %v2232 = vsel %vm2201, %v2229, %v2231
      %v2233 = vrot.slane %v932, 3
      %v2234 = vsel %vm2201, %v2231, %v2233
      %v2235 = vrot.slane %v1186, 3
      %v2236 = vsel %vm2201, %v2233, %v2235
      %v2237 = vrot.slane %v1213, 3
      %v2238 = vsel %vm2201, %v2235, %v2237
      %v2247 = vunpack.c.l.b16 %v2190
      %v2248 = vunpack.c.l.b16 %v2191
      %v2249 = vunpack.c.l.b16 %v2192
      %v2250 = vunpack.c.l.b16 %v2193
      %v2251 = vunpack.c.l.b16 %v2194
      %v2252 = vunpack.c.l.b16 %v2195
      %v2253 = vunpack.c.l.b16 %v2196
      %v2254 = vunpack.c.l.b16 %v2197
      %v2255 = vpack.c.b16 %v2248, %v2247
      %v2256 = vpack.c.b16 %v2250, %v2249
      %v2257 = vpack.c.b16 %v2252, %v2251
      %v2258 = vpack.c.b16 %v2254, %v2253
      %v2264 = vsel %vm973, %v2204, 0
      %v2267 = vsel %vm973, %v2206, 0
      %v2270 = vsel %vm973, %v2208, 0
      %v2273 = vsel %vm973, %v2210, 0
      %v2276 = vsel %vm973, %v2212, 0
      %v2279 = vsel %vm973, %v2214, 0
      %v2282 = vsel %vm973, %v2216, 0
      %v2285 = vsel %vm973, %v2218, 0
      %v2288 = vsel %vm973, %v2220, 0
      %v2291 = vsel %vm973, %v2222, 0
      %v2294 = vsel %vm973, %v2224, 0
      %v2297 = vsel %vm973, %v2226, 0
      %v2300 = vsel %vm973, %v2228, 0
      %v2303 = vsel %vm973, %v2230, 0
      %v2306 = vsel %vm973, %v2232, 0
      %v2309 = vsel %vm973, %v2234, 0
      %v2312 = vsel %vm973, %v2236, 0
      %v2315 = vsel %vm973, %v2238, 0
      %2317 = vmatprep.subr.bf16.mxu0 0
      %2318 = vmatpush1.bf16.msra.mxu0 %v2255
      %2319 = vmatprep.subr.bf16.mxu0 0
      %2320 = vmatpush1.bf16.msra.mxu0 %v2256
      %2321 = vmatprep.subr.bf16.mxu0 0
      %2322 = vmatpush1.bf16.msra.mxu0 %v2257
      %2323 = vmatprep.subr.bf16.mxu0 0
      %2324 = vmatpush1.bf16.msra.mxu0 %v2258
      %2325 = vmatprep.subr.bf16.mxu0 0
      %2326 = vmatpush1.bf16.msra.mxu0 0
      %2327 = vmatprep.subr.bf16.mxu0 0
      %2328 = vmatpush1.bf16.msra.mxu0 0
      %2329 = vmatprep.subr.bf16.mxu0 0
      %2330 = vmatpush1.bf16.msra.mxu0 0
      %2331 = vmatprep.subr.bf16.mxu0 0
      %2332 = vmatpush1.bf16.msra.mxu0 0
      %2333 = vmatprep.subr.bf16.mxu0 0
      %2334 = vmatpush1.bf16.msra.mxu0 0
      %2335 = vmatprep.subr.bf16.mxu0 0
      %2336 = vmatpush1.bf16.msra.mxu0 0
      %2337 = vmatprep.subr.bf16.mxu0 0
      %2338 = vmatpush1.bf16.msra.mxu0 0
      %2339 = vmatprep.subr.bf16.mxu0 0
      %2340 = vmatpush1.bf16.msra.mxu0 0
      %2341 = vmatprep.subr.bf16.mxu0 0
      %2342 = vmatpush1.bf16.msra.mxu0 0
      %2343 = vmatprep.subr.bf16.mxu0 0
      %2344 = vmatpush1.bf16.msra.mxu0 0
      %2345 = vmatprep.subr.bf16.mxu0 0
      %2346 = vmatpush1.bf16.msra.mxu0 0
      %2347 = vmatprep.subr.bf16.mxu0 0
      %2348 = vmatpush1.bf16.msra.mxu0 0
      %2349 = vmatprep.mubr.bf16.mxu0 0
      %2350 = vmatmul.mubr.bf16.gmra.mrb[0].mxu0 %v2264
      %v2351 = vpop.f32.mrb[0].mxu0
      %v2352 = vadd.f32 0.0, %v2351
      %v2353 = vpop.f32.mrb[0].mxu0
      %v2354 = vpop.f32.mrb[0].mxu0
      %v2355 = vadd.f32 0.0, %v2354
      %v2356 = vpop.f32.mrb[0].mxu0
      %2357 = vmatprep.mubr.bf16.mxu0 0
      %2358 = vmatmul.mubr.bf16.gmra.mrb[0].mxu0 %v2267
      %v2359 = vpop.f32.mrb[0].mxu0
      %v2360 = vadd.f32 0.0, %v2359
      %v2361 = vpop.f32.mrb[0].mxu0
      %v2362 = vpop.f32.mrb[0].mxu0
      %v2363 = vadd.f32 0.0, %v2362
      %v2364 = vpop.f32.mrb[0].mxu0
      %2365 = vmatprep.mubr.bf16.mxu0 0
      %2366 = vmatmul.mubr.bf16.gmra.mrb[0].mxu0 %v2270
      %v2367 = vpop.f32.mrb[0].mxu0
      %v2368 = vadd.f32 0.0, %v2367
      %v2369 = vpop.f32.mrb[0].mxu0
      %v2370 = vpop.f32.mrb[0].mxu0
      %v2371 = vadd.f32 0.0, %v2370
      %v2372 = vpop.f32.mrb[0].mxu0
      %2373 = vmatprep.mubr.bf16.mxu0 0
      %2374 = vmatmul.mubr.bf16.gmra.mrb[0].mxu0 %v2273
      %v2375 = vpop.f32.mrb[0].mxu0
      %v2376 = vadd.f32 0.0, %v2375
      %v2377 = vpop.f32.mrb[0].mxu0
      %v2378 = vpop.f32.mrb[0].mxu0
      %v2379 = vadd.f32 0.0, %v2378
      %v2380 = vpop.f32.mrb[0].mxu0
      %2381 = vmatprep.mubr.bf16.mxu0 0
      %2382 = vmatmul.mubr.bf16.gmra.mrb[0].mxu0 %v2276
      %v2383 = vpop.f32.mrb[0].mxu0
      %v2384 = vadd.f32 0.0, %v2383
      %v2385 = vpop.f32.mrb[0].mxu0
      %v2386 = vpop.f32.mrb[0].mxu0
      %v2387 = vadd.f32 0.0, %v2386
      %v2388 = vpop.f32.mrb[0].mxu0
      %2389 = vmatprep.mubr.bf16.mxu0 0
      %2390 = vmatmul.mubr.bf16.gmra.mrb[0].mxu0 %v2279
      %v2391 = vpop.f32.mrb[0].mxu0
      %v2392 = vadd.f32 0.0, %v2391
      %v2393 = vpop.f32.mrb[0].mxu0
      %v2394 = vpop.f32.mrb[0].mxu0
      %v2395 = vadd.f32 0.0, %v2394
      %v2396 = vpop.f32.mrb[0].mxu0
      %2397 = vmatprep.mubr.bf16.mxu0 0
      %2398 = vmatmul.mubr.bf16.gmra.mrb[0].mxu0 %v2282
      %v2399 = vpop.f32.mrb[0].mxu0
      %v2400 = vadd.f32 0.0, %v2399
      %v2401 = vpop.f32.mrb[0].mxu0
      %v2402 = vpop.f32.mrb[0].mxu0
      %v2403 = vadd.f32 0.0, %v2402
      %v2404 = vpop.f32.mrb[0].mxu0
      %2405 = vmatprep.mubr.bf16.mxu0 0
      %2406 = vmatmul.mubr.bf16.gmra.mrb[0].mxu0 %v2285
      %v2407 = vpop.f32.mrb[0].mxu0
      %v2408 = vadd.f32 0.0, %v2407
      %v2409 = vpop.f32.mrb[0].mxu0
      %v2410 = vpop.f32.mrb[0].mxu0
      %v2411 = vadd.f32 0.0, %v2410
      %v2412 = vpop.f32.mrb[0].mxu0
      %2413 = vmatprep.mubr.bf16.mxu0 0
      %2414 = vmatmul.mubr.bf16.gmra.mrb[0].mxu0 %v2288
      %v2415 = vpop.f32.mrb[0].mxu0
      %v2416 = vadd.f32 0.0, %v2415
      %v2417 = vpop.f32.mrb[0].mxu0
      %v2418 = vpop.f32.mrb[0].mxu0
      %v2419 = vadd.f32 0.0, %v2418
      %v2420 = vpop.f32.mrb[0].mxu0
      %2421 = vmatprep.mubr.bf16.mxu0 0
      %2422 = vmatmul.mubr.bf16.gmra.mrb[0].mxu0 %v2291
      %v2423 = vpop.f32.mrb[0].mxu0
      %v2424 = vadd.f32 0.0, %v2423
      %v2425 = vpop.f32.mrb[0].mxu0
      %v2426 = vpop.f32.mrb[0].mxu0
      %v2427 = vadd.f32 0.0, %v2426
      %v2428 = vpop.f32.mrb[0].mxu0
      %2429 = vmatprep.mubr.bf16.mxu0 0
      %2430 = vmatmul.mubr.bf16.gmra.mrb[0].mxu0 %v2294
      %v2431 = vpop.f32.mrb[0].mxu0
      %v2432 = vadd.f32 0.0, %v2431
      %v2433 = vpop.f32.mrb[0].mxu0
      %v2434 = vpop.f32.mrb[0].mxu0
      %v2435 = vadd.f32 0.0, %v2434
      %v2436 = vpop.f32.mrb[0].mxu0
      %2437 = vmatprep.mubr.bf16.mxu0 0
      %2438 = vmatmul.mubr.bf16.gmra.mrb[0].mxu0 %v2297
      %v2439 = vpop.f32.mrb[0].mxu0
      %v2440 = vadd.f32 0.0, %v2439
      %v2441 = vpop.f32.mrb[0].mxu0
      %v2442 = vpop.f32.mrb[0].mxu0
      %v2443 = vadd.f32 0.0, %v2442
      %v2444 = vpop.f32.mrb[0].mxu0
      %2445 = vmatprep.mubr.bf16.mxu0 0
      %2446 = vmatmul.mubr.bf16.gmra.mrb[0].mxu0 %v2300
      %v2447 = vpop.f32.mrb[0].mxu0
      %v2448 = vadd.f32 0.0, %v2447
      %v2449 = vpop.f32.mrb[0].mxu0
      %v2450 = vpop.f32.mrb[0].mxu0
      %v2451 = vadd.f32 0.0, %v2450
      %v2452 = vpop.f32.mrb[0].mxu0
      %2453 = vmatprep.mubr.bf16.mxu0 0
      %2454 = vmatmul.mubr.bf16.gmra.mrb[0].mxu0 %v2303
      %v2455 = vpop.f32.mrb[0].mxu0
      %v2456 = vadd.f32 0.0, %v2455
      %v2457 = vpop.f32.mrb[0].mxu0
      %v2458 = vpop.f32.mrb[0].mxu0
      %v2459 = vadd.f32 0.0, %v2458
      %v2460 = vpop.f32.mrb[0].mxu0
      %2461 = vmatprep.mubr.bf16.mxu0 0
      %2462 = vmatmul.mubr.bf16.gmra.mrb[0].mxu0 %v2306
      %v2463 = vpop.f32.mrb[0].mxu0
      %v2464 = vadd.f32 0.0, %v2463
      %v2465 = vpop.f32.mrb[0].mxu0
      %v2466 = vpop.f32.mrb[0].mxu0
      %v2467 = vadd.f32 0.0, %v2466
      %v2468 = vpop.f32.mrb[0].mxu0
      %2469 = vmatprep.mubr.bf16.mxu0 0
      %2470 = vmatmul.mubr.bf16.gmra.mrb[0].mxu0 %v2309
      %v2471 = vpop.f32.mrb[0].mxu0
      %v2472 = vadd.f32 0.0, %v2471
      %v2473 = vpop.f32.mrb[0].mxu0
      %v2474 = vpop.f32.mrb[0].mxu0
      %v2475 = vadd.f32 0.0, %v2474
      %v2476 = vpop.f32.mrb[0].mxu0
      %2477 = vmatprep.mubr.bf16.mxu0 0
      %2478 = vmatmul.mubr.bf16.gmra.mrb[0].mxu0 %v2312
      %v2479 = vpop.f32.mrb[0].mxu0
      %v2480 = vadd.f32 0.0, %v2479
      %v2481 = vpop.f32.mrb[0].mxu0
      %v2482 = vpop.f32.mrb[0].mxu0
      %v2483 = vadd.f32 0.0, %v2482
      %v2484 = vpop.f32.mrb[0].mxu0
      %2485 = vmatprep.mubr.bf16.mxu0 0
      %2486 = vmatmul.mubr.bf16.gmra.mrb[0].mxu0 %v2315
      %v2487 = vpop.f32.mrb[0].mxu0
      %v2488 = vadd.f32 0.0, %v2487
      %v2489 = vpop.f32.mrb[0].mxu0
      %v2490 = vpop.f32.mrb[0].mxu0
      %v2491 = vadd.f32 0.0, %v2490
      %v2492 = vpop.f32.mrb[0].mxu0
      %2493 = vdwg.mxu0
      %v2494 = vadd.f32 %v2047, %v2352
      %v2495 = vadd.f32 %v2050, %v2355
      %v2496 = vadd.f32 %v2055, %v2360
      %v2497 = vadd.f32 %v2058, %v2363
      %v2498 = vadd.f32 %v2063, %v2368
      %v2499 = vadd.f32 %v2066, %v2371
      %v2500 = vadd.f32 %v2071, %v2376
      %v2501 = vadd.f32 %v2074, %v2379
      %v2502 = vadd.f32 %v2079, %v2384
      %v2503 = vadd.f32 %v2082, %v2387
      %v2504 = vadd.f32 %v2087, %v2392
      %v2505 = vadd.f32 %v2090, %v2395
      %v2506 = vadd.f32 %v2095, %v2400
      %v2507 = vadd.f32 %v2098, %v2403
      %v2508 = vadd.f32 %v2103, %v2408
      %v2509 = vadd.f32 %v2106, %v2411
      %v2510 = vadd.f32 %v2111, %v2416
      %v2511 = vadd.f32 %v2114, %v2419
      %v2512 = vadd.f32 %v2119, %v2424
      %v2513 = vadd.f32 %v2122, %v2427
      %v2514 = vadd.f32 %v2127, %v2432
      %v2515 = vadd.f32 %v2130, %v2435
      %v2516 = vadd.f32 %v2135, %v2440
      %v2517 = vadd.f32 %v2138, %v2443
      %v2518 = vadd.f32 %v2143, %v2448
      %v2519 = vadd.f32 %v2146, %v2451
      %v2520 = vadd.f32 %v2151, %v2456
      %v2521 = vadd.f32 %v2154, %v2459
      %v2522 = vadd.f32 %v2159, %v2464
      %v2523 = vadd.f32 %v2162, %v2467
      %v2524 = vadd.f32 %v2167, %v2472
      %v2525 = vadd.f32 %v2170, %v2475
      %v2526 = vadd.f32 %v2175, %v2480
      %v2527 = vadd.f32 %v2178, %v2483
      %v2528 = vadd.f32 %v2183, %v2488
      %v2529 = vadd.f32 %v2186, %v2491
      %v2530 = vld [vmem:[%s4] sm:$0x1]
      %v2532 = vlaneseq
      %v2533 = vshrl.u32 %v2532, 7
      %v2534 = vsub.s32 0, %v2533
      %v2535 = vrot.slane %v2530, %v2534
      %v2537 = vadd.f32 %v2494, %v2535
      %v2538 = vadd.f32 %v2495, %v2535
      %v2539 = vadd.f32 %v2496, %v2535
      %v2540 = vadd.f32 %v2497, %v2535
      %v2541 = vadd.f32 %v2498, %v2535
      %v2542 = vadd.f32 %v2499, %v2535
      %v2543 = vadd.f32 %v2500, %v2535
      %v2544 = vadd.f32 %v2501, %v2535
      %v2545 = vadd.f32 %v2502, %v2535
      %v2546 = vadd.f32 %v2503, %v2535
      %v2547 = vadd.f32 %v2504, %v2535
      %v2548 = vadd.f32 %v2505, %v2535
      %v2549 = vadd.f32 %v2506, %v2535
      %v2550 = vadd.f32 %v2507, %v2535
      %v2551 = vadd.f32 %v2508, %v2535
      %v2552 = vadd.f32 %v2509, %v2535
      %v2553 = vadd.f32 %v2510, %v2535
      %v2554 = vadd.f32 %v2511, %v2535
      %v2555 = vadd.f32 %v2512, %v2535
      %v2556 = vadd.f32 %v2513, %v2535
      %v2557 = vadd.f32 %v2514, %v2535
      %v2558 = vadd.f32 %v2515, %v2535
      %v2559 = vadd.f32 %v2516, %v2535
      %v2560 = vadd.f32 %v2517, %v2535
      %v2561 = vadd.f32 %v2518, %v2535
      %v2562 = vadd.f32 %v2519, %v2535
      %v2563 = vadd.f32 %v2520, %v2535
      %v2564 = vadd.f32 %v2521, %v2535
      %v2565 = vadd.f32 %v2522, %v2535
      %v2566 = vadd.f32 %v2523, %v2535
      %v2567 = vadd.f32 %v2524, %v2535
      %v2568 = vadd.f32 %v2525, %v2535
      %v2569 = vadd.f32 %v2526, %v2535
      %v2570 = vadd.f32 %v2527, %v2535
      %v2571 = vadd.f32 %v2528, %v2535
      %v2572 = vadd.f32 %v2529, %v2535
      %v2573 = vmax.f32 %v2537, 0.0
      %v2574 = vmax.f32 %v2538, 0.0
      %v2575 = vmax.f32 %v2539, 0.0
      %v2576 = vmax.f32 %v2540, 0.0
      %v2577 = vmax.f32 %v2541, 0.0
      %v2578 = vmax.f32 %v2542, 0.0
      %v2579 = vmax.f32 %v2543, 0.0
      %v2580 = vmax.f32 %v2544, 0.0
      %v2581 = vmax.f32 %v2545, 0.0
      %v2582 = vmax.f32 %v2546, 0.0
      %v2583 = vmax.f32 %v2547, 0.0
      %v2584 = vmax.f32 %v2548, 0.0
      %v2585 = vmax.f32 %v2549, 0.0
      %v2586 = vmax.f32 %v2550, 0.0
      %v2587 = vmax.f32 %v2551, 0.0
      %v2588 = vmax.f32 %v2552, 0.0
      %v2589 = vmax.f32 %v2553, 0.0
      %v2590 = vmax.f32 %v2554, 0.0
      %v2591 = vmax.f32 %v2555, 0.0
      %v2592 = vmax.f32 %v2556, 0.0
      %v2593 = vmax.f32 %v2557, 0.0
      %v2594 = vmax.f32 %v2558, 0.0
      %v2595 = vmax.f32 %v2559, 0.0
      %v2596 = vmax.f32 %v2560, 0.0
      %v2597 = vmax.f32 %v2561, 0.0
      %v2598 = vmax.f32 %v2562, 0.0
      %v2599 = vmax.f32 %v2563, 0.0
      %v2600 = vmax.f32 %v2564, 0.0
      %v2601 = vmax.f32 %v2565, 0.0
      %v2602 = vmax.f32 %v2566, 0.0
      %v2603 = vmax.f32 %v2567, 0.0
      %v2604 = vmax.f32 %v2568, 0.0
      %v2605 = vmax.f32 %v2569, 0.0
      %v2606 = vmax.f32 %v2570, 0.0
      %v2607 = vmax.f32 %v2571, 0.0
      %v2608 = vmax.f32 %v2572, 0.0
      %v2609 = vld [vmem:[%s0] sm:$0xff]
      %v2610 = vld [vmem:[%s0 + $0x8] sm:$0xff]
      %v2611 = vld [vmem:[%s0 + $0x10] sm:$0xff]
      %v2612 = vld [vmem:[%s0 + $0x18] sm:$0xff]
      %v2613 = vld [vmem:[%s0 + $0x20] sm:$0xff]
      %v2614 = vld [vmem:[%s0 + $0x28] sm:$0xff]
      %v2615 = vld [vmem:[%s0 + $0x30] sm:$0xff]
      %v2616 = vld [vmem:[%s0 + $0x38] sm:$0xff]
      %v2617 = vld [vmem:[%s0 + $0x40] sm:$0xff]
      %v2618 = vld [vmem:[%s0 + $0x48] sm:$0xff]
      %v2619 = vld [vmem:[%s0 + $0x50] sm:$0xff]
      %v2620 = vld [vmem:[%s0 + $0x58] sm:$0xff]
      %v2621 = vld [vmem:[%s0 + $0x60] sm:$0xff]
      %v2622 = vld [vmem:[%s0 + $0x68] sm:$0xff]
      %v2623 = vld [vmem:[%s0 + $0x70] sm:$0xff]
      %v2624 = vld [vmem:[%s0 + $0x78] sm:$0xff]
      %v2625 = vld [vmem:[%s0 + $0x80] sm:$0xff]
      %v2626 = vld [vmem:[%s0 + $0x88] sm:$0xff]
      %v2627 = vld [vmem:[%s0 + $0x90] sm:$0xff]
      %v2628 = vld [vmem:[%s0 + $0x98] sm:$0xff]
      %v2629 = vld [vmem:[%s0 + $0xa0] sm:$0xff]
      %v2630 = vld [vmem:[%s0 + $0xa8] sm:$0xff]
      %v2631 = vld [vmem:[%s0 + $0xb0] sm:$0xff]
      %v2632 = vld [vmem:[%s0 + $0xb8] sm:$0xff]
      %v2633 = vld [vmem:[%s0 + $0xc0] sm:$0xff]
      %v2634 = vld [vmem:[%s0 + $0xc8] sm:$0xff]
      %v2635 = vld [vmem:[%s0 + $0xd0] sm:$0xff]
      %v2636 = vld [vmem:[%s0 + $0xd8] sm:$0xff]
      %v2637 = vld [vmem:[%s0 + $0xe0] sm:$0xff]
      %v2638 = vld [vmem:[%s0 + $0xe8] sm:$0xff]
      %v2639 = vld [vmem:[%s0 + $0xf0] sm:$0xff]
      %v2640 = vld [vmem:[%s0 + $0xf8] sm:$0xff]
      %v2641 = vld [vmem:[%s0 + $0x100] sm:$0xff]
      %v2642 = vld [vmem:[%s0 + $0x108] sm:$0xff]
      %v2643 = vld [vmem:[%s0 + $0x110] sm:$0xff]
      %v2644 = vld [vmem:[%s0 + $0x118] sm:$0x3f]
      %2646 = vset.pattern.permute.xlu0 0
      %2647 = vperm.xlu0 %2646, %v2609
      %v2648 = vpop.permute.xlu0 %2647
      %2651 = vset.pattern.permute.xlu0 0
      %2652 = vperm.xlu0 %2651, %v2610
      %v2653 = vpop.permute.xlu0 %2652
      %2656 = vset.pattern.permute.xlu0 0
      %2657 = vperm.xlu0 %2656, %v2611
      %v2658 = vpop.permute.xlu0 %2657
      %2661 = vset.pattern.permute.xlu0 0
      %2662 = vperm.xlu0 %2661, %v2612
      %v2663 = vpop.permute.xlu0 %2662
      %2666 = vset.pattern.permute.xlu0 0
      %2667 = vperm.xlu0 %2666, %v2613
      %v2668 = vpop.permute.xlu0 %2667
      %2671 = vset.pattern.permute.xlu0 0
      %2672 = vperm.xlu0 %2671, %v2614
      %v2673 = vpop.permute.xlu0 %2672
      %2676 = vset.pattern.permute.xlu0 0
      %2677 = vperm.xlu0 %2676, %v2615
      %v2678 = vpop.permute.xlu0 %2677
      %2681 = vset.pattern.permute.xlu0 0
      %2682 = vperm.xlu0 %2681, %v2616
      %v2683 = vpop.permute.xlu0 %2682
      %2686 = vset.pattern.permute.xlu0 0
      %2687 = vperm.xlu0 %2686, %v2617
      %v2688 = vpop.permute.xlu0 %2687
      %2691 = vset.pattern.permute.xlu0 0
      %2692 = vperm.xlu0 %2691, %v2618
      %v2693 = vpop.permute.xlu0 %2692
      %2696 = vset.pattern.permute.xlu0 0
      %2697 = vperm.xlu0 %2696, %v2619
      %v2698 = vpop.permute.xlu0 %2697
      %2701 = vset.pattern.permute.xlu0 0
      %2702 = vperm.xlu0 %2701, %v2620
      %v2703 = vpop.permute.xlu0 %2702
      %2706 = vset.pattern.permute.xlu0 0
      %2707 = vperm.xlu0 %2706, %v2621
      %v2708 = vpop.permute.xlu0 %2707
      %2711 = vset.pattern.permute.xlu0 0
      %2712 = vperm.xlu0 %2711, %v2622
      %v2713 = vpop.permute.xlu0 %2712
      %2716 = vset.pattern.permute.xlu0 0
      %2717 = vperm.xlu0 %2716, %v2623
      %v2718 = vpop.permute.xlu0 %2717
      %2721 = vset.pattern.permute.xlu0 0
      %2722 = vperm.xlu0 %2721, %v2624
      %v2723 = vpop.permute.xlu0 %2722
      %2726 = vset.pattern.permute.xlu0 0
      %2727 = vperm.xlu0 %2726, %v2625
      %v2728 = vpop.permute.xlu0 %2727
      %2731 = vset.pattern.permute.xlu0 0
      %2732 = vperm.xlu0 %2731, %v2626
      %v2733 = vpop.permute.xlu0 %2732
      %2736 = vset.pattern.permute.xlu0 0
      %2737 = vperm.xlu0 %2736, %v2627
      %v2738 = vpop.permute.xlu0 %2737
      %2741 = vset.pattern.permute.xlu0 0
      %2742 = vperm.xlu0 %2741, %v2628
      %v2743 = vpop.permute.xlu0 %2742
      %2746 = vset.pattern.permute.xlu0 0
      %2747 = vperm.xlu0 %2746, %v2629
      %v2748 = vpop.permute.xlu0 %2747
      %2751 = vset.pattern.permute.xlu0 0
      %2752 = vperm.xlu0 %2751, %v2630
      %v2753 = vpop.permute.xlu0 %2752
      %2756 = vset.pattern.permute.xlu0 0
      %2757 = vperm.xlu0 %2756, %v2631
      %v2758 = vpop.permute.xlu0 %2757
      %2761 = vset.pattern.permute.xlu0 0
      %2762 = vperm.xlu0 %2761, %v2632
      %v2763 = vpop.permute.xlu0 %2762
      %2766 = vset.pattern.permute.xlu0 0
      %2767 = vperm.xlu0 %2766, %v2633
      %v2768 = vpop.permute.xlu0 %2767
      %2771 = vset.pattern.permute.xlu0 0
      %2772 = vperm.xlu0 %2771, %v2634
      %v2773 = vpop.permute.xlu0 %2772
      %2776 = vset.pattern.permute.xlu0 0
      %2777 = vperm.xlu0 %2776, %v2635
      %v2778 = vpop.permute.xlu0 %2777
      %2781 = vset.pattern.permute.xlu0 0
      %2782 = vperm.xlu0 %2781, %v2636
      %v2783 = vpop.permute.xlu0 %2782
      %2786 = vset.pattern.permute.xlu0 0
      %2787 = vperm.xlu0 %2786, %v2637
      %v2788 = vpop.permute.xlu0 %2787
      %2791 = vset.pattern.permute.xlu0 0
      %2792 = vperm.xlu0 %2791, %v2638
      %v2793 = vpop.permute.xlu0 %2792
      %2796 = vset.pattern.permute.xlu0 0
      %2797 = vperm.xlu0 %2796, %v2639
      %v2798 = vpop.permute.xlu0 %2797
      %2801 = vset.pattern.permute.xlu0 0
      %2802 = vperm.xlu0 %2801, %v2640
      %v2803 = vpop.permute.xlu0 %2802
      %2806 = vset.pattern.permute.xlu0 0
      %2807 = vperm.xlu0 %2806, %v2641
      %v2808 = vpop.permute.xlu0 %2807
      %2811 = vset.pattern.permute.xlu0 0
      %2812 = vperm.xlu0 %2811, %v2642
      %v2813 = vpop.permute.xlu0 %2812
      %2816 = vset.pattern.permute.xlu0 0
      %2817 = vperm.xlu0 %2816, %v2643
      %v2818 = vpop.permute.xlu0 %2817
      %2821 = vset.pattern.permute.xlu0 0
      %2822 = vperm.xlu0 %2821, %v2644
      %v2823 = vpop.permute.xlu0 %2822
      %v2825 = vmul.f32 %v2573, %v2648
      %v2826 = vmul.f32 %v2574, %v2653
      %v2827 = vmul.f32 %v2575, %v2658
      %v2828 = vmul.f32 %v2576, %v2663
      %v2829 = vmul.f32 %v2577, %v2668
      %v2830 = vmul.f32 %v2578, %v2673
      %v2831 = vmul.f32 %v2579, %v2678
      %v2832 = vmul.f32 %v2580, %v2683
      %v2833 = vmul.f32 %v2581, %v2688
      %v2834 = vmul.f32 %v2582, %v2693
      %v2835 = vmul.f32 %v2583, %v2698
      %v2836 = vmul.f32 %v2584, %v2703
      %v2837 = vmul.f32 %v2585, %v2708
      %v2838 = vmul.f32 %v2586, %v2713
      %v2839 = vmul.f32 %v2587, %v2718
      %v2840 = vmul.f32 %v2588, %v2723
      %v2841 = vmul.f32 %v2589, %v2728
      %v2842 = vmul.f32 %v2590, %v2733
      %v2843 = vmul.f32 %v2591, %v2738
      %v2844 = vmul.f32 %v2592, %v2743
      %v2845 = vmul.f32 %v2593, %v2748
      %v2846 = vmul.f32 %v2594, %v2753
      %v2847 = vmul.f32 %v2595, %v2758
      %v2848 = vmul.f32 %v2596, %v2763
      %v2849 = vmul.f32 %v2597, %v2768
      %v2850 = vmul.f32 %v2598, %v2773
      %v2851 = vmul.f32 %v2599, %v2778
      %v2852 = vmul.f32 %v2600, %v2783
      %v2853 = vmul.f32 %v2601, %v2788
      %v2854 = vmul.f32 %v2602, %v2793
      %v2855 = vmul.f32 %v2603, %v2798
      %v2856 = vmul.f32 %v2604, %v2803
      %v2857 = vmul.f32 %v2605, %v2808
      %v2858 = vmul.f32 %v2606, %v2813
      %v2859 = vmul.f32 %v2607, %v2818
      %v2860 = vmul.f32 %v2608, %v2823
      %v2861 = vpack.c.bf16 %v2826, %v2825
      %v2862 = vpack.c.bf16 %v2828, %v2827
      %v2863 = vpack.c.bf16 %v2830, %v2829
      %v2864 = vpack.c.bf16 %v2832, %v2831
      %v2865 = vpack.c.bf16 %v2834, %v2833
      %v2866 = vpack.c.bf16 %v2836, %v2835
      %v2867 = vpack.c.bf16 %v2838, %v2837
      %v2868 = vpack.c.bf16 %v2840, %v2839
      %v2869 = vpack.c.bf16 %v2842, %v2841
      %v2870 = vpack.c.bf16 %v2844, %v2843
      %v2871 = vpack.c.bf16 %v2846, %v2845
      %v2872 = vpack.c.bf16 %v2848, %v2847
      %v2873 = vpack.c.bf16 %v2850, %v2849
      %v2874 = vpack.c.bf16 %v2852, %v2851
      %v2875 = vpack.c.bf16 %v2854, %v2853
      %v2876 = vpack.c.bf16 %v2856, %v2855
      %v2877 = vpack.c.bf16 %v2858, %v2857
      %v2878 = vpack.c.bf16 %v2860, %v2859
      %v2897 = vunpack.c.l.b16 %v2861
      %v2898 = vunpack.c.h.b16 %v2861
      %v2899 = vunpack.c.l.b16 %v2862
      %v2900 = vunpack.c.h.b16 %v2862
      %v2901 = vunpack.c.l.b16 %v2863
      %v2902 = vunpack.c.h.b16 %v2863
      %v2903 = vunpack.c.l.b16 %v2864
      %v2904 = vunpack.c.h.b16 %v2864
      %v2905 = vunpack.c.l.b16 %v2865
      %v2906 = vunpack.c.h.b16 %v2865
      %v2907 = vunpack.c.l.b16 %v2866
      %v2908 = vunpack.c.h.b16 %v2866
      %v2909 = vunpack.c.l.b16 %v2867
      %v2910 = vunpack.c.h.b16 %v2867
      %v2911 = vunpack.c.l.b16 %v2868
      %v2912 = vunpack.c.h.b16 %v2868
      %v2913 = vunpack.c.l.b16 %v2869
      %v2914 = vunpack.c.h.b16 %v2869
      %v2915 = vunpack.c.l.b16 %v2870
      %v2916 = vunpack.c.h.b16 %v2870
      %v2917 = vunpack.c.l.b16 %v2871
      %v2918 = vunpack.c.h.b16 %v2871
      %v2919 = vunpack.c.l.b16 %v2872
      %v2920 = vunpack.c.h.b16 %v2872
      %v2921 = vunpack.c.l.b16 %v2873
      %v2922 = vunpack.c.h.b16 %v2873
      %v2923 = vunpack.c.l.b16 %v2874
      %v2924 = vunpack.c.h.b16 %v2874
      %v2925 = vunpack.c.l.b16 %v2875
      %v2926 = vunpack.c.h.b16 %v2875
      %v2927 = vunpack.c.l.b16 %v2876
      %v2928 = vunpack.c.h.b16 %v2876
      %v2929 = vunpack.c.l.b16 %v2877
      %v2930 = vunpack.c.h.b16 %v2877
      %v2931 = vunpack.c.l.b16 %v2878
      %v2932 = vunpack.c.h.b16 %v2878
      %v2933 = vpack.c.b16 %v2897, %v2897
      %v2934 = vpack.c.b16 %v2898, %v2898
      %v2935 = vpack.c.b16 %v2899, %v2899
      %v2936 = vpack.c.b16 %v2900, %v2900
      %v2937 = vpack.c.b16 %v2901, %v2901
      %v2938 = vpack.c.b16 %v2902, %v2902
      %v2939 = vpack.c.b16 %v2903, %v2903
      %v2940 = vpack.c.b16 %v2904, %v2904
      %v2941 = vpack.c.b16 %v2905, %v2905
      %v2942 = vpack.c.b16 %v2906, %v2906
      %v2943 = vpack.c.b16 %v2907, %v2907
      %v2944 = vpack.c.b16 %v2908, %v2908
      %v2945 = vpack.c.b16 %v2909, %v2909
      %v2946 = vpack.c.b16 %v2910, %v2910
      %v2947 = vpack.c.b16 %v2911, %v2911
      %v2948 = vpack.c.b16 %v2912, %v2912
      %v2949 = vpack.c.b16 %v2913, %v2913
      %v2950 = vpack.c.b16 %v2914, %v2914
      %v2951 = vpack.c.b16 %v2915, %v2915
      %v2952 = vpack.c.b16 %v2916, %v2916
      %v2953 = vpack.c.b16 %v2917, %v2917
      %v2954 = vpack.c.b16 %v2918, %v2918
      %v2955 = vpack.c.b16 %v2919, %v2919
      %v2956 = vpack.c.b16 %v2920, %v2920
      %v2957 = vpack.c.b16 %v2921, %v2921
      %v2958 = vpack.c.b16 %v2922, %v2922
      %v2959 = vpack.c.b16 %v2923, %v2923
      %v2960 = vpack.c.b16 %v2924, %v2924
      %v2961 = vpack.c.b16 %v2925, %v2925
      %v2962 = vpack.c.b16 %v2926, %v2926
      %v2963 = vpack.c.b16 %v2927, %v2927
      %v2964 = vpack.c.b16 %v2928, %v2928
      %v2965 = vpack.c.b16 %v2929, %v2929
      %v2966 = vpack.c.b16 %v2930, %v2930
      %v2967 = vpack.c.b16 %v2931, %v2931
      %v2968 = vpack.c.b16 %v2932, %v2932
      %vm2969 = vsmask.f32 5392
      %vm2970 = vmor %vm559, %vm2969
      %v2972 = vshrl.u32 %v2933, 16
      %v2974 = vrot.slane %v2972, 6
      %v2975 = vshll.u32 %v2933, 16
      %v2977 = vrot.slane %v2975, 7
      %v2978 = vor.u32 %v2974, %v2977
      %v2979 = vrot.slane %v2978, 4
      %v2981 = vshrl.u32 %v2934, 16
      %v2983 = vrot.slane %v2981, 6
      %v2984 = vshll.u32 %v2934, 16
      %v2986 = vrot.slane %v2984, 7
      %v2987 = vor.u32 %v2983, %v2986
      %v2988 = vsel %vm2970, %v2979, %v2987
      %v2989 = vrot.slane %v2987, 4
      %v2991 = vshrl.u32 %v2935, 16
      %v2993 = vrot.slane %v2991, 6
      %v2994 = vshll.u32 %v2935, 16
      %v2996 = vrot.slane %v2994, 7
      %v2997 = vor.u32 %v2993, %v2996
      %v2998 = vsel %vm2970, %v2989, %v2997
      %v2999 = vrot.slane %v2997, 4
      %v3001 = vshrl.u32 %v2936, 16
      %v3003 = vrot.slane %v3001, 6
      %v3004 = vshll.u32 %v2936, 16
      %v3006 = vrot.slane %v3004, 7
      %v3007 = vor.u32 %v3003, %v3006
      %v3008 = vsel %vm2970, %v2999, %v3007
      %v3009 = vrot.slane %v3007, 4
      %v3011 = vshrl.u32 %v2937, 16
      %v3013 = vrot.slane %v3011, 6
      %v3014 = vshll.u32 %v2937, 16
      %v3016 = vrot.slane %v3014, 7
      %v3017 = vor.u32 %v3013, %v3016
      %v3018 = vsel %vm2970, %v3009, %v3017
      %v3019 = vrot.slane %v3017, 4
      %v3021 = vshrl.u32 %v2938, 16
      %v3023 = vrot.slane %v3021, 6
      %v3024 = vshll.u32 %v2938, 16
      %v3026 = vrot.slane %v3024, 7
      %v3027 = vor.u32 %v3023, %v3026
      %v3028 = vsel %vm2970, %v3019, %v3027
      %v3029 = vrot.slane %v3027, 4
      %v3031 = vshrl.u32 %v2939, 16
      %v3033 = vrot.slane %v3031, 6
      %v3034 = vshll.u32 %v2939, 16
      %v3036 = vrot.slane %v3034, 7
      %v3037 = vor.u32 %v3033, %v3036
      %v3038 = vsel %vm2970, %v3029, %v3037
      %v3039 = vrot.slane %v3037, 4
      %v3041 = vshrl.u32 %v2940, 16
      %v3043 = vrot.slane %v3041, 6
      %v3044 = vshll.u32 %v2940, 16
      %v3046 = vrot.slane %v3044, 7
      %v3047 = vor.u32 %v3043, %v3046
      %v3048 = vsel %vm2970, %v3039, %v3047
      %v3049 = vrot.slane %v3047, 4
      %v3051 = vshrl.u32 %v2941, 16
      %v3053 = vrot.slane %v3051, 6
      %v3054 = vshll.u32 %v2941, 16
      %v3056 = vrot.slane %v3054, 7
      %v3057 = vor.u32 %v3053, %v3056
      %v3058 = vsel %vm2970, %v3049, %v3057
      %v3059 = vrot.slane %v3057, 4
      %v3061 = vshrl.u32 %v2942, 16
      %v3063 = vrot.slane %v3061, 6
      %v3064 = vshll.u32 %v2942, 16
      %v3066 = vrot.slane %v3064, 7
      %v3067 = vor.u32 %v3063, %v3066
      %v3068 = vsel %vm2970, %v3059, %v3067
      %v3069 = vrot.slane %v3067, 4
      %v3071 = vshrl.u32 %v2943, 16
      %v3073 = vrot.slane %v3071, 6
      %v3074 = vshll.u32 %v2943, 16
      %v3076 = vrot.slane %v3074, 7
      %v3077 = vor.u32 %v3073, %v3076
      %v3078 = vsel %vm2970, %v3069, %v3077
      %v3079 = vrot.slane %v3077, 4
      %v3081 = vshrl.u32 %v2944, 16
      %v3083 = vrot.slane %v3081, 6
      %v3084 = vshll.u32 %v2944, 16
      %v3086 = vrot.slane %v3084, 7
      %v3087 = vor.u32 %v3083, %v3086
      %v3088 = vsel %vm2970, %v3079, %v3087
      %v3089 = vrot.slane %v3087, 4
      %v3091 = vshrl.u32 %v2945, 16
      %v3093 = vrot.slane %v3091, 6
      %v3094 = vshll.u32 %v2945, 16
      %v3096 = vrot.slane %v3094, 7
      %v3097 = vor.u32 %v3093, %v3096
      %v3098 = vsel %vm2970, %v3089, %v3097
      %v3099 = vrot.slane %v3097, 4
      %v3101 = vshrl.u32 %v2946, 16
      %v3103 = vrot.slane %v3101, 6
      %v3104 = vshll.u32 %v2946, 16
      %v3106 = vrot.slane %v3104, 7
      %v3107 = vor.u32 %v3103, %v3106
      %v3108 = vsel %vm2970, %v3099, %v3107
      %v3109 = vrot.slane %v3107, 4
      %v3111 = vshrl.u32 %v2947, 16
      %v3113 = vrot.slane %v3111, 6
      %v3114 = vshll.u32 %v2947, 16
      %v3116 = vrot.slane %v3114, 7
      %v3117 = vor.u32 %v3113, %v3116
      %v3118 = vsel %vm2970, %v3109, %v3117
      %v3119 = vrot.slane %v3117, 4
      %v3121 = vshrl.u32 %v2948, 16
      %v3123 = vrot.slane %v3121, 6
      %v3124 = vshll.u32 %v2948, 16
      %v3126 = vrot.slane %v3124, 7
      %v3127 = vor.u32 %v3123, %v3126
      %v3128 = vsel %vm2970, %v3119, %v3127
      %v3129 = vrot.slane %v3127, 4
      %v3131 = vshrl.u32 %v2949, 16
      %v3133 = vrot.slane %v3131, 6
      %v3134 = vshll.u32 %v2949, 16
      %v3136 = vrot.slane %v3134, 7
      %v3137 = vor.u32 %v3133, %v3136
      %v3138 = vsel %vm2970, %v3129, %v3137
      %v3139 = vrot.slane %v3137, 4
      %v3141 = vshrl.u32 %v2950, 16
      %v3143 = vrot.slane %v3141, 6
      %v3144 = vshll.u32 %v2950, 16
      %v3146 = vrot.slane %v3144, 7
      %v3147 = vor.u32 %v3143, %v3146
      %v3148 = vsel %vm2970, %v3139, %v3147
      %v3149 = vrot.slane %v3147, 4
      %v3151 = vshrl.u32 %v2951, 16
      %v3153 = vrot.slane %v3151, 6
      %v3154 = vshll.u32 %v2951, 16
      %v3156 = vrot.slane %v3154, 7
      %v3157 = vor.u32 %v3153, %v3156
      %v3158 = vsel %vm2970, %v3149, %v3157
      %v3159 = vrot.slane %v3157, 4
      %v3161 = vshrl.u32 %v2952, 16
      %v3163 = vrot.slane %v3161, 6
      %v3164 = vshll.u32 %v2952, 16
      %v3166 = vrot.slane %v3164, 7
      %v3167 = vor.u32 %v3163, %v3166
      %v3168 = vsel %vm2970, %v3159, %v3167
      %v3169 = vrot.slane %v3167, 4
      %v3171 = vshrl.u32 %v2953, 16
      %v3173 = vrot.slane %v3171, 6
      %v3174 = vshll.u32 %v2953, 16
      %v3176 = vrot.slane %v3174, 7
      %v3177 = vor.u32 %v3173, %v3176
      %v3178 = vsel %vm2970, %v3169, %v3177
      %v3179 = vrot.slane %v3177, 4
      %v3181 = vshrl.u32 %v2954, 16
      %v3183 = vrot.slane %v3181, 6
      %v3184 = vshll.u32 %v2954, 16
      %v3186 = vrot.slane %v3184, 7
      %v3187 = vor.u32 %v3183, %v3186
      %v3188 = vsel %vm2970, %v3179, %v3187
      %v3189 = vrot.slane %v3187, 4
      %v3191 = vshrl.u32 %v2955, 16
      %v3193 = vrot.slane %v3191, 6
      %v3194 = vshll.u32 %v2955, 16
      %v3196 = vrot.slane %v3194, 7
      %v3197 = vor.u32 %v3193, %v3196
      %v3198 = vsel %vm2970, %v3189, %v3197
      %v3199 = vrot.slane %v3197, 4
      %v3201 = vshrl.u32 %v2956, 16
      %v3203 = vrot.slane %v3201, 6
      %v3204 = vshll.u32 %v2956, 16
      %v3206 = vrot.slane %v3204, 7
      %v3207 = vor.u32 %v3203, %v3206
      %v3208 = vsel %vm2970, %v3199, %v3207
      %v3209 = vrot.slane %v3207, 4
      %v3211 = vshrl.u32 %v2957, 16
      %v3213 = vrot.slane %v3211, 6
      %v3214 = vshll.u32 %v2957, 16
      %v3216 = vrot.slane %v3214, 7
      %v3217 = vor.u32 %v3213, %v3216
      %v3218 = vsel %vm2970, %v3209, %v3217
      %v3219 = vrot.slane %v3217, 4
      %v3221 = vshrl.u32 %v2958, 16
      %v3223 = vrot.slane %v3221, 6
      %v3224 = vshll.u32 %v2958, 16
      %v3226 = vrot.slane %v3224, 7
      %v3227 = vor.u32 %v3223, %v3226
      %v3228 = vsel %vm2970, %v3219, %v3227
      %v3229 = vrot.slane %v3227, 4
      %v3231 = vshrl.u32 %v2959, 16
      %v3233 = vrot.slane %v3231, 6
      %v3234 = vshll.u32 %v2959, 16
      %v3236 = vrot.slane %v3234, 7
      %v3237 = vor.u32 %v3233, %v3236
      %v3238 = vsel %vm2970, %v3229, %v3237
      %v3239 = vrot.slane %v3237, 4
      %v3241 = vshrl.u32 %v2960, 16
      %v3243 = vrot.slane %v3241, 6
      %v3244 = vshll.u32 %v2960, 16
      %v3246 = vrot.slane %v3244, 7
      %v3247 = vor.u32 %v3243, %v3246
      %v3248 = vsel %vm2970, %v3239, %v3247
      %v3249 = vrot.slane %v3247, 4
      %v3251 = vshrl.u32 %v2961, 16
      %v3253 = vrot.slane %v3251, 6
      %v3254 = vshll.u32 %v2961, 16
      %v3256 = vrot.slane %v3254, 7
      %v3257 = vor.u32 %v3253, %v3256
      %v3258 = vsel %vm2970, %v3249, %v3257
      %v3259 = vrot.slane %v3257, 4
      %v3261 = vshrl.u32 %v2962, 16
      %v3263 = vrot.slane %v3261, 6
      %v3264 = vshll.u32 %v2962, 16
      %v3266 = vrot.slane %v3264, 7
      %v3267 = vor.u32 %v3263, %v3266
      %v3268 = vsel %vm2970, %v3259, %v3267
      %v3269 = vrot.slane %v3267, 4
      %v3271 = vshrl.u32 %v2963, 16
      %v3273 = vrot.slane %v3271, 6
      %v3274 = vshll.u32 %v2963, 16
      %v3276 = vrot.slane %v3274, 7
      %v3277 = vor.u32 %v3273, %v3276
      %v3278 = vsel %vm2970, %v3269, %v3277
      %v3279 = vrot.slane %v3277, 4
      %v3281 = vshrl.u32 %v2964, 16
      %v3283 = vrot.slane %v3281, 6
      %v3284 = vshll.u32 %v2964, 16
      %v3286 = vrot.slane %v3284, 7
      %v3287 = vor.u32 %v3283, %v3286
      %v3288 = vsel %vm2970, %v3279, %v3287
      %v3289 = vrot.slane %v3287, 4
      %v3291 = vshrl.u32 %v2965, 16
      %v3293 = vrot.slane %v3291, 6
      %v3294 = vshll.u32 %v2965, 16
      %v3296 = vrot.slane %v3294, 7
      %v3297 = vor.u32 %v3293, %v3296
      %v3298 = vsel %vm2970, %v3289, %v3297
      %v3299 = vrot.slane %v3297, 4
      %v3301 = vshrl.u32 %v2966, 16
      %v3303 = vrot.slane %v3301, 6
      %v3304 = vshll.u32 %v2966, 16
      %v3306 = vrot.slane %v3304, 7
      %v3307 = vor.u32 %v3303, %v3306
      %v3308 = vsel %vm2970, %v3299, %v3307
      %v3309 = vrot.slane %v3307, 4
      %v3311 = vshrl.u32 %v2967, 16
      %v3313 = vrot.slane %v3311, 6
      %v3314 = vshll.u32 %v2967, 16
      %v3316 = vrot.slane %v3314, 7
      %v3317 = vor.u32 %v3313, %v3316
      %v3318 = vsel %vm2970, %v3309, %v3317
      %v3319 = vrot.slane %v3317, 4
      %v3321 = vshrl.u32 %v2968, 16
      %v3323 = vrot.slane %v3321, 6
      %v3324 = vshll.u32 %v2968, 16
      %v3326 = vrot.slane %v3324, 7
      %v3327 = vor.u32 %v3323, %v3326
      %v3328 = vsel %vm2970, %v3319, %v3327
      %v3329 = vrot.slane %v3323, 4
      %vm3367 = vcmask 519169
      %vm3368 = vsmask.f32 7942
      %vm3369 = vmand %vm3367, %vm3368
      %v3370 = vld [vmem:[#allocation3 + $0x8] sm:$0xe]
      %v3371 = vsel %vm3369, %v2978, %v3370
      %3372 = vst [vmem:[#allocation3 + $0x8] sm:$0xe] %v3371
      %3373 = vst.msk [vmem:[#allocation3 + $0xc] sm:$0xf] %vm513, %v2988
      %3374 = vst.msk [vmem:[#allocation3 + $0x10] sm:$0xf] %vm513, %v2998
      %3375 = vst.msk [vmem:[#allocation3 + $0x14] sm:$0xf] %vm513, %v3008
      %3376 = vst.msk [vmem:[#allocation3 + $0x18] sm:$0xf] %vm513, %v3018
      %3377 = vst.msk [vmem:[#allocation3 + $0x1c] sm:$0xf] %vm513, %v3028
      %3378 = vst.msk [vmem:[#allocation3 + $0x20] sm:$0xf] %vm513, %v3038
      %3379 = vst.msk [vmem:[#allocation3 + $0x24] sm:$0xf] %vm513, %v3048
      %3380 = vst.msk [vmem:[#allocation3 + $0x28] sm:$0xf] %vm513, %v3058
      %3381 = vst.msk [vmem:[#allocation3 + $0x2c] sm:$0xf] %vm513, %v3068
      %3382 = vst.msk [vmem:[#allocation3 + $0x30] sm:$0xf] %vm513, %v3078
      %3383 = vst.msk [vmem:[#allocation3 + $0x34] sm:$0xf] %vm513, %v3088
      %3384 = vst.msk [vmem:[#allocation3 + $0x38] sm:$0xf] %vm513, %v3098
      %3385 = vst.msk [vmem:[#allocation3 + $0x3c] sm:$0xf] %vm513, %v3108
      %3386 = vst.msk [vmem:[#allocation3 + $0x40] sm:$0xf] %vm513, %v3118
      %3387 = vst.msk [vmem:[#allocation3 + $0x44] sm:$0xf] %vm513, %v3128
      %3388 = vst.msk [vmem:[#allocation3 + $0x48] sm:$0xf] %vm513, %v3138
      %3389 = vst.msk [vmem:[#allocation3 + $0x4c] sm:$0xf] %vm513, %v3148
      %3390 = vst.msk [vmem:[#allocation3 + $0x50] sm:$0xf] %vm513, %v3158
      %3391 = vst.msk [vmem:[#allocation3 + $0x54] sm:$0xf] %vm513, %v3168
      %3392 = vst.msk [vmem:[#allocation3 + $0x58] sm:$0xf] %vm513, %v3178
      %3393 = vst.msk [vmem:[#allocation3 + $0x5c] sm:$0xf] %vm513, %v3188
      %3394 = vst.msk [vmem:[#allocation3 + $0x60] sm:$0xf] %vm513, %v3198
      %3395 = vst.msk [vmem:[#allocation3 + $0x64] sm:$0xf] %vm513, %v3208
      %3396 = vst.msk [vmem:[#allocation3 + $0x68] sm:$0xf] %vm513, %v3218
      %3397 = vst.msk [vmem:[#allocation3 + $0x6c] sm:$0xf] %vm513, %v3228
      %3398 = vst.msk [vmem:[#allocation3 + $0x70] sm:$0xf] %vm513, %v3238
      %3399 = vst.msk [vmem:[#allocation3 + $0x74] sm:$0xf] %vm513, %v3248
      %3400 = vst.msk [vmem:[#allocation3 + $0x78] sm:$0xf] %vm513, %v3258
      %3401 = vst.msk [vmem:[#allocation3 + $0x7c] sm:$0xf] %vm513, %v3268
      %3402 = vst.msk [vmem:[#allocation3 + $0x80] sm:$0xf] %vm513, %v3278
      %3403 = vst.msk [vmem:[#allocation3 + $0x84] sm:$0xf] %vm513, %v3288
      %3404 = vst.msk [vmem:[#allocation3 + $0x88] sm:$0xf] %vm513, %v3298
      %3405 = vst.msk [vmem:[#allocation3 + $0x8c] sm:$0xf] %vm513, %v3308
      %3406 = vst.msk [vmem:[#allocation3 + $0x90] sm:$0xf] %vm513, %v3318
      %3407 = vst.msk [vmem:[#allocation3 + $0x94] sm:$0xf] %vm513, %v3328
      %vm3408 = vcmask 516096
      %vm3409 = vsmask.f32 256
      %vm3410 = vmand %vm3408, %vm3409
      %v3411 = vld [vmem:[#allocation3 + $0x98] sm:$0x1]
      %v3412 = vsel %vm3410, %v3329, %v3411
      %3413 = vst [vmem:[#allocation3 + $0x98] sm:$0x1] %v3412
      %v3414 = vld [vmem:[#allocation3] sm:$0xf]
      %v3415 = vld [vmem:[#allocation3 + $0x4] sm:$0xf]
      %v3416 = vld [vmem:[#allocation3 + $0x8] sm:$0xf]
      %v3417 = vld [vmem:[#allocation3 + $0xc] sm:$0xf]
      %v3418 = vld [vmem:[#allocation3 + $0x10] sm:$0xf]
      %v3419 = vld [vmem:[#allocation3 + $0x14] sm:$0xf]
      %v3420 = vld [vmem:[#allocation3 + $0x18] sm:$0xf]
      %v3421 = vld [vmem:[#allocation3 + $0x1c] sm:$0xf]
      %v3422 = vld [vmem:[#allocation3 + $0x20] sm:$0xf]
      %v3423 = vld [vmem:[#allocation3 + $0x24] sm:$0xf]
      %v3424 = vld [vmem:[#allocation3 + $0x28] sm:$0xf]
      %v3425 = vld [vmem:[#allocation3 + $0x2c] sm:$0xf]
      %v3426 = vld [vmem:[#allocation3 + $0x30] sm:$0xf]
      %v3427 = vld [vmem:[#allocation3 + $0x34] sm:$0xf]
      %v3428 = vld [vmem:[#allocation3 + $0x38] sm:$0xf]
      %v3429 = vld [vmem:[#allocation3 + $0x3c] sm:$0xf]
      %v3430 = vld [vmem:[#allocation3 + $0x40] sm:$0xf]
      %v3431 = vld [vmem:[#allocation3 + $0x44] sm:$0xf]
      %v3432 = vld [vmem:[#allocation3 + $0x48] sm:$0xf]
      %v3433 = vld [vmem:[#allocation3 + $0x4c] sm:$0xf]
      %v3434 = vld [vmem:[#allocation3 + $0x50] sm:$0xf]
      %v3435 = vld [vmem:[#allocation3 + $0x54] sm:$0xf]
      %v3436 = vld [vmem:[#allocation3 + $0x58] sm:$0xf]
      %v3437 = vld [vmem:[#allocation3 + $0x5c] sm:$0xf]
      %v3438 = vld [vmem:[#allocation3 + $0x60] sm:$0xf]
      %v3439 = vld [vmem:[#allocation3 + $0x64] sm:$0xf]
      %v3440 = vld [vmem:[#allocation3 + $0x68] sm:$0xf]
      %v3441 = vld [vmem:[#allocation3 + $0x6c] sm:$0xf]
      %v3442 = vld [vmem:[#allocation3 + $0x70] sm:$0xf]
      %v3443 = vld [vmem:[#allocation3 + $0x74] sm:$0xf]
      %v3444 = vld [vmem:[#allocation3 + $0x78] sm:$0xf]
      %v3445 = vld [vmem:[#allocation3 + $0x7c] sm:$0xf]
      %v3446 = vld [vmem:[#allocation3 + $0x80] sm:$0xf]
      %v3447 = vld [vmem:[#allocation3 + $0x84] sm:$0xf]
      %v3448 = vld [vmem:[#allocation3 + $0x88] sm:$0xf]
      %v3449 = vld [vmem:[#allocation3 + $0x8c] sm:$0x7]
      %v3450 = vld [vmem:[#allocation3 + $0x8c] sm:$0xf]
      %v3451 = vld [vmem:[#allocation3] sm:$0xe]
      %v3452 = vld [vmem:[#allocation3 + $0x8] sm:$0xe]
      %v3453 = vld [vmem:[#allocation3 + $0x90] sm:$0xf]
      %v3454 = vld [vmem:[#allocation3 + $0x94] sm:$0xf]
      %v3491 = vunpack.c.l.b16 %v3414
      %v3492 = vunpack.c.l.b16 %v3415
      %v3493 = vunpack.c.l.b16 %v3416
      %v3494 = vunpack.c.l.b16 %v3417
      %v3495 = vunpack.c.l.b16 %v3418
      %v3496 = vunpack.c.l.b16 %v3419
      %v3497 = vunpack.c.l.b16 %v3420
      %v3498 = vunpack.c.l.b16 %v3421
      %v3499 = vunpack.c.l.b16 %v3422
      %v3500 = vunpack.c.l.b16 %v3423
      %v3501 = vunpack.c.l.b16 %v3424
      %v3502 = vunpack.c.l.b16 %v3425
      %v3503 = vunpack.c.l.b16 %v3426
      %v3504 = vunpack.c.l.b16 %v3427
      %v3505 = vunpack.c.l.b16 %v3428
      %v3506 = vunpack.c.l.b16 %v3429
      %v3507 = vunpack.c.l.b16 %v3430
      %v3508 = vunpack.c.l.b16 %v3431
      %v3509 = vunpack.c.l.b16 %v3432
      %v3510 = vunpack.c.l.b16 %v3433
      %v3511 = vunpack.c.l.b16 %v3434
      %v3512 = vunpack.c.l.b16 %v3435
      %v3513 = vunpack.c.l.b16 %v3436
      %v3514 = vunpack.c.l.b16 %v3437
      %v3515 = vunpack.c.l.b16 %v3438
      %v3516 = vunpack.c.l.b16 %v3439
      %v3517 = vunpack.c.l.b16 %v3440
      %v3518 = vunpack.c.l.b16 %v3441
      %v3519 = vunpack.c.l.b16 %v3442
      %v3520 = vunpack.c.l.b16 %v3443
      %v3521 = vunpack.c.l.b16 %v3444
      %v3522 = vunpack.c.l.b16 %v3445
      %v3523 = vunpack.c.l.b16 %v3446
      %v3524 = vunpack.c.l.b16 %v3447
      %v3525 = vunpack.c.l.b16 %v3448
      %v3526 = vunpack.c.l.b16 %v3449
      %v3527 = vpack.c.b16 %v3492, %v3491
      %v3528 = vpack.c.b16 %v3494, %v3493
      %v3529 = vpack.c.b16 %v3496, %v3495
      %v3530 = vpack.c.b16 %v3498, %v3497
      %v3531 = vpack.c.b16 %v3500, %v3499
      %v3532 = vpack.c.b16 %v3502, %v3501
      %v3533 = vpack.c.b16 %v3504, %v3503
      %v3534 = vpack.c.b16 %v3506, %v3505
      %v3535 = vpack.c.b16 %v3508, %v3507
      %v3536 = vpack.c.b16 %v3510, %v3509
      %v3537 = vpack.c.b16 %v3512, %v3511
      %v3538 = vpack.c.b16 %v3514, %v3513
      %v3539 = vpack.c.b16 %v3516, %v3515
      %v3540 = vpack.c.b16 %v3518, %v3517
      %v3541 = vpack.c.b16 %v3520, %v3519
      %v3542 = vpack.c.b16 %v3522, %v3521
      %v3543 = vpack.c.b16 %v3524, %v3523
      %v3544 = vpack.c.b16 %v3526, %v3525
      %v3546 = vunpack.c.l.b16 %v3450
      %v3547 = vpack.c.b16 %v3546, %v3525
      %v3549 = vshrl.u32 %v3527, 16
      %v3551 = vshll.u32 %v3527, 16
      %v3553 = vrot.slane %v3551, 1
      %v3554 = vor.u32 %v3549, %v3553
      %v3556 = vshll.u32 %v3528, 16
      %v3558 = vrot.slane %v3556, 1
      %v3559 = vsel %vm706, %v3554, %v3558
      %v3560 = vshrl.u32 %v3528, 16
      %v3562 = vor.u32 %v3560, %v3558
      %v3564 = vshll.u32 %v3529, 16
      %v3566 = vrot.slane %v3564, 1
      %v3567 = vsel %vm706, %v3562, %v3566
      %v3568 = vshrl.u32 %v3529, 16
      %v3570 = vor.u32 %v3568, %v3566
      %v3572 = vshll.u32 %v3530, 16
      %v3574 = vrot.slane %v3572, 1
      %v3575 = vsel %vm706, %v3570, %v3574
      %v3576 = vshrl.u32 %v3530, 16
      %v3578 = vor.u32 %v3576, %v3574
      %v3580 = vshll.u32 %v3531, 16
      %v3582 = vrot.slane %v3580, 1
      %v3583 = vsel %vm706, %v3578, %v3582
      %v3584 = vshrl.u32 %v3531, 16
      %v3586 = vor.u32 %v3584, %v3582
      %v3588 = vshll.u32 %v3532, 16
      %v3590 = vrot.slane %v3588, 1
      %v3591 = vsel %vm706, %v3586, %v3590
      %v3592 = vshrl.u32 %v3532, 16
      %v3594 = vor.u32 %v3592, %v3590
      %v3596 = vshll.u32 %v3533, 16
      %v3598 = vrot.slane %v3596, 1
      %v3599 = vsel %vm706, %v3594, %v3598
      %v3600 = vshrl.u32 %v3533, 16
      %v3602 = vor.u32 %v3600, %v3598
      %v3604 = vshll.u32 %v3534, 16
      %v3606 = vrot.slane %v3604, 1
      %v3607 = vsel %vm706, %v3602, %v3606
      %v3608 = vshrl.u32 %v3534, 16
      %v3610 = vor.u32 %v3608, %v3606
      %v3612 = vshll.u32 %v3535, 16
      %v3614 = vrot.slane %v3612, 1
      %v3615 = vsel %vm706, %v3610, %v3614
      %v3616 = vshrl.u32 %v3535, 16
      %v3618 = vor.u32 %v3616, %v3614
      %v3620 = vshll.u32 %v3536, 16
      %v3622 = vrot.slane %v3620, 1
      %v3623 = vsel %vm706, %v3618, %v3622
      %v3624 = vshrl.u32 %v3536, 16
      %v3626 = vor.u32 %v3624, %v3622
      %v3628 = vshll.u32 %v3537, 16
      %v3630 = vrot.slane %v3628, 1
      %v3631 = vsel %vm706, %v3626, %v3630
      %v3632 = vshrl.u32 %v3537, 16
      %v3634 = vor.u32 %v3632, %v3630
      %v3636 = vshll.u32 %v3538, 16
      %v3638 = vrot.slane %v3636, 1
      %v3639 = vsel %vm706, %v3634, %v3638
      %v3640 = vshrl.u32 %v3538, 16
      %v3642 = vor.u32 %v3640, %v3638
      %v3644 = vshll.u32 %v3539, 16
      %v3646 = vrot.slane %v3644, 1
      %v3647 = vsel %vm706, %v3642, %v3646
      %v3648 = vshrl.u32 %v3539, 16
      %v3650 = vor.u32 %v3648, %v3646
      %v3652 = vshll.u32 %v3540, 16
      %v3654 = vrot.slane %v3652, 1
      %v3655 = vsel %vm706, %v3650, %v3654
      %v3656 = vshrl.u32 %v3540, 16
      %v3658 = vor.u32 %v3656, %v3654
      %v3660 = vshll.u32 %v3541, 16
      %v3662 = vrot.slane %v3660, 1
      %v3663 = vsel %vm706, %v3658, %v3662
      %v3664 = vshrl.u32 %v3541, 16
      %v3666 = vor.u32 %v3664, %v3662
      %v3668 = vshll.u32 %v3542, 16
      %v3670 = vrot.slane %v3668, 1
      %v3671 = vsel %vm706, %v3666, %v3670
      %v3672 = vshrl.u32 %v3542, 16
      %v3674 = vor.u32 %v3672, %v3670
      %v3676 = vshll.u32 %v3543, 16
      %v3678 = vrot.slane %v3676, 1
      %v3679 = vsel %vm706, %v3674, %v3678
      %v3680 = vshrl.u32 %v3543, 16
      %v3682 = vor.u32 %v3680, %v3678
      %v3684 = vshll.u32 %v3547, 16
      %v3686 = vrot.slane %v3684, 1
      %v3687 = vsel %vm706, %v3682, %v3686
      %v3688 = vshrl.u32 %v3547, 16
      %v3690 = vor.u32 %v3688, %v3686
      %3691 = vrot.lane.b32.xlu0 %v3559, 64
      %v3692 = vpop.permute.xlu0 %3691
      %3693 = vrot.lane.b32.xlu0 %v3567, 64
      %v3694 = vpop.permute.xlu0 %3693
      %3695 = vrot.lane.b32.xlu0 %v3575, 64
      %v3696 = vpop.permute.xlu0 %3695
      %3697 = vrot.lane.b32.xlu0 %v3583, 64
      %v3698 = vpop.permute.xlu0 %3697
      %3699 = vrot.lane.b32.xlu0 %v3591, 64
      %v3700 = vpop.permute.xlu0 %3699
      %3701 = vrot.lane.b32.xlu0 %v3599, 64
      %v3702 = vpop.permute.xlu0 %3701
      %3703 = vrot.lane.b32.xlu0 %v3607, 64
      %v3704 = vpop.permute.xlu0 %3703
      %3705 = vrot.lane.b32.xlu0 %v3615, 64
      %v3706 = vpop.permute.xlu0 %3705
      %3707 = vrot.lane.b32.xlu0 %v3623, 64
      %v3708 = vpop.permute.xlu0 %3707
      %3709 = vrot.lane.b32.xlu0 %v3631, 64
      %v3710 = vpop.permute.xlu0 %3709
      %3711 = vrot.lane.b32.xlu0 %v3639, 64
      %v3712 = vpop.permute.xlu0 %3711
      %3713 = vrot.lane.b32.xlu0 %v3647, 64
      %v3714 = vpop.permute.xlu0 %3713
      %3715 = vrot.lane.b32.xlu0 %v3655, 64
      %v3716 = vpop.permute.xlu0 %3715
      %3717 = vrot.lane.b32.xlu0 %v3663, 64
      %v3718 = vpop.permute.xlu0 %3717
      %3719 = vrot.lane.b32.xlu0 %v3671, 64
      %v3720 = vpop.permute.xlu0 %3719
      %3721 = vrot.lane.b32.xlu0 %v3679, 64
      %v3722 = vpop.permute.xlu0 %3721
      %3723 = vrot.lane.b32.xlu0 %v3687, 64
      %v3724 = vpop.permute.xlu0 %3723
      %3725 = vrot.lane.b32.xlu0 %v3690, 64
      %v3726 = vpop.permute.xlu0 %3725
      %v3728 = vunpack.c.l.b16 %v3451
      %v3729 = vpack.c.b16 %v3492, %v3728
      %v3730 = vrot.slane %v3729, 1
      %v3731 = vrot.slane %v3528, 1
      %v3732 = vsel %vm889, %v3730, %v3731
      %v3733 = vrot.slane %v3529, 1
      %v3734 = vsel %vm889, %v3731, %v3733
      %v3735 = vrot.slane %v3530, 1
      %v3736 = vsel %vm889, %v3733, %v3735
      %v3737 = vrot.slane %v3531, 1
      %v3738 = vsel %vm889, %v3735, %v3737
      %v3739 = vrot.slane %v3532, 1
      %v3740 = vsel %vm889, %v3737, %v3739
      %v3741 = vrot.slane %v3533, 1
      %v3742 = vsel %vm889, %v3739, %v3741
      %v3743 = vrot.slane %v3534, 1
      %v3744 = vsel %vm889, %v3741, %v3743
      %v3745 = vrot.slane %v3535, 1
      %v3746 = vsel %vm889, %v3743, %v3745
      %v3747 = vrot.slane %v3536, 1
      %v3748 = vsel %vm889, %v3745, %v3747
      %v3749 = vrot.slane %v3537, 1
      %v3750 = vsel %vm889, %v3747, %v3749
      %v3751 = vrot.slane %v3538, 1
      %v3752 = vsel %vm889, %v3749, %v3751
      %v3753 = vrot.slane %v3539, 1
      %v3754 = vsel %vm889, %v3751, %v3753
      %v3755 = vrot.slane %v3540, 1
      %v3756 = vsel %vm889, %v3753, %v3755
      %v3757 = vrot.slane %v3541, 1
      %v3758 = vsel %vm889, %v3755, %v3757
      %v3759 = vrot.slane %v3542, 1
      %v3760 = vsel %vm889, %v3757, %v3759
      %v3761 = vrot.slane %v3543, 1
      %v3762 = vsel %vm889, %v3759, %v3761
      %v3763 = vrot.slane %v3547, 1
      %v3764 = vsel %vm889, %v3761, %v3763
      %v3768 = vunpack.c.l.b16 %v3452
      %v3769 = vunpack.c.l.b16 %v3453
      %v3770 = vunpack.c.l.b16 %v3454
      %v3771 = vpack.c.b16 %v3494, %v3768
      %v3772 = vpack.c.b16 %v3770, %v3769
      %v3773 = vrot.slane %v3771, 1
      %v3774 = vsel %vm889, %v3773, %v3733
      %v3775 = vrot.slane %v3772, 1
      %v3776 = vsel %vm889, %v3763, %v3775
      %3777 = vrot.lane.b32.xlu0 %v3774, 64
      %v3778 = vpop.permute.xlu0 %3777
      %3779 = vrot.lane.b32.xlu0 %v3736, 64
      %v3780 = vpop.permute.xlu0 %3779
      %3781 = vrot.lane.b32.xlu0 %v3738, 64
      %v3782 = vpop.permute.xlu0 %3781
      %3783 = vrot.lane.b32.xlu0 %v3740, 64
      %v3784 = vpop.permute.xlu0 %3783
      %3785 = vrot.lane.b32.xlu0 %v3742, 64
      %v3786 = vpop.permute.xlu0 %3785
      %3787 = vrot.lane.b32.xlu0 %v3744, 64
      %v3788 = vpop.permute.xlu0 %3787
      %3789 = vrot.lane.b32.xlu0 %v3746, 64
      %v3790 = vpop.permute.xlu0 %3789
      %3791 = vrot.lane.b32.xlu0 %v3748, 64
      %v3792 = vpop.permute.xlu0 %3791
      %3793 = vrot.lane.b32.xlu0 %v3750, 64
      %v3794 = vpop.permute.xlu0 %3793
      %3795 = vrot.lane.b32.xlu0 %v3752, 64
      %v3796 = vpop.permute.xlu0 %3795
      %3797 = vrot.lane.b32.xlu0 %v3754, 64
      %v3798 = vpop.permute.xlu0 %3797
      %3799 = vrot.lane.b32.xlu0 %v3756, 64
      %v3800 = vpop.permute.xlu0 %3799
      %3801 = vrot.lane.b32.xlu0 %v3758, 64
      %v3802 = vpop.permute.xlu0 %3801
      %3803 = vrot.lane.b32.xlu0 %v3760, 64
      %v3804 = vpop.permute.xlu0 %3803
      %3805 = vrot.lane.b32.xlu0 %v3762, 64
      %v3806 = vpop.permute.xlu0 %3805
      %3807 = vrot.lane.b32.xlu0 %v3764, 64
      %v3808 = vpop.permute.xlu0 %3807
      %3809 = vrot.lane.b32.xlu0 %v3776, 64
      %v3810 = vpop.permute.xlu0 %3809
      %3811 = vrot.lane.b32.xlu0 %v3775, 64
      %v3812 = vpop.permute.xlu0 %3811
      %v3814 = vsel %vm973, %v3527, %v3692
      %v3817 = vsel %vm973, %v3528, %v3694
      %v3820 = vsel %vm973, %v3529, %v3696
      %v3823 = vsel %vm973, %v3530, %v3698
      %v3826 = vsel %vm973, %v3531, %v3700
      %v3829 = vsel %vm973, %v3532, %v3702
      %v3832 = vsel %vm973, %v3533, %v3704
      %v3835 = vsel %vm973, %v3534, %v3706
      %v3838 = vsel %vm973, %v3535, %v3708
      %v3841 = vsel %vm973, %v3536, %v3710
      %v3844 = vsel %vm973, %v3537, %v3712
      %v3847 = vsel %vm973, %v3538, %v3714
      %v3850 = vsel %vm973, %v3539, %v3716
      %v3853 = vsel %vm973, %v3540, %v3718
      %v3856 = vsel %vm973, %v3541, %v3720
      %v3859 = vsel %vm973, %v3542, %v3722
      %v3862 = vsel %vm973, %v3543, %v3724
      %v3866 = vsel %vm973, %v3544, %v3726
      %v3870 = vsel %vm973, %v3732, %v3778
      %v3874 = vsel %vm973, %v3734, %v3780
      %v3878 = vsel %vm973, %v3736, %v3782
      %v3882 = vsel %vm973, %v3738, %v3784
      %v3886 = vsel %vm973, %v3740, %v3786
      %v3890 = vsel %vm973, %v3742, %v3788
      %v3894 = vsel %vm973, %v3744, %v3790
      %v3898 = vsel %vm973, %v3746, %v3792
      %v3902 = vsel %vm973, %v3748, %v3794
      %v3906 = vsel %vm973, %v3750, %v3796
      %v3910 = vsel %vm973, %v3752, %v3798
      %v3914 = vsel %vm973, %v3754, %v3800
      %v3918 = vsel %vm973, %v3756, %v3802
      %v3922 = vsel %vm973, %v3758, %v3804
      %v3926 = vsel %vm973, %v3760, %v3806
      %v3930 = vsel %vm973, %v3762, %v3808
      %v3934 = vsel %vm973, %v3764, %v3810
      %v3938 = vsel %vm973, %v3763, %v3812
      %v3940 = vld [vmem:[%s5] sm:$0xf]
      %v3941 = vld [vmem:[%s5 + $0x4] sm:$0xf]
      %v3942 = vld [vmem:[%s5 + $0x8] sm:$0xf]
      %v3943 = vld [vmem:[%s5 + $0xc] sm:$0xf]
      %v3944 = vld [vmem:[%s5 + $0x10] sm:$0xf]
      %v3945 = vld [vmem:[%s5 + $0x14] sm:$0xf]
      %v3946 = vld [vmem:[%s5 + $0x18] sm:$0xf]
      %v3947 = vld [vmem:[%s5 + $0x1c] sm:$0xf]
      %v3948 = vld [vmem:[%s5 + $0x20] sm:$0xf]
      %v3949 = vld [vmem:[%s5 + $0x24] sm:$0xf]
      %v3950 = vld [vmem:[%s5 + $0x28] sm:$0xf]
      %v3951 = vld [vmem:[%s5 + $0x2c] sm:$0xf]
      %v3952 = vld [vmem:[%s5 + $0x30] sm:$0xf]
      %v3953 = vld [vmem:[%s5 + $0x34] sm:$0xf]
      %v3954 = vld [vmem:[%s5 + $0x38] sm:$0xf]
      %v3955 = vld [vmem:[%s5 + $0x3c] sm:$0xf]
      %v3956 = vld [vmem:[%s5 + $0x40] sm:$0xf]
      %v3957 = vld [vmem:[%s5 + $0x44] sm:$0xf]
      %v3958 = vld [vmem:[%s5 + $0x48] sm:$0xf]
      %v3959 = vld [vmem:[%s5 + $0x4c] sm:$0xf]
      %v3960 = vld [vmem:[%s5 + $0x50] sm:$0xf]
      %v3961 = vld [vmem:[%s5 + $0x54] sm:$0xf]
      %v3962 = vld [vmem:[%s5 + $0x58] sm:$0xf]
      %v3963 = vld [vmem:[%s5 + $0x5c] sm:$0xf]
      %v3964 = vld [vmem:[%s5 + $0x60] sm:$0xf]
      %v3965 = vld [vmem:[%s5 + $0x64] sm:$0xf]
      %v3966 = vld [vmem:[%s5 + $0x68] sm:$0xf]
      %v3967 = vld [vmem:[%s5 + $0x6c] sm:$0xf]
      %v3968 = vld [vmem:[%s5 + $0x70] sm:$0xf]
      %v3969 = vld [vmem:[%s5 + $0x74] sm:$0xf]
      %v3970 = vld [vmem:[%s5 + $0x78] sm:$0xf]
      %v3971 = vld [vmem:[%s5 + $0x7c] sm:$0xf]
      %v3972 = vld [vmem:[#allocation3 + $0x98] sm:$0x1]
      %v3973 = vld [vmem:[#allocation3 + $0x8] sm:$0xc]
      %v3974 = vld [vmem:[#allocation3 + $0x10] sm:$0xc]
      %v3975 = vld [vmem:[#allocation3 + $0x98] sm:$0xf]
      %v3976 = vld [vmem:[#allocation3 + $0x9c] sm:$0xf]
      %v3977 = vld [vmem:[#allocation3 + $0xa0] sm:$0x1]
      %v3978 = vld [vmem:[#allocation3 + $0xa0] sm:$0x3]
      %v3980 = vunpack.c.l.b16 %v3972
      %v3981 = vpack.c.b16 %v3980, %v3980
      %v3983 = vunpack.c.l.b16 %v3973
      %v3984 = vpack.c.b16 %v3494, %v3983
      %v3986 = vshrl.u32 %v3984, 16
      %v3988 = vshll.u32 %v3984, 16
      %v3990 = vrot.slane %v3988, 1
      %v3991 = vor.u32 %v3986, %v3990
      %v3992 = vsel %vm706, %v3991, %v3566
      %v3994 = vshll.u32 %v3772, 16
      %v3996 = vrot.slane %v3994, 1
      %v3997 = vsel %vm706, %v3690, %v3996
      %v3998 = vshrl.u32 %v3772, 16
      %v4000 = vor.u32 %v3998, %v3996
      %v4002 = vshll.u32 %v3981, 16
      %v4004 = vrot.slane %v4002, 1
      %v4005 = vsel %vm706, %v4000, %v4004
      %v4006 = vshrl.u32 %v3981, 16
      %4008 = vrot.lane.b32.xlu0 %v3992, 64
      %v4009 = vpop.permute.xlu0 %4008
      %4010 = vrot.lane.b32.xlu0 %v3997, 64
      %v4011 = vpop.permute.xlu0 %4010
      %4012 = vrot.lane.b32.xlu0 %v4005, 64
      %v4013 = vpop.permute.xlu0 %4012
      %4014 = vrot.lane.b32.xlu0 %v4006, 64
      %v4015 = vpop.permute.xlu0 %4014
      %v4020 = vunpack.c.l.b16 %v3974
      %v4021 = vunpack.c.l.b16 %v3975
      %v4022 = vunpack.c.l.b16 %v3976
      %v4023 = vunpack.c.l.b16 %v3977
      %v4024 = vpack.c.b16 %v3496, %v4020
      %v4025 = vpack.c.b16 %v4022, %v4021
      %v4026 = vpack.c.b16 %v4023, %v4023
      %v4028 = vshrl.u32 %v4024, 16
      %v4030 = vshll.u32 %v4024, 16
      %v4032 = vrot.slane %v4030, 1
      %v4033 = vor.u32 %v4028, %v4032
      %v4034 = vsel %vm706, %v4033, %v3574
      %v4036 = vshll.u32 %v4025, 16
      %v4038 = vrot.slane %v4036, 1
      %v4039 = vsel %vm706, %v4000, %v4038
      %v4040 = vshrl.u32 %v4025, 16
      %v4042 = vor.u32 %v4040, %v4038
      %v4044 = vshll.u32 %v4026, 16
      %v4046 = vrot.slane %v4044, 1
      %v4047 = vsel %vm706, %v4042, %v4046
      %v4048 = vshrl.u32 %v4026, 16
      %v4051 = vunpack.c.l.b16 %v3978
      %v4052 = vpack.c.b16 %v4051, %v4051
      %v4053 = vrot.slane %v4024, 1
      %v4054 = vsel %vm889, %v4053, %v3735
      %v4055 = vrot.slane %v4025, 1
      %v4056 = vsel %vm889, %v3775, %v4055
      %v4057 = vrot.slane %v4052, 1
      %v4058 = vsel %vm889, %v4055, %v4057
      %4059 = vrot.lane.b32.xlu0 %v4054, 64
      %v4060 = vpop.permute.xlu0 %4059
      %4061 = vrot.lane.b32.xlu0 %v4056, 64
      %v4062 = vpop.permute.xlu0 %4061
      %4063 = vrot.lane.b32.xlu0 %v4058, 64
      %v4064 = vpop.permute.xlu0 %4063
      %4065 = vrot.lane.b32.xlu0 %v4057, 64
      %v4066 = vpop.permute.xlu0 %4065
      %v4069 = vsel %vm973, %v3771, %v4009
      %v4071 = vsel %vm973, %v3547, %v4011
      %v4073 = vsel %vm973, %v3772, %v4013
      %v4075 = vsel %vm973, %v3981, %v4015
      %v4078 = vsel %vm973, %v4034, %v4060
      %v4080 = vsel %vm973, %v3583, %v3782
      %v4082 = vsel %vm973, %v3591, %v3784
      %v4084 = vsel %vm973, %v3599, %v3786
      %v4086 = vsel %vm973, %v3607, %v3788
      %v4088 = vsel %vm973, %v3615, %v3790
      %v4090 = vsel %vm973, %v3623, %v3792
      %v4092 = vsel %vm973, %v3631, %v3794
      %v4094 = vsel %vm973, %v3639, %v3796
      %v4096 = vsel %vm973, %v3647, %v3798
      %v4098 = vsel %vm973, %v3655, %v3800
      %v4100 = vsel %vm973, %v3663, %v3802
      %v4102 = vsel %vm973, %v3671, %v3804
      %v4104 = vsel %vm973, %v3679, %v3806
      %v4106 = vsel %vm973, %v3687, %v3808
      %v4108 = vsel %vm973, %v3997, %v3810
      %v4111 = vsel %vm973, %v4039, %v4062
      %v4114 = vsel %vm973, %v4047, %v4064
      %v4117 = vsel %vm973, %v4048, %v4066
      %s4118 = scalar_lea.vmem %s5, 128
      %v4119 = vld [vmem:[%s4118] sm:$0xf]
      %v4120 = vld [vmem:[%s4118 + $0x4] sm:$0xf]
      %v4121 = vld [vmem:[%s4118 + $0x8] sm:$0xf]
      %v4122 = vld [vmem:[%s4118 + $0xc] sm:$0xf]
      %v4123 = vld [vmem:[%s4118 + $0x10] sm:$0xf]
      %v4124 = vld [vmem:[%s4118 + $0x14] sm:$0xf]
      %v4125 = vld [vmem:[%s4118 + $0x18] sm:$0xf]
      %v4126 = vld [vmem:[%s4118 + $0x1c] sm:$0xf]
      %v4127 = vld [vmem:[%s4118 + $0x20] sm:$0xf]
      %v4128 = vld [vmem:[%s4118 + $0x24] sm:$0xf]
      %v4129 = vld [vmem:[%s4118 + $0x28] sm:$0xf]
      %v4130 = vld [vmem:[%s4118 + $0x2c] sm:$0xf]
      %v4131 = vld [vmem:[%s4118 + $0x30] sm:$0xf]
      %v4132 = vld [vmem:[%s4118 + $0x34] sm:$0xf]
      %v4133 = vld [vmem:[%s4118 + $0x38] sm:$0xf]
      %v4134 = vld [vmem:[%s4118 + $0x3c] sm:$0xf]
      %v4135 = vld [vmem:[%s4118 + $0x40] sm:$0xf]
      %v4136 = vld [vmem:[%s4118 + $0x44] sm:$0xf]
      %v4137 = vld [vmem:[%s4118 + $0x48] sm:$0xf]
      %v4138 = vld [vmem:[%s4118 + $0x4c] sm:$0xf]
      %v4139 = vld [vmem:[%s4118 + $0x50] sm:$0xf]
      %v4140 = vld [vmem:[%s4118 + $0x54] sm:$0xf]
      %v4141 = vld [vmem:[%s4118 + $0x58] sm:$0xf]
      %v4142 = vld [vmem:[%s4118 + $0x5c] sm:$0xf]
      %v4143 = vld [vmem:[%s4118 + $0x60] sm:$0xf]
      %v4144 = vld [vmem:[%s4118 + $0x64] sm:$0xf]
      %v4145 = vld [vmem:[%s4118 + $0x68] sm:$0xf]
      %v4146 = vld [vmem:[%s4118 + $0x6c] sm:$0xf]
      %v4147 = vld [vmem:[%s4118 + $0x70] sm:$0xf]
      %v4148 = vld [vmem:[%s4118 + $0x74] sm:$0xf]
      %v4149 = vld [vmem:[%s4118 + $0x78] sm:$0xf]
      %v4150 = vld [vmem:[%s4118 + $0x7c] sm:$0xf]
      %v4151 = vshrl.u32 %v4069, 16
      %v4153 = vrot.slane %v4151, 1
      %v4154 = vshll.u32 %v4069, 16
      %v4156 = vrot.slane %v4154, 2
      %v4157 = vor.u32 %v4153, %v4156
      %v4158 = vshrl.u32 %v3820, 16
      %v4160 = vrot.slane %v4158, 1
      %v4161 = vshll.u32 %v3820, 16
      %v4163 = vrot.slane %v4161, 2
      %v4164 = vor.u32 %v4160, %v4163
      %v4165 = vsel %vm1312, %v4157, %v4164
      %v4166 = vshrl.u32 %v4078, 16
      %v4168 = vrot.slane %v4166, 1
      %v4169 = vshll.u32 %v4078, 16
      %v4171 = vrot.slane %v4169, 2
      %v4172 = vor.u32 %v4168, %v4171
      %v4173 = vshrl.u32 %v4080, 16
      %v4175 = vrot.slane %v4173, 1
      %v4176 = vshll.u32 %v4080, 16
      %v4178 = vrot.slane %v4176, 2
      %v4179 = vor.u32 %v4175, %v4178
      %v4180 = vsel %vm1312, %v4172, %v4179
      %v4181 = vshrl.u32 %v3823, 16
      %v4183 = vrot.slane %v4181, 1
      %v4184 = vshll.u32 %v3823, 16
      %v4186 = vrot.slane %v4184, 2
      %v4187 = vor.u32 %v4183, %v4186
      %v4188 = vsel %vm1312, %v4164, %v4187
      %v4189 = vshrl.u32 %v4082, 16
      %v4191 = vrot.slane %v4189, 1
      %v4192 = vshll.u32 %v4082, 16
      %v4194 = vrot.slane %v4192, 2
      %v4195 = vor.u32 %v4191, %v4194
      %v4196 = vsel %vm1312, %v4179, %v4195
      %v4197 = vshrl.u32 %v3826, 16
      %v4199 = vrot.slane %v4197, 1
      %v4200 = vshll.u32 %v3826, 16
      %v4202 = vrot.slane %v4200, 2
      %v4203 = vor.u32 %v4199, %v4202
      %v4204 = vsel %vm1312, %v4187, %v4203
      %v4205 = vshrl.u32 %v4084, 16
      %v4207 = vrot.slane %v4205, 1
      %v4208 = vshll.u32 %v4084, 16
      %v4210 = vrot.slane %v4208, 2
      %v4211 = vor.u32 %v4207, %v4210
      %v4212 = vsel %vm1312, %v4195, %v4211
      %v4213 = vshrl.u32 %v3829, 16
      %v4215 = vrot.slane %v4213, 1
      %v4216 = vshll.u32 %v3829, 16
      %v4218 = vrot.slane %v4216, 2
      %v4219 = vor.u32 %v4215, %v4218
      %v4220 = vsel %vm1312, %v4203, %v4219
      %v4221 = vshrl.u32 %v4086, 16
      %v4223 = vrot.slane %v4221, 1
      %v4224 = vshll.u32 %v4086, 16
      %v4226 = vrot.slane %v4224, 2
      %v4227 = vor.u32 %v4223, %v4226
      %v4228 = vsel %vm1312, %v4211, %v4227
      %v4229 = vshrl.u32 %v3832, 16
      %v4231 = vrot.slane %v4229, 1
      %v4232 = vshll.u32 %v3832, 16
      %v4234 = vrot.slane %v4232, 2
      %v4235 = vor.u32 %v4231, %v4234
      %v4236 = vsel %vm1312, %v4219, %v4235
      %v4237 = vshrl.u32 %v4088, 16
      %v4239 = vrot.slane %v4237, 1
      %v4240 = vshll.u32 %v4088, 16
      %v4242 = vrot.slane %v4240, 2
      %v4243 = vor.u32 %v4239, %v4242
      %v4244 = vsel %vm1312, %v4227, %v4243
      %v4245 = vshrl.u32 %v3835, 16
      %v4247 = vrot.slane %v4245, 1
      %v4248 = vshll.u32 %v3835, 16
      %v4250 = vrot.slane %v4248, 2
      %v4251 = vor.u32 %v4247, %v4250
      %v4252 = vsel %vm1312, %v4235, %v4251
      %v4253 = vshrl.u32 %v4090, 16
      %v4255 = vrot.slane %v4253, 1
      %v4256 = vshll.u32 %v4090, 16
      %v4258 = vrot.slane %v4256, 2
      %v4259 = vor.u32 %v4255, %v4258
      %v4260 = vsel %vm1312, %v4243, %v4259
      %v4261 = vshrl.u32 %v3838, 16
      %v4263 = vrot.slane %v4261, 1
      %v4264 = vshll.u32 %v3838, 16
      %v4266 = vrot.slane %v4264, 2
      %v4267 = vor.u32 %v4263, %v4266
      %v4268 = vsel %vm1312, %v4251, %v4267
      %v4269 = vshrl.u32 %v4092, 16
      %v4271 = vrot.slane %v4269, 1
      %v4272 = vshll.u32 %v4092, 16
      %v4274 = vrot.slane %v4272, 2
      %v4275 = vor.u32 %v4271, %v4274
      %v4276 = vsel %vm1312, %v4259, %v4275
      %v4277 = vshrl.u32 %v3841, 16
      %v4279 = vrot.slane %v4277, 1
      %v4280 = vshll.u32 %v3841, 16
      %v4282 = vrot.slane %v4280, 2
      %v4283 = vor.u32 %v4279, %v4282
      %v4284 = vsel %vm1312, %v4267, %v4283
      %v4285 = vshrl.u32 %v4094, 16
      %v4287 = vrot.slane %v4285, 1
      %v4288 = vshll.u32 %v4094, 16
      %v4290 = vrot.slane %v4288, 2
      %v4291 = vor.u32 %v4287, %v4290
      %v4292 = vsel %vm1312, %v4275, %v4291
      %v4293 = vshrl.u32 %v3844, 16
      %v4295 = vrot.slane %v4293, 1
      %v4296 = vshll.u32 %v3844, 16
      %v4298 = vrot.slane %v4296, 2
      %v4299 = vor.u32 %v4295, %v4298
      %v4300 = vsel %vm1312, %v4283, %v4299
      %v4301 = vshrl.u32 %v4096, 16
      %v4303 = vrot.slane %v4301, 1
      %v4304 = vshll.u32 %v4096, 16
      %v4306 = vrot.slane %v4304, 2
      %v4307 = vor.u32 %v4303, %v4306
      %v4308 = vsel %vm1312, %v4291, %v4307
      %v4309 = vshrl.u32 %v3847, 16
      %v4311 = vrot.slane %v4309, 1
      %v4312 = vshll.u32 %v3847, 16
      %v4314 = vrot.slane %v4312, 2
      %v4315 = vor.u32 %v4311, %v4314
      %v4316 = vsel %vm1312, %v4299, %v4315
      %v4317 = vshrl.u32 %v4098, 16
      %v4319 = vrot.slane %v4317, 1
      %v4320 = vshll.u32 %v4098, 16
      %v4322 = vrot.slane %v4320, 2
      %v4323 = vor.u32 %v4319, %v4322
      %v4324 = vsel %vm1312, %v4307, %v4323
      %v4325 = vshrl.u32 %v3850, 16
      %v4327 = vrot.slane %v4325, 1
      %v4328 = vshll.u32 %v3850, 16
      %v4330 = vrot.slane %v4328, 2
      %v4331 = vor.u32 %v4327, %v4330
      %v4332 = vsel %vm1312, %v4315, %v4331
      %v4333 = vshrl.u32 %v4100, 16
      %v4335 = vrot.slane %v4333, 1
      %v4336 = vshll.u32 %v4100, 16
      %v4338 = vrot.slane %v4336, 2
      %v4339 = vor.u32 %v4335, %v4338
      %v4340 = vsel %vm1312, %v4323, %v4339
      %v4341 = vshrl.u32 %v3853, 16
      %v4343 = vrot.slane %v4341, 1
      %v4344 = vshll.u32 %v3853, 16
      %v4346 = vrot.slane %v4344, 2
      %v4347 = vor.u32 %v4343, %v4346
      %v4348 = vsel %vm1312, %v4331, %v4347
      %v4349 = vshrl.u32 %v4102, 16
      %v4351 = vrot.slane %v4349, 1
      %v4352 = vshll.u32 %v4102, 16
      %v4354 = vrot.slane %v4352, 2
      %v4355 = vor.u32 %v4351, %v4354
      %v4356 = vsel %vm1312, %v4339, %v4355
      %v4357 = vshrl.u32 %v3856, 16
      %v4359 = vrot.slane %v4357, 1
      %v4360 = vshll.u32 %v3856, 16
      %v4362 = vrot.slane %v4360, 2
      %v4363 = vor.u32 %v4359, %v4362
      %v4364 = vsel %vm1312, %v4347, %v4363
      %v4365 = vshrl.u32 %v4104, 16
      %v4367 = vrot.slane %v4365, 1
      %v4368 = vshll.u32 %v4104, 16
      %v4370 = vrot.slane %v4368, 2
      %v4371 = vor.u32 %v4367, %v4370
      %v4372 = vsel %vm1312, %v4355, %v4371
      %v4373 = vshrl.u32 %v3859, 16
      %v4375 = vrot.slane %v4373, 1
      %v4376 = vshll.u32 %v3859, 16
      %v4378 = vrot.slane %v4376, 2
      %v4379 = vor.u32 %v4375, %v4378
      %v4380 = vsel %vm1312, %v4363, %v4379
      %v4381 = vshrl.u32 %v4106, 16
      %v4383 = vrot.slane %v4381, 1
      %v4384 = vshll.u32 %v4106, 16
      %v4386 = vrot.slane %v4384, 2
      %v4387 = vor.u32 %v4383, %v4386
      %v4388 = vsel %vm1312, %v4371, %v4387
      %v4389 = vshrl.u32 %v3862, 16
      %v4391 = vrot.slane %v4389, 1
      %v4392 = vshll.u32 %v3862, 16
      %v4394 = vrot.slane %v4392, 2
      %v4395 = vor.u32 %v4391, %v4394
      %v4396 = vsel %vm1312, %v4379, %v4395
      %v4397 = vshrl.u32 %v4108, 16
      %v4399 = vrot.slane %v4397, 1
      %v4400 = vshll.u32 %v4108, 16
      %v4402 = vrot.slane %v4400, 2
      %v4403 = vor.u32 %v4399, %v4402
      %v4404 = vsel %vm1312, %v4387, %v4403
      %v4405 = vshrl.u32 %v4071, 16
      %v4407 = vrot.slane %v4405, 1
      %v4408 = vshll.u32 %v4071, 16
      %v4410 = vrot.slane %v4408, 2
      %v4411 = vor.u32 %v4407, %v4410
      %v4412 = vsel %vm1312, %v4395, %v4411
      %v4413 = vshrl.u32 %v4111, 16
      %v4415 = vrot.slane %v4413, 1
      %v4416 = vshll.u32 %v4111, 16
      %v4418 = vrot.slane %v4416, 2
      %v4419 = vor.u32 %v4415, %v4418
      %v4420 = vsel %vm1312, %v4403, %v4419
      %v4421 = vshrl.u32 %v4073, 16
      %v4423 = vrot.slane %v4421, 1
      %v4424 = vshll.u32 %v4073, 16
      %v4426 = vrot.slane %v4424, 2
      %v4427 = vor.u32 %v4423, %v4426
      %v4428 = vsel %vm1312, %v4411, %v4427
      %v4429 = vshrl.u32 %v4114, 16
      %v4431 = vrot.slane %v4429, 1
      %v4432 = vshll.u32 %v4114, 16
      %v4434 = vrot.slane %v4432, 2
      %v4435 = vor.u32 %v4431, %v4434
      %v4436 = vsel %vm1312, %v4419, %v4435
      %v4437 = vshll.u32 %v4075, 16
      %v4439 = vrot.slane %v4437, 2
      %v4440 = vsel %vm1312, %v4427, %v4439
      %v4441 = vshll.u32 %v4117, 16
      %v4443 = vrot.slane %v4441, 2
      %v4444 = vsel %vm1312, %v4435, %v4443
      %v4513 = vunpack.c.l.b16 %v4119
      %v4514 = vunpack.c.l.b16 %v4120
      %v4515 = vunpack.c.l.b16 %v4121
      %v4516 = vunpack.c.l.b16 %v4122
      %v4517 = vunpack.c.l.b16 %v4123
      %v4518 = vunpack.c.l.b16 %v4124
      %v4519 = vunpack.c.l.b16 %v4125
      %v4520 = vunpack.c.l.b16 %v4126
      %v4521 = vunpack.c.l.b16 %v4127
      %v4522 = vunpack.c.l.b16 %v4128
      %v4523 = vunpack.c.l.b16 %v4129
      %v4524 = vunpack.c.l.b16 %v4130
      %v4525 = vunpack.c.l.b16 %v4131
      %v4526 = vunpack.c.l.b16 %v4132
      %v4527 = vunpack.c.l.b16 %v4133
      %v4528 = vunpack.c.l.b16 %v4134
      %v4529 = vunpack.c.l.b16 %v4135
      %v4530 = vunpack.c.l.b16 %v4136
      %v4531 = vunpack.c.l.b16 %v4137
      %v4532 = vunpack.c.l.b16 %v4138
      %v4533 = vunpack.c.l.b16 %v4139
      %v4534 = vunpack.c.l.b16 %v4140
      %v4535 = vunpack.c.l.b16 %v4141
      %v4536 = vunpack.c.l.b16 %v4142
      %v4537 = vunpack.c.l.b16 %v4143
      %v4538 = vunpack.c.l.b16 %v4144
      %v4539 = vunpack.c.l.b16 %v4145
      %v4540 = vunpack.c.l.b16 %v4146
      %v4541 = vunpack.c.l.b16 %v4147
      %v4542 = vunpack.c.l.b16 %v4148
      %v4543 = vunpack.c.l.b16 %v4149
      %v4544 = vunpack.c.l.b16 %v4150
      %v4545 = vpack.c.b16 %v4514, %v4513
      %v4546 = vpack.c.b16 %v4516, %v4515
      %v4547 = vpack.c.b16 %v4518, %v4517
      %v4548 = vpack.c.b16 %v4520, %v4519
      %v4549 = vpack.c.b16 %v4522, %v4521
      %v4550 = vpack.c.b16 %v4524, %v4523
      %v4551 = vpack.c.b16 %v4526, %v4525
      %v4552 = vpack.c.b16 %v4528, %v4527
      %v4553 = vpack.c.b16 %v4530, %v4529
      %v4554 = vpack.c.b16 %v4532, %v4531
      %v4555 = vpack.c.b16 %v4534, %v4533
      %v4556 = vpack.c.b16 %v4536, %v4535
      %v4557 = vpack.c.b16 %v4538, %v4537
      %v4558 = vpack.c.b16 %v4540, %v4539
      %v4559 = vpack.c.b16 %v4542, %v4541
      %v4560 = vpack.c.b16 %v4544, %v4543
      %4577 = vmatprep.subr.bf16.mxu0 0
      %4578 = vmatpush1.bf16.msra.mxu0 %v4545
      %4579 = vmatprep.subr.bf16.mxu0 0
      %4580 = vmatpush1.bf16.msra.mxu0 %v4546
      %4581 = vmatprep.subr.bf16.mxu0 0
      %4582 = vmatpush1.bf16.msra.mxu0 %v4547
      %4583 = vmatprep.subr.bf16.mxu0 0
      %4584 = vmatpush1.bf16.msra.mxu0 %v4548
      %4585 = vmatprep.subr.bf16.mxu0 0
      %4586 = vmatpush1.bf16.msra.mxu0 %v4549
      %4587 = vmatprep.subr.bf16.mxu0 0
      %4588 = vmatpush1.bf16.msra.mxu0 %v4550
      %4589 = vmatprep.subr.bf16.mxu0 0
      %4590 = vmatpush1.bf16.msra.mxu0 %v4551
      %4591 = vmatprep.subr.bf16.mxu0 0
      %4592 = vmatpush1.bf16.msra.mxu0 %v4552
      %4593 = vmatprep.subr.bf16.mxu0 0
      %4594 = vmatpush1.bf16.msra.mxu0 %v4553
      %4595 = vmatprep.subr.bf16.mxu0 0
      %4596 = vmatpush1.bf16.msra.mxu0 %v4554
      %4597 = vmatprep.subr.bf16.mxu0 0
      %4598 = vmatpush1.bf16.msra.mxu0 %v4555
      %4599 = vmatprep.subr.bf16.mxu0 0
      %4600 = vmatpush1.bf16.msra.mxu0 %v4556
      %4601 = vmatprep.subr.bf16.mxu0 0
      %4602 = vmatpush1.bf16.msra.mxu0 %v4557
      %4603 = vmatprep.subr.bf16.mxu0 0
      %4604 = vmatpush1.bf16.msra.mxu0 %v4558
      %4605 = vmatprep.subr.bf16.mxu0 0
      %4606 = vmatpush1.bf16.msra.mxu0 %v4559
      %4607 = vmatprep.subr.bf16.mxu0 0
      %4608 = vmatpush1.bf16.msra.mxu0 %v4560
      %4609 = vmatprep.mubr.bf16.mxu0 %v4180
      %4610 = vmatmul.mubr.bf16.gmra.mrb[0].mxu0 %v4165
      %v4611 = vpop.f32.mrb[0].mxu0
      %v4612 = vadd.f32 0.0, %v4611
      %v4613 = vpop.f32.mrb[0].mxu0
      %v4614 = vpop.f32.mrb[0].mxu0
      %v4615 = vadd.f32 0.0, %v4614
      %v4616 = vpop.f32.mrb[0].mxu0
      %4617 = vmatprep.mubr.bf16.mxu0 %v4196
      %4618 = vmatmul.mubr.bf16.gmra.mrb[0].mxu0 %v4188
      %v4619 = vpop.f32.mrb[0].mxu0
      %v4620 = vadd.f32 0.0, %v4619
      %v4621 = vpop.f32.mrb[0].mxu0
      %v4622 = vpop.f32.mrb[0].mxu0
      %v4623 = vadd.f32 0.0, %v4622
      %v4624 = vpop.f32.mrb[0].mxu0
      %4625 = vmatprep.mubr.bf16.mxu0 %v4212
      %4626 = vmatmul.mubr.bf16.gmra.mrb[0].mxu0 %v4204
      %v4627 = vpop.f32.mrb[0].mxu0
      %v4628 = vadd.f32 0.0, %v4627
      %v4629 = vpop.f32.mrb[0].mxu0
      %v4630 = vpop.f32.mrb[0].mxu0
      %v4631 = vadd.f32 0.0, %v4630
      %v4632 = vpop.f32.mrb[0].mxu0
      %4633 = vmatprep.mubr.bf16.mxu0 %v4228
      %4634 = vmatmul.mubr.bf16.gmra.mrb[0].mxu0 %v4220
      %v4635 = vpop.f32.mrb[0].mxu0
      %v4636 = vadd.f32 0.0, %v4635
      %v4637 = vpop.f32.mrb[0].mxu0
      %v4638 = vpop.f32.mrb[0].mxu0
      %v4639 = vadd.f32 0.0, %v4638
      %v4640 = vpop.f32.mrb[0].mxu0
      %4641 = vmatprep.mubr.bf16.mxu0 %v4244
      %4642 = vmatmul.mubr.bf16.gmra.mrb[0].mxu0 %v4236
      %v4643 = vpop.f32.mrb[0].mxu0
      %v4644 = vadd.f32 0.0, %v4643
      %v4645 = vpop.f32.mrb[0].mxu0
      %v4646 = vpop.f32.mrb[0].mxu0
      %v4647 = vadd.f32 0.0, %v4646
      %v4648 = vpop.f32.mrb[0].mxu0
      %4649 = vmatprep.mubr.bf16.mxu0 %v4260
      %4650 = vmatmul.mubr.bf16.gmra.mrb[0].mxu0 %v4252
      %v4651 = vpop.f32.mrb[0].mxu0
      %v4652 = vadd.f32 0.0, %v4651
      %v4653 = vpop.f32.mrb[0].mxu0
      %v4654 = vpop.f32.mrb[0].mxu0
      %v4655 = vadd.f32 0.0, %v4654
      %v4656 = vpop.f32.mrb[0].mxu0
      %4657 = vmatprep.mubr.bf16.mxu0 %v4276
      %4658 = vmatmul.mubr.bf16.gmra.mrb[0].mxu0 %v4268
      %v4659 = vpop.f32.mrb[0].mxu0
      %v4660 = vadd.f32 0.0, %v4659
      %v4661 = vpop.f32.mrb[0].mxu0
      %v4662 = vpop.f32.mrb[0].mxu0
      %v4663 = vadd.f32 0.0, %v4662
      %v4664 = vpop.f32.mrb[0].mxu0
      %4665 = vmatprep.mubr.bf16.mxu0 %v4292
      %4666 = vmatmul.mubr.bf16.gmra.mrb[0].mxu0 %v4284
      %v4667 = vpop.f32.mrb[0].mxu0
      %v4668 = vadd.f32 0.0, %v4667
      %v4669 = vpop.f32.mrb[0].mxu0
      %v4670 = vpop.f32.mrb[0].mxu0
      %v4671 = vadd.f32 0.0, %v4670
      %v4672 = vpop.f32.mrb[0].mxu0
      %4673 = vmatprep.mubr.bf16.mxu0 %v4308
      %4674 = vmatmul.mubr.bf16.gmra.mrb[0].mxu0 %v4300
      %v4675 = vpop.f32.mrb[0].mxu0
      %v4676 = vadd.f32 0.0, %v4675
      %v4677 = vpop.f32.mrb[0].mxu0
      %v4678 = vpop.f32.mrb[0].mxu0
      %v4679 = vadd.f32 0.0, %v4678
      %v4680 = vpop.f32.mrb[0].mxu0
      %4681 = vmatprep.mubr.bf16.mxu0 %v4324
      %4682 = vmatmul.mubr.bf16.gmra.mrb[0].mxu0 %v4316
      %v4683 = vpop.f32.mrb[0].mxu0
      %v4684 = vadd.f32 0.0, %v4683
      %v4685 = vpop.f32.mrb[0].mxu0
      %v4686 = vpop.f32.mrb[0].mxu0
      %v4687 = vadd.f32 0.0, %v4686
      %v4688 = vpop.f32.mrb[0].mxu0
      %4689 = vmatprep.mubr.bf16.mxu0 %v4340
      %4690 = vmatmul.mubr.bf16.gmra.mrb[0].mxu0 %v4332
      %v4691 = vpop.f32.mrb[0].mxu0
      %v4692 = vadd.f32 0.0, %v4691
      %v4693 = vpop.f32.mrb[0].mxu0
      %v4694 = vpop.f32.mrb[0].mxu0
      %v4695 = vadd.f32 0.0, %v4694
      %v4696 = vpop.f32.mrb[0].mxu0
      %4697 = vmatprep.mubr.bf16.mxu0 %v4356
      %4698 = vmatmul.mubr.bf16.gmra.mrb[0].mxu0 %v4348
      %v4699 = vpop.f32.mrb[0].mxu0
      %v4700 = vadd.f32 0.0, %v4699
      %v4701 = vpop.f32.mrb[0].mxu0
      %v4702 = vpop.f32.mrb[0].mxu0
      %v4703 = vadd.f32 0.0, %v4702
      %v4704 = vpop.f32.mrb[0].mxu0
      %4705 = vmatprep.mubr.bf16.mxu0 %v4372
      %4706 = vmatmul.mubr.bf16.gmra.mrb[0].mxu0 %v4364
      %v4707 = vpop.f32.mrb[0].mxu0
      %v4708 = vadd.f32 0.0, %v4707
      %v4709 = vpop.f32.mrb[0].mxu0
      %v4710 = vpop.f32.mrb[0].mxu0
      %v4711 = vadd.f32 0.0, %v4710
      %v4712 = vpop.f32.mrb[0].mxu0
      %4713 = vmatprep.mubr.bf16.mxu0 %v4388
      %4714 = vmatmul.mubr.bf16.gmra.mrb[0].mxu0 %v4380
      %v4715 = vpop.f32.mrb[0].mxu0
      %v4716 = vadd.f32 0.0, %v4715
      %v4717 = vpop.f32.mrb[0].mxu0
      %v4718 = vpop.f32.mrb[0].mxu0
      %v4719 = vadd.f32 0.0, %v4718
      %v4720 = vpop.f32.mrb[0].mxu0
      %4721 = vmatprep.mubr.bf16.mxu0 %v4404
      %4722 = vmatmul.mubr.bf16.gmra.mrb[0].mxu0 %v4396
      %v4723 = vpop.f32.mrb[0].mxu0
      %v4724 = vadd.f32 0.0, %v4723
      %v4725 = vpop.f32.mrb[0].mxu0
      %v4726 = vpop.f32.mrb[0].mxu0
      %v4727 = vadd.f32 0.0, %v4726
      %v4728 = vpop.f32.mrb[0].mxu0
      %4729 = vmatprep.mubr.bf16.mxu0 %v4420
      %4730 = vmatmul.mubr.bf16.gmra.mrb[0].mxu0 %v4412
      %v4731 = vpop.f32.mrb[0].mxu0
      %v4732 = vadd.f32 0.0, %v4731
      %v4733 = vpop.f32.mrb[0].mxu0
      %v4734 = vpop.f32.mrb[0].mxu0
      %v4735 = vadd.f32 0.0, %v4734
      %v4736 = vpop.f32.mrb[0].mxu0
      %4737 = vmatprep.mubr.bf16.mxu0 %v4436
      %4738 = vmatmul.mubr.bf16.gmra.mrb[0].mxu0 %v4428
      %v4739 = vpop.f32.mrb[0].mxu0
      %v4740 = vadd.f32 0.0, %v4739
      %v4741 = vpop.f32.mrb[0].mxu0
      %v4742 = vpop.f32.mrb[0].mxu0
      %v4743 = vadd.f32 0.0, %v4742
      %v4744 = vpop.f32.mrb[0].mxu0
      %4745 = vmatprep.mubr.bf16.mxu0 %v4444
      %4746 = vmatmul.mubr.bf16.gmra.mrb[0].mxu0 %v4440
      %v4747 = vpop.f32.mrb[0].mxu0
      %v4748 = vadd.f32 0.0, %v4747
      %v4749 = vpop.f32.mrb[0].mxu0
      %v4750 = vpop.f32.mrb[0].mxu0
      %v4751 = vadd.f32 0.0, %v4750
      %v4752 = vpop.f32.mrb[0].mxu0
      %4753 = vdwg.mxu0
      %v4786 = vunpack.c.l.b16 %v3940
      %v4787 = vunpack.c.l.b16 %v3941
      %v4788 = vunpack.c.l.b16 %v3942
      %v4789 = vunpack.c.l.b16 %v3943
      %v4790 = vunpack.c.l.b16 %v3944
      %v4791 = vunpack.c.l.b16 %v3945
      %v4792 = vunpack.c.l.b16 %v3946
      %v4793 = vunpack.c.l.b16 %v3947
      %v4794 = vunpack.c.l.b16 %v3948
      %v4795 = vunpack.c.l.b16 %v3949
      %v4796 = vunpack.c.l.b16 %v3950
      %v4797 = vunpack.c.l.b16 %v3951
      %v4798 = vunpack.c.l.b16 %v3952
      %v4799 = vunpack.c.l.b16 %v3953
      %v4800 = vunpack.c.l.b16 %v3954
      %v4801 = vunpack.c.l.b16 %v3955
      %v4802 = vunpack.c.l.b16 %v3956
      %v4803 = vunpack.c.l.b16 %v3957
      %v4804 = vunpack.c.l.b16 %v3958
      %v4805 = vunpack.c.l.b16 %v3959
      %v4806 = vunpack.c.l.b16 %v3960
      %v4807 = vunpack.c.l.b16 %v3961
      %v4808 = vunpack.c.l.b16 %v3962
      %v4809 = vunpack.c.l.b16 %v3963
      %v4810 = vunpack.c.l.b16 %v3964
      %v4811 = vunpack.c.l.b16 %v3965
      %v4812 = vunpack.c.l.b16 %v3966
      %v4813 = vunpack.c.l.b16 %v3967
      %v4814 = vunpack.c.l.b16 %v3968
      %v4815 = vunpack.c.l.b16 %v3969
      %v4816 = vunpack.c.l.b16 %v3970
      %v4817 = vunpack.c.l.b16 %v3971
      %v4818 = vpack.c.b16 %v4787, %v4786
      %v4819 = vpack.c.b16 %v4789, %v4788
      %v4820 = vpack.c.b16 %v4791, %v4790
      %v4821 = vpack.c.b16 %v4793, %v4792
      %v4822 = vpack.c.b16 %v4795, %v4794
      %v4823 = vpack.c.b16 %v4797, %v4796
      %v4824 = vpack.c.b16 %v4799, %v4798
      %v4825 = vpack.c.b16 %v4801, %v4800
      %v4826 = vpack.c.b16 %v4803, %v4802
      %v4827 = vpack.c.b16 %v4805, %v4804
      %v4828 = vpack.c.b16 %v4807, %v4806
      %v4829 = vpack.c.b16 %v4809, %v4808
      %v4830 = vpack.c.b16 %v4811, %v4810
      %v4831 = vpack.c.b16 %v4813, %v4812
      %v4832 = vpack.c.b16 %v4815, %v4814
      %v4833 = vpack.c.b16 %v4817, %v4816
      %4850 = vmatprep.subr.bf16.mxu0 0
      %4851 = vmatpush1.bf16.msra.mxu0 %v4818
      %4852 = vmatprep.subr.bf16.mxu0 0
      %4853 = vmatpush1.bf16.msra.mxu0 %v4819
      %4854 = vmatprep.subr.bf16.mxu0 0
      %4855 = vmatpush1.bf16.msra.mxu0 %v4820
      %4856 = vmatprep.subr.bf16.mxu0 0
      %4857 = vmatpush1.bf16.msra.mxu0 %v4821
      %4858 = vmatprep.subr.bf16.mxu0 0
      %4859 = vmatpush1.bf16.msra.mxu0 %v4822
      %4860 = vmatprep.subr.bf16.mxu0 0
      %4861 = vmatpush1.bf16.msra.mxu0 %v4823
      %4862 = vmatprep.subr.bf16.mxu0 0
      %4863 = vmatpush1.bf16.msra.mxu0 %v4824
      %4864 = vmatprep.subr.bf16.mxu0 0
      %4865 = vmatpush1.bf16.msra.mxu0 %v4825
      %4866 = vmatprep.subr.bf16.mxu0 0
      %4867 = vmatpush1.bf16.msra.mxu0 %v4826
      %4868 = vmatprep.subr.bf16.mxu0 0
      %4869 = vmatpush1.bf16.msra.mxu0 %v4827
      %4870 = vmatprep.subr.bf16.mxu0 0
      %4871 = vmatpush1.bf16.msra.mxu0 %v4828
      %4872 = vmatprep.subr.bf16.mxu0 0
      %4873 = vmatpush1.bf16.msra.mxu0 %v4829
      %4874 = vmatprep.subr.bf16.mxu0 0
      %4875 = vmatpush1.bf16.msra.mxu0 %v4830
      %4876 = vmatprep.subr.bf16.mxu0 0
      %4877 = vmatpush1.bf16.msra.mxu0 %v4831
      %4878 = vmatprep.subr.bf16.mxu0 0
      %4879 = vmatpush1.bf16.msra.mxu0 %v4832
      %4880 = vmatprep.subr.bf16.mxu0 0
      %4881 = vmatpush1.bf16.msra.mxu0 %v4833
      %4882 = vmatprep.mubr.bf16.mxu0 %v3870
      %4883 = vmatmul.mubr.bf16.gmra.mrb[0].mxu0 %v3814
      %v4884 = vpop.f32.mrb[0].mxu0
      %v4885 = vadd.f32 %v4612, %v4884
      %v4886 = vpop.f32.mrb[0].mxu0
      %v4887 = vpop.f32.mrb[0].mxu0
      %v4888 = vadd.f32 %v4615, %v4887
      %v4889 = vpop.f32.mrb[0].mxu0
      %4890 = vmatprep.mubr.bf16.mxu0 %v3874
      %4891 = vmatmul.mubr.bf16.gmra.mrb[0].mxu0 %v3817
      %v4892 = vpop.f32.mrb[0].mxu0
      %v4893 = vadd.f32 %v4620, %v4892
      %v4894 = vpop.f32.mrb[0].mxu0
      %v4895 = vpop.f32.mrb[0].mxu0
      %v4896 = vadd.f32 %v4623, %v4895
      %v4897 = vpop.f32.mrb[0].mxu0
      %4898 = vmatprep.mubr.bf16.mxu0 %v3878
      %4899 = vmatmul.mubr.bf16.gmra.mrb[0].mxu0 %v3820
      %v4900 = vpop.f32.mrb[0].mxu0
      %v4901 = vadd.f32 %v4628, %v4900
      %v4902 = vpop.f32.mrb[0].mxu0
      %v4903 = vpop.f32.mrb[0].mxu0
      %v4904 = vadd.f32 %v4631, %v4903
      %v4905 = vpop.f32.mrb[0].mxu0
      %4906 = vmatprep.mubr.bf16.mxu0 %v3882
      %4907 = vmatmul.mubr.bf16.gmra.mrb[0].mxu0 %v3823
      %v4908 = vpop.f32.mrb[0].mxu0
      %v4909 = vadd.f32 %v4636, %v4908
      %v4910 = vpop.f32.mrb[0].mxu0
      %v4911 = vpop.f32.mrb[0].mxu0
      %v4912 = vadd.f32 %v4639, %v4911
      %v4913 = vpop.f32.mrb[0].mxu0
      %4914 = vmatprep.mubr.bf16.mxu0 %v3886
      %4915 = vmatmul.mubr.bf16.gmra.mrb[0].mxu0 %v3826
      %v4916 = vpop.f32.mrb[0].mxu0
      %v4917 = vadd.f32 %v4644, %v4916
      %v4918 = vpop.f32.mrb[0].mxu0
      %v4919 = vpop.f32.mrb[0].mxu0
      %v4920 = vadd.f32 %v4647, %v4919
      %v4921 = vpop.f32.mrb[0].mxu0
      %4922 = vmatprep.mubr.bf16.mxu0 %v3890
      %4923 = vmatmul.mubr.bf16.gmra.mrb[0].mxu0 %v3829
      %v4924 = vpop.f32.mrb[0].mxu0
      %v4925 = vadd.f32 %v4652, %v4924
      %v4926 = vpop.f32.mrb[0].mxu0
      %v4927 = vpop.f32.mrb[0].mxu0
      %v4928 = vadd.f32 %v4655, %v4927
      %v4929 = vpop.f32.mrb[0].mxu0
      %4930 = vmatprep.mubr.bf16.mxu0 %v3894
      %4931 = vmatmul.mubr.bf16.gmra.mrb[0].mxu0 %v3832
      %v4932 = vpop.f32.mrb[0].mxu0
      %v4933 = vadd.f32 %v4660, %v4932
      %v4934 = vpop.f32.mrb[0].mxu0
      %v4935 = vpop.f32.mrb[0].mxu0
      %v4936 = vadd.f32 %v4663, %v4935
      %v4937 = vpop.f32.mrb[0].mxu0
      %4938 = vmatprep.mubr.bf16.mxu0 %v3898
      %4939 = vmatmul.mubr.bf16.gmra.mrb[0].mxu0 %v3835
      %v4940 = vpop.f32.mrb[0].mxu0
      %v4941 = vadd.f32 %v4668, %v4940
      %v4942 = vpop.f32.mrb[0].mxu0
      %v4943 = vpop.f32.mrb[0].mxu0
      %v4944 = vadd.f32 %v4671, %v4943
      %v4945 = vpop.f32.mrb[0].mxu0
      %4946 = vmatprep.mubr.bf16.mxu0 %v3902
      %4947 = vmatmul.mubr.bf16.gmra.mrb[0].mxu0 %v3838
      %v4948 = vpop.f32.mrb[0].mxu0
      %v4949 = vadd.f32 %v4676, %v4948
      %v4950 = vpop.f32.mrb[0].mxu0
      %v4951 = vpop.f32.mrb[0].mxu0
      %v4952 = vadd.f32 %v4679, %v4951
      %v4953 = vpop.f32.mrb[0].mxu0
      %4954 = vmatprep.mubr.bf16.mxu0 %v3906
      %4955 = vmatmul.mubr.bf16.gmra.mrb[0].mxu0 %v3841
      %v4956 = vpop.f32.mrb[0].mxu0
      %v4957 = vadd.f32 %v4684, %v4956
      %v4958 = vpop.f32.mrb[0].mxu0
      %v4959 = vpop.f32.mrb[0].mxu0
      %v4960 = vadd.f32 %v4687, %v4959
      %v4961 = vpop.f32.mrb[0].mxu0
      %4962 = vmatprep.mubr.bf16.mxu0 %v3910
      %4963 = vmatmul.mubr.bf16.gmra.mrb[0].mxu0 %v3844
      %v4964 = vpop.f32.mrb[0].mxu0
      %v4965 = vadd.f32 %v4692, %v4964
      %v4966 = vpop.f32.mrb[0].mxu0
      %v4967 = vpop.f32.mrb[0].mxu0
      %v4968 = vadd.f32 %v4695, %v4967
      %v4969 = vpop.f32.mrb[0].mxu0
      %4970 = vmatprep.mubr.bf16.mxu0 %v3914
      %4971 = vmatmul.mubr.bf16.gmra.mrb[0].mxu0 %v3847
      %v4972 = vpop.f32.mrb[0].mxu0
      %v4973 = vadd.f32 %v4700, %v4972
      %v4974 = vpop.f32.mrb[0].mxu0
      %v4975 = vpop.f32.mrb[0].mxu0
      %v4976 = vadd.f32 %v4703, %v4975
      %v4977 = vpop.f32.mrb[0].mxu0
      %4978 = vmatprep.mubr.bf16.mxu0 %v3918
      %4979 = vmatmul.mubr.bf16.gmra.mrb[0].mxu0 %v3850
      %v4980 = vpop.f32.mrb[0].mxu0
      %v4981 = vadd.f32 %v4708, %v4980
      %v4982 = vpop.f32.mrb[0].mxu0
      %v4983 = vpop.f32.mrb[0].mxu0
      %v4984 = vadd.f32 %v4711, %v4983
      %v4985 = vpop.f32.mrb[0].mxu0
      %4986 = vmatprep.mubr.bf16.mxu0 %v3922
      %4987 = vmatmul.mubr.bf16.gmra.mrb[0].mxu0 %v3853
      %v4988 = vpop.f32.mrb[0].mxu0
      %v4989 = vadd.f32 %v4716, %v4988
      %v4990 = vpop.f32.mrb[0].mxu0
      %v4991 = vpop.f32.mrb[0].mxu0
      %v4992 = vadd.f32 %v4719, %v4991
      %v4993 = vpop.f32.mrb[0].mxu0
      %4994 = vmatprep.mubr.bf16.mxu0 %v3926
      %4995 = vmatmul.mubr.bf16.gmra.mrb[0].mxu0 %v3856
      %v4996 = vpop.f32.mrb[0].mxu0
      %v4997 = vadd.f32 %v4724, %v4996
      %v4998 = vpop.f32.mrb[0].mxu0
      %v4999 = vpop.f32.mrb[0].mxu0
      %v5000 = vadd.f32 %v4727, %v4999
      %v5001 = vpop.f32.mrb[0].mxu0
      %5002 = vmatprep.mubr.bf16.mxu0 %v3930
      %5003 = vmatmul.mubr.bf16.gmra.mrb[0].mxu0 %v3859
      %v5004 = vpop.f32.mrb[0].mxu0
      %v5005 = vadd.f32 %v4732, %v5004
      %v5006 = vpop.f32.mrb[0].mxu0
      %v5007 = vpop.f32.mrb[0].mxu0
      %v5008 = vadd.f32 %v4735, %v5007
      %v5009 = vpop.f32.mrb[0].mxu0
      %5010 = vmatprep.mubr.bf16.mxu0 %v3934
      %5011 = vmatmul.mubr.bf16.gmra.mrb[0].mxu0 %v3862
      %v5012 = vpop.f32.mrb[0].mxu0
      %v5013 = vadd.f32 %v4740, %v5012
      %v5014 = vpop.f32.mrb[0].mxu0
      %v5015 = vpop.f32.mrb[0].mxu0
      %v5016 = vadd.f32 %v4743, %v5015
      %v5017 = vpop.f32.mrb[0].mxu0
      %5018 = vmatprep.mubr.bf16.mxu0 %v3938
      %5019 = vmatmul.mubr.bf16.gmra.mrb[0].mxu0 %v3866
      %v5020 = vpop.f32.mrb[0].mxu0
      %v5021 = vadd.f32 %v4748, %v5020
      %v5022 = vpop.f32.mrb[0].mxu0
      %v5023 = vpop.f32.mrb[0].mxu0
      %v5024 = vadd.f32 %v4751, %v5023
      %v5025 = vpop.f32.mrb[0].mxu0
      %5026 = vdwg.mxu0
      %v5027 = vld [vmem:[#allocation3 + $0x10] sm:$0x8]
      %v5028 = vld [vmem:[%s6] sm:$0xf]
      %v5029 = vld [vmem:[%s6 + $0x4] sm:$0xf]
      %v5030 = vld [vmem:[%s6 + $0x8] sm:$0xf]
      %v5031 = vld [vmem:[%s6 + $0xc] sm:$0xf]
      %v5032 = vld [vmem:[%s6 + $0x10] sm:$0xf]
      %v5033 = vld [vmem:[%s6 + $0x14] sm:$0xf]
      %v5034 = vld [vmem:[%s6 + $0x18] sm:$0xf]
      %v5035 = vld [vmem:[%s6 + $0x1c] sm:$0xf]
      %v5037 = vunpack.c.l.b16 %v5027
      %v5038 = vpack.c.b16 %v3496, %v5037
      %v5039 = vrot.slane %v5038, 3
      %v5040 = vrot.slane %v3530, 3
      %v5041 = vsel %vm2201, %v5039, %v5040
      %v5042 = vrot.slane %v3531, 3
      %v5043 = vsel %vm2201, %v5040, %v5042
      %v5044 = vrot.slane %v3532, 3
      %v5045 = vsel %vm2201, %v5042, %v5044
      %v5046 = vrot.slane %v3533, 3
      %v5047 = vsel %vm2201, %v5044, %v5046
      %v5048 = vrot.slane %v3534, 3
      %v5049 = vsel %vm2201, %v5046, %v5048
      %v5050 = vrot.slane %v3535, 3
      %v5051 = vsel %vm2201, %v5048, %v5050
      %v5052 = vrot.slane %v3536, 3
      %v5053 = vsel %vm2201, %v5050, %v5052
      %v5054 = vrot.slane %v3537, 3
      %v5055 = vsel %vm2201, %v5052, %v5054
      %v5056 = vrot.slane %v3538, 3
      %v5057 = vsel %vm2201, %v5054, %v5056
      %v5058 = vrot.slane %v3539, 3
      %v5059 = vsel %vm2201, %v5056, %v5058
      %v5060 = vrot.slane %v3540, 3
      %v5061 = vsel %vm2201, %v5058, %v5060
      %v5062 = vrot.slane %v3541, 3
      %v5063 = vsel %vm2201, %v5060, %v5062
      %v5064 = vrot.slane %v3542, 3
      %v5065 = vsel %vm2201, %v5062, %v5064
      %v5066 = vrot.slane %v3543, 3
      %v5067 = vsel %vm2201, %v5064, %v5066
      %v5068 = vrot.slane %v3547, 3
      %v5069 = vsel %vm2201, %v5066, %v5068
      %v5070 = vrot.slane %v3772, 3
      %v5071 = vsel %vm2201, %v5068, %v5070
      %v5072 = vrot.slane %v4025, 3
      %v5073 = vsel %vm2201, %v5070, %v5072
      %v5074 = vrot.slane %v4052, 3
      %v5075 = vsel %vm2201, %v5072, %v5074
      %v5084 = vunpack.c.l.b16 %v5028
      %v5085 = vunpack.c.l.b16 %v5029
      %v5086 = vunpack.c.l.b16 %v5030
      %v5087 = vunpack.c.l.b16 %v5031
      %v5088 = vunpack.c.l.b16 %v5032
      %v5089 = vunpack.c.l.b16 %v5033
      %v5090 = vunpack.c.l.b16 %v5034
      %v5091 = vunpack.c.l.b16 %v5035
      %v5092 = vpack.c.b16 %v5085, %v5084
      %v5093 = vpack.c.b16 %v5087, %v5086
      %v5094 = vpack.c.b16 %v5089, %v5088
      %v5095 = vpack.c.b16 %v5091, %v5090
      %v5101 = vsel %vm973, %v5041, 0
      %v5104 = vsel %vm973, %v5043, 0
      %v5107 = vsel %vm973, %v5045, 0
      %v5110 = vsel %vm973, %v5047, 0
      %v5113 = vsel %vm973, %v5049, 0
      %v5116 = vsel %vm973, %v5051, 0
      %v5119 = vsel %vm973, %v5053, 0
      %v5122 = vsel %vm973, %v5055, 0
      %v5125 = vsel %vm973, %v5057, 0
      %v5128 = vsel %vm973, %v5059, 0
      %v5131 = vsel %vm973, %v5061, 0
      %v5134 = vsel %vm973, %v5063, 0
      %v5137 = vsel %vm973, %v5065, 0
      %v5140 = vsel %vm973, %v5067, 0
      %v5143 = vsel %vm973, %v5069, 0
      %v5146 = vsel %vm973, %v5071, 0
      %v5149 = vsel %vm973, %v5073, 0
      %v5152 = vsel %vm973, %v5075, 0
      %5154 = vmatprep.subr.bf16.mxu0 0
      %5155 = vmatpush1.bf16.msra.mxu0 %v5092
      %5156 = vmatprep.subr.bf16.mxu0 0
      %5157 = vmatpush1.bf16.msra.mxu0 %v5093
      %5158 = vmatprep.subr.bf16.mxu0 0
      %5159 = vmatpush1.bf16.msra.mxu0 %v5094
      %5160 = vmatprep.subr.bf16.mxu0 0
      %5161 = vmatpush1.bf16.msra.mxu0 %v5095
      %5162 = vmatprep.subr.bf16.mxu0 0
      %5163 = vmatpush1.bf16.msra.mxu0 0
      %5164 = vmatprep.subr.bf16.mxu0 0
      %5165 = vmatpush1.bf16.msra.mxu0 0
      %5166 = vmatprep.subr.bf16.mxu0 0
      %5167 = vmatpush1.bf16.msra.mxu0 0
      %5168 = vmatprep.subr.bf16.mxu0 0
      %5169 = vmatpush1.bf16.msra.mxu0 0
      %5170 = vmatprep.subr.bf16.mxu0 0
      %5171 = vmatpush1.bf16.msra.mxu0 0
      %5172 = vmatprep.subr.bf16.mxu0 0
      %5173 = vmatpush1.bf16.msra.mxu0 0
      %5174 = vmatprep.subr.bf16.mxu0 0
      %5175 = vmatpush1.bf16.msra.mxu0 0
      %5176 = vmatprep.subr.bf16.mxu0 0
      %5177 = vmatpush1.bf16.msra.mxu0 0
      %5178 = vmatprep.subr.bf16.mxu0 0
      %5179 = vmatpush1.bf16.msra.mxu0 0
      %5180 = vmatprep.subr.bf16.mxu0 0
      %5181 = vmatpush1.bf16.msra.mxu0 0
      %5182 = vmatprep.subr.bf16.mxu0 0
      %5183 = vmatpush1.bf16.msra.mxu0 0
      %5184 = vmatprep.subr.bf16.mxu0 0
      %5185 = vmatpush1.bf16.msra.mxu0 0
      %5186 = vmatprep.mubr.bf16.mxu0 0
      %5187 = vmatmul.mubr.bf16.gmra.mrb[0].mxu0 %v5101
      %v5188 = vpop.f32.mrb[0].mxu0
      %v5189 = vadd.f32 0.0, %v5188
      %v5190 = vpop.f32.mrb[0].mxu0
      %v5191 = vpop.f32.mrb[0].mxu0
      %v5192 = vadd.f32 0.0, %v5191
      %v5193 = vpop.f32.mrb[0].mxu0
      %5194 = vmatprep.mubr.bf16.mxu0 0
      %5195 = vmatmul.mubr.bf16.gmra.mrb[0].mxu0 %v5104
      %v5196 = vpop.f32.mrb[0].mxu0
      %v5197 = vadd.f32 0.0, %v5196
      %v5198 = vpop.f32.mrb[0].mxu0
      %v5199 = vpop.f32.mrb[0].mxu0
      %v5200 = vadd.f32 0.0, %v5199
      %v5201 = vpop.f32.mrb[0].mxu0
      %5202 = vmatprep.mubr.bf16.mxu0 0
      %5203 = vmatmul.mubr.bf16.gmra.mrb[0].mxu0 %v5107
      %v5204 = vpop.f32.mrb[0].mxu0
      %v5205 = vadd.f32 0.0, %v5204
      %v5206 = vpop.f32.mrb[0].mxu0
      %v5207 = vpop.f32.mrb[0].mxu0
      %v5208 = vadd.f32 0.0, %v5207
      %v5209 = vpop.f32.mrb[0].mxu0
      %5210 = vmatprep.mubr.bf16.mxu0 0
      %5211 = vmatmul.mubr.bf16.gmra.mrb[0].mxu0 %v5110
      %v5212 = vpop.f32.mrb[0].mxu0
      %v5213 = vadd.f32 0.0, %v5212
      %v5214 = vpop.f32.mrb[0].mxu0
      %v5215 = vpop.f32.mrb[0].mxu0
      %v5216 = vadd.f32 0.0, %v5215
      %v5217 = vpop.f32.mrb[0].mxu0
      %5218 = vmatprep.mubr.bf16.mxu0 0
      %5219 = vmatmul.mubr.bf16.gmra.mrb[0].mxu0 %v5113
      %v5220 = vpop.f32.mrb[0].mxu0
      %v5221 = vadd.f32 0.0, %v5220
      %v5222 = vpop.f32.mrb[0].mxu0
      %v5223 = vpop.f32.mrb[0].mxu0
      %v5224 = vadd.f32 0.0, %v5223
      %v5225 = vpop.f32.mrb[0].mxu0
      %5226 = vmatprep.mubr.bf16.mxu0 0
      %5227 = vmatmul.mubr.bf16.gmra.mrb[0].mxu0 %v5116
      %v5228 = vpop.f32.mrb[0].mxu0
      %v5229 = vadd.f32 0.0, %v5228
      %v5230 = vpop.f32.mrb[0].mxu0
      %v5231 = vpop.f32.mrb[0].mxu0
      %v5232 = vadd.f32 0.0, %v5231
      %v5233 = vpop.f32.mrb[0].mxu0
      %5234 = vmatprep.mubr.bf16.mxu0 0
      %5235 = vmatmul.mubr.bf16.gmra.mrb[0].mxu0 %v5119
      %v5236 = vpop.f32.mrb[0].mxu0
      %v5237 = vadd.f32 0.0, %v5236
      %v5238 = vpop.f32.mrb[0].mxu0
      %v5239 = vpop.f32.mrb[0].mxu0
      %v5240 = vadd.f32 0.0, %v5239
      %v5241 = vpop.f32.mrb[0].mxu0
      %5242 = vmatprep.mubr.bf16.mxu0 0
      %5243 = vmatmul.mubr.bf16.gmra.mrb[0].mxu0 %v5122
      %v5244 = vpop.f32.mrb[0].mxu0
      %v5245 = vadd.f32 0.0, %v5244
      %v5246 = vpop.f32.mrb[0].mxu0
      %v5247 = vpop.f32.mrb[0].mxu0
      %v5248 = vadd.f32 0.0, %v5247
      %v5249 = vpop.f32.mrb[0].mxu0
      %5250 = vmatprep.mubr.bf16.mxu0 0
      %5251 = vmatmul.mubr.bf16.gmra.mrb[0].mxu0 %v5125
      %v5252 = vpop.f32.mrb[0].mxu0
      %v5253 = vadd.f32 0.0, %v5252
      %v5254 = vpop.f32.mrb[0].mxu0
      %v5255 = vpop.f32.mrb[0].mxu0
      %v5256 = vadd.f32 0.0, %v5255
      %v5257 = vpop.f32.mrb[0].mxu0
      %5258 = vmatprep.mubr.bf16.mxu0 0
      %5259 = vmatmul.mubr.bf16.gmra.mrb[0].mxu0 %v5128
      %v5260 = vpop.f32.mrb[0].mxu0
      %v5261 = vadd.f32 0.0, %v5260
      %v5262 = vpop.f32.mrb[0].mxu0
      %v5263 = vpop.f32.mrb[0].mxu0
      %v5264 = vadd.f32 0.0, %v5263
      %v5265 = vpop.f32.mrb[0].mxu0
      %5266 = vmatprep.mubr.bf16.mxu0 0
      %5267 = vmatmul.mubr.bf16.gmra.mrb[0].mxu0 %v5131
      %v5268 = vpop.f32.mrb[0].mxu0
      %v5269 = vadd.f32 0.0, %v5268
      %v5270 = vpop.f32.mrb[0].mxu0
      %v5271 = vpop.f32.mrb[0].mxu0
      %v5272 = vadd.f32 0.0, %v5271
      %v5273 = vpop.f32.mrb[0].mxu0
      %5274 = vmatprep.mubr.bf16.mxu0 0
      %5275 = vmatmul.mubr.bf16.gmra.mrb[0].mxu0 %v5134
      %v5276 = vpop.f32.mrb[0].mxu0
      %v5277 = vadd.f32 0.0, %v5276
      %v5278 = vpop.f32.mrb[0].mxu0
      %v5279 = vpop.f32.mrb[0].mxu0
      %v5280 = vadd.f32 0.0, %v5279
      %v5281 = vpop.f32.mrb[0].mxu0
      %5282 = vmatprep.mubr.bf16.mxu0 0
      %5283 = vmatmul.mubr.bf16.gmra.mrb[0].mxu0 %v5137
      %v5284 = vpop.f32.mrb[0].mxu0
      %v5285 = vadd.f32 0.0, %v5284
      %v5286 = vpop.f32.mrb[0].mxu0
      %v5287 = vpop.f32.mrb[0].mxu0
      %v5288 = vadd.f32 0.0, %v5287
      %v5289 = vpop.f32.mrb[0].mxu0
      %5290 = vmatprep.mubr.bf16.mxu0 0
      %5291 = vmatmul.mubr.bf16.gmra.mrb[0].mxu0 %v5140
      %v5292 = vpop.f32.mrb[0].mxu0
      %v5293 = vadd.f32 0.0, %v5292
      %v5294 = vpop.f32.mrb[0].mxu0
      %v5295 = vpop.f32.mrb[0].mxu0
      %v5296 = vadd.f32 0.0, %v5295
      %v5297 = vpop.f32.mrb[0].mxu0
      %5298 = vmatprep.mubr.bf16.mxu0 0
      %5299 = vmatmul.mubr.bf16.gmra.mrb[0].mxu0 %v5143
      %v5300 = vpop.f32.mrb[0].mxu0
      %v5301 = vadd.f32 0.0, %v5300
      %v5302 = vpop.f32.mrb[0].mxu0
      %v5303 = vpop.f32.mrb[0].mxu0
      %v5304 = vadd.f32 0.0, %v5303
      %v5305 = vpop.f32.mrb[0].mxu0
      %5306 = vmatprep.mubr.bf16.mxu0 0
      %5307 = vmatmul.mubr.bf16.gmra.mrb[0].mxu0 %v5146
      %v5308 = vpop.f32.mrb[0].mxu0
      %v5309 = vadd.f32 0.0, %v5308
      %v5310 = vpop.f32.mrb[0].mxu0
      %v5311 = vpop.f32.mrb[0].mxu0
      %v5312 = vadd.f32 0.0, %v5311
      %v5313 = vpop.f32.mrb[0].mxu0
      %5314 = vmatprep.mubr.bf16.mxu0 0
      %5315 = vmatmul.mubr.bf16.gmra.mrb[0].mxu0 %v5149
      %v5316 = vpop.f32.mrb[0].mxu0
      %v5317 = vadd.f32 0.0, %v5316
      %v5318 = vpop.f32.mrb[0].mxu0
      %v5319 = vpop.f32.mrb[0].mxu0
      %v5320 = vadd.f32 0.0, %v5319
      %v5321 = vpop.f32.mrb[0].mxu0
      %5322 = vmatprep.mubr.bf16.mxu0 0
      %5323 = vmatmul.mubr.bf16.gmra.mrb[0].mxu0 %v5152
      %v5324 = vpop.f32.mrb[0].mxu0
      %v5325 = vadd.f32 0.0, %v5324
      %v5326 = vpop.f32.mrb[0].mxu0
      %v5327 = vpop.f32.mrb[0].mxu0
      %v5328 = vadd.f32 0.0, %v5327
      %v5329 = vpop.f32.mrb[0].mxu0
      %5330 = vdwg.mxu0
      %v5331 = vadd.f32 %v4885, %v5189
      %v5332 = vadd.f32 %v4888, %v5192
      %v5333 = vadd.f32 %v4893, %v5197
      %v5334 = vadd.f32 %v4896, %v5200
      %v5335 = vadd.f32 %v4901, %v5205
      %v5336 = vadd.f32 %v4904, %v5208
      %v5337 = vadd.f32 %v4909, %v5213
      %v5338 = vadd.f32 %v4912, %v5216
      %v5339 = vadd.f32 %v4917, %v5221
      %v5340 = vadd.f32 %v4920, %v5224
      %v5341 = vadd.f32 %v4925, %v5229
      %v5342 = vadd.f32 %v4928, %v5232
      %v5343 = vadd.f32 %v4933, %v5237
      %v5344 = vadd.f32 %v4936, %v5240
      %v5345 = vadd.f32 %v4941, %v5245
      %v5346 = vadd.f32 %v4944, %v5248
      %v5347 = vadd.f32 %v4949, %v5253
      %v5348 = vadd.f32 %v4952, %v5256
      %v5349 = vadd.f32 %v4957, %v5261
      %v5350 = vadd.f32 %v4960, %v5264
      %v5351 = vadd.f32 %v4965, %v5269
      %v5352 = vadd.f32 %v4968, %v5272
      %v5353 = vadd.f32 %v4973, %v5277
      %v5354 = vadd.f32 %v4976, %v5280
      %v5355 = vadd.f32 %v4981, %v5285
      %v5356 = vadd.f32 %v4984, %v5288
      %v5357 = vadd.f32 %v4989, %v5293
      %v5358 = vadd.f32 %v4992, %v5296
      %v5359 = vadd.f32 %v4997, %v5301
      %v5360 = vadd.f32 %v5000, %v5304
      %v5361 = vadd.f32 %v5005, %v5309
      %v5362 = vadd.f32 %v5008, %v5312
      %v5363 = vadd.f32 %v5013, %v5317
      %v5364 = vadd.f32 %v5016, %v5320
      %v5365 = vadd.f32 %v5021, %v5325
      %v5366 = vadd.f32 %v5024, %v5328
      %v5367 = vld [vmem:[%s7] sm:$0x1]
      %v5369 = vlaneseq
      %v5370 = vshrl.u32 %v5369, 7
      %v5371 = vsub.s32 0, %v5370
      %v5372 = vrot.slane %v5367, %v5371
      %v5374 = vadd.f32 %v5331, %v5372
      %v5375 = vadd.f32 %v5332, %v5372
      %v5376 = vadd.f32 %v5333, %v5372
      %v5377 = vadd.f32 %v5334, %v5372
      %v5378 = vadd.f32 %v5335, %v5372
      %v5379 = vadd.f32 %v5336, %v5372
      %v5380 = vadd.f32 %v5337, %v5372
      %v5381 = vadd.f32 %v5338, %v5372
      %v5382 = vadd.f32 %v5339, %v5372
      %v5383 = vadd.f32 %v5340, %v5372
      %v5384 = vadd.f32 %v5341, %v5372
      %v5385 = vadd.f32 %v5342, %v5372
      %v5386 = vadd.f32 %v5343, %v5372
      %v5387 = vadd.f32 %v5344, %v5372
      %v5388 = vadd.f32 %v5345, %v5372
      %v5389 = vadd.f32 %v5346, %v5372
      %v5390 = vadd.f32 %v5347, %v5372
      %v5391 = vadd.f32 %v5348, %v5372
      %v5392 = vadd.f32 %v5349, %v5372
      %v5393 = vadd.f32 %v5350, %v5372
      %v5394 = vadd.f32 %v5351, %v5372
      %v5395 = vadd.f32 %v5352, %v5372
      %v5396 = vadd.f32 %v5353, %v5372
      %v5397 = vadd.f32 %v5354, %v5372
      %v5398 = vadd.f32 %v5355, %v5372
      %v5399 = vadd.f32 %v5356, %v5372
      %v5400 = vadd.f32 %v5357, %v5372
      %v5401 = vadd.f32 %v5358, %v5372
      %v5402 = vadd.f32 %v5359, %v5372
      %v5403 = vadd.f32 %v5360, %v5372
      %v5404 = vadd.f32 %v5361, %v5372
      %v5405 = vadd.f32 %v5362, %v5372
      %v5406 = vadd.f32 %v5363, %v5372
      %v5407 = vadd.f32 %v5364, %v5372
      %v5408 = vadd.f32 %v5365, %v5372
      %v5409 = vadd.f32 %v5366, %v5372
      %v5410 = vld [vmem:[%s300 + $0x13] sm:$0xff]
      %v5411 = vld [vmem:[%s300 + $0x1b] sm:$0xff]
      %v5412 = vld [vmem:[%s300 + $0x23] sm:$0xff]
      %v5413 = vld [vmem:[%s300 + $0x2b] sm:$0xff]
      %v5414 = vld [vmem:[%s300 + $0x33] sm:$0xff]
      %v5415 = vld [vmem:[%s300 + $0x3b] sm:$0xff]
      %v5416 = vld [vmem:[%s300 + $0x43] sm:$0xff]
      %v5417 = vld [vmem:[%s300 + $0x4b] sm:$0xff]
      %v5418 = vld [vmem:[%s300 + $0x53] sm:$0xff]
      %v5419 = vld [vmem:[%s300 + $0x5b] sm:$0xff]
      %v5420 = vld [vmem:[%s300 + $0x63] sm:$0xff]
      %v5421 = vld [vmem:[%s300 + $0x6b] sm:$0xff]
      %v5422 = vld [vmem:[%s300 + $0x73] sm:$0xff]
      %v5423 = vld [vmem:[%s300 + $0x7b] sm:$0xff]
      %v5424 = vld [vmem:[%s300 + $0x83] sm:$0xff]
      %v5425 = vld [vmem:[%s300 + $0x8b] sm:$0xff]
      %v5426 = vld [vmem:[%s300 + $0x93] sm:$0xff]
      %v5427 = vld [vmem:[%s300 + $0x9b] sm:$0xff]
      %v5428 = vld [vmem:[%s300 + $0xa3] sm:$0xff]
      %v5429 = vld [vmem:[%s300 + $0xab] sm:$0xff]
      %v5430 = vld [vmem:[%s300 + $0xb3] sm:$0xff]
      %v5431 = vld [vmem:[%s300 + $0xbb] sm:$0xff]
      %v5432 = vld [vmem:[%s300 + $0xc3] sm:$0xff]
      %v5433 = vld [vmem:[%s300 + $0xcb] sm:$0xff]
      %v5434 = vld [vmem:[%s300 + $0xd3] sm:$0xff]
      %v5435 = vld [vmem:[%s300 + $0xdb] sm:$0xff]
      %v5436 = vld [vmem:[%s300 + $0xe3] sm:$0xff]
      %v5437 = vld [vmem:[%s300 + $0xeb] sm:$0xff]
      %v5438 = vld [vmem:[%s300 + $0xf3] sm:$0xff]
      %v5439 = vld [vmem:[%s300 + $0xfb] sm:$0xff]
      %v5440 = vld [vmem:[%s300 + $0x103] sm:$0xff]
      %v5441 = vld [vmem:[%s300 + $0x10b] sm:$0xff]
      %v5442 = vld [vmem:[%s300 + $0x113] sm:$0xff]
      %v5443 = vld [vmem:[%s300 + $0x11b] sm:$0xff]
      %v5444 = vld [vmem:[%s300 + $0x123] sm:$0xff]
      %v5445 = vld [vmem:[%s300 + $0x12b] sm:$0x3f]
      %v5446 = vadd.f32 %v5410, %v5374
      %v5447 = vadd.f32 %v5411, %v5375
      %v5448 = vadd.f32 %v5412, %v5376
      %v5449 = vadd.f32 %v5413, %v5377
      %v5450 = vadd.f32 %v5414, %v5378
      %v5451 = vadd.f32 %v5415, %v5379
      %v5452 = vadd.f32 %v5416, %v5380
      %v5453 = vadd.f32 %v5417, %v5381
      %v5454 = vadd.f32 %v5418, %v5382
      %v5455 = vadd.f32 %v5419, %v5383
      %v5456 = vadd.f32 %v5420, %v5384
      %v5457 = vadd.f32 %v5421, %v5385
      %v5458 = vadd.f32 %v5422, %v5386
      %v5459 = vadd.f32 %v5423, %v5387
      %v5460 = vadd.f32 %v5424, %v5388
      %v5461 = vadd.f32 %v5425, %v5389
      %v5462 = vadd.f32 %v5426, %v5390
      %v5463 = vadd.f32 %v5427, %v5391
      %v5464 = vadd.f32 %v5428, %v5392
      %v5465 = vadd.f32 %v5429, %v5393
      %v5466 = vadd.f32 %v5430, %v5394
      %v5467 = vadd.f32 %v5431, %v5395
      %v5468 = vadd.f32 %v5432, %v5396
      %v5469 = vadd.f32 %v5433, %v5397
      %v5470 = vadd.f32 %v5434, %v5398
      %v5471 = vadd.f32 %v5435, %v5399
      %v5472 = vadd.f32 %v5436, %v5400
      %v5473 = vadd.f32 %v5437, %v5401
      %v5474 = vadd.f32 %v5438, %v5402
      %v5475 = vadd.f32 %v5439, %v5403
      %v5476 = vadd.f32 %v5440, %v5404
      %v5477 = vadd.f32 %v5441, %v5405
      %v5478 = vadd.f32 %v5442, %v5406
      %v5479 = vadd.f32 %v5443, %v5407
      %v5480 = vadd.f32 %v5444, %v5408
      %v5481 = vadd.f32 %v5445, %v5409
      %5482 = vst.msk [vmem:[%s305 + $0x13] sm:$0xff] %vm973, %v5446
      %5483 = vst.msk [vmem:[%s305 + $0x1b] sm:$0xff] %vm973, %v5447
      %5484 = vst.msk [vmem:[%s305 + $0x23] sm:$0xff] %vm973, %v5448
      %5485 = vst.msk [vmem:[%s305 + $0x2b] sm:$0xff] %vm973, %v5449
      %5486 = vst.msk [vmem:[%s305 + $0x33] sm:$0xff] %vm973, %v5450
      %5487 = vst.msk [vmem:[%s305 + $0x3b] sm:$0xff] %vm973, %v5451
      %5488 = vst.msk [vmem:[%s305 + $0x43] sm:$0xff] %vm973, %v5452
      %5489 = vst.msk [vmem:[%s305 + $0x4b] sm:$0xff] %vm973, %v5453
      %5490 = vst.msk [vmem:[%s305 + $0x53] sm:$0xff] %vm973, %v5454
      %5491 = vst.msk [vmem:[%s305 + $0x5b] sm:$0xff] %vm973, %v5455
      %5492 = vst.msk [vmem:[%s305 + $0x63] sm:$0xff] %vm973, %v5456
      %5493 = vst.msk [vmem:[%s305 + $0x6b] sm:$0xff] %vm973, %v5457
      %5494 = vst.msk [vmem:[%s305 + $0x73] sm:$0xff] %vm973, %v5458
      %5495 = vst.msk [vmem:[%s305 + $0x7b] sm:$0xff] %vm973, %v5459
      %5496 = vst.msk [vmem:[%s305 + $0x83] sm:$0xff] %vm973, %v5460
      %5497 = vst.msk [vmem:[%s305 + $0x8b] sm:$0xff] %vm973, %v5461
      %5498 = vst.msk [vmem:[%s305 + $0x93] sm:$0xff] %vm973, %v5462
      %5499 = vst.msk [vmem:[%s305 + $0x9b] sm:$0xff] %vm973, %v5463
      %5500 = vst.msk [vmem:[%s305 + $0xa3] sm:$0xff] %vm973, %v5464
      %5501 = vst.msk [vmem:[%s305 + $0xab] sm:$0xff] %vm973, %v5465
      %5502 = vst.msk [vmem:[%s305 + $0xb3] sm:$0xff] %vm973, %v5466
      %5503 = vst.msk [vmem:[%s305 + $0xbb] sm:$0xff] %vm973, %v5467
      %5504 = vst.msk [vmem:[%s305 + $0xc3] sm:$0xff] %vm973, %v5468
      %5505 = vst.msk [vmem:[%s305 + $0xcb] sm:$0xff] %vm973, %v5469
      %5506 = vst.msk [vmem:[%s305 + $0xd3] sm:$0xff] %vm973, %v5470
      %5507 = vst.msk [vmem:[%s305 + $0xdb] sm:$0xff] %vm973, %v5471
      %5508 = vst.msk [vmem:[%s305 + $0xe3] sm:$0xff] %vm973, %v5472
      %5509 = vst.msk [vmem:[%s305 + $0xeb] sm:$0xff] %vm973, %v5473
      %5510 = vst.msk [vmem:[%s305 + $0xf3] sm:$0xff] %vm973, %v5474
      %5511 = vst.msk [vmem:[%s305 + $0xfb] sm:$0xff] %vm973, %v5475
      %5512 = vst.msk [vmem:[%s305 + $0x103] sm:$0xff] %vm973, %v5476
      %5513 = vst.msk [vmem:[%s305 + $0x10b] sm:$0xff] %vm973, %v5477
      %5514 = vst.msk [vmem:[%s305 + $0x113] sm:$0xff] %vm973, %v5478
      %5515 = vst.msk [vmem:[%s305 + $0x11b] sm:$0xff] %vm973, %v5479
      %5516 = vst.msk [vmem:[%s305 + $0x123] sm:$0xff] %vm973, %v5480
      %vm5517 = vcmask 521216
      %5518 = vst.msk [vmem:[%s305 + $0x12b] sm:$0x3f] %vm5517, %v5481
      %p5519 = scmp.lt.s32.totalorder %s19, 1
      %s5520 = scalar_select %p5519, %s19, 1
      %s5521 = smul.addr %s5520, 41
      %s5522 = smul.addr %s5521, 8
      %s5523 = scalar_lea.vmem %s8, %s5522
      // Predicated region
      $region53: #{tpu_custom_call.1} parent=51 // pred_check
        %p5524 = pneg %p210
      $region54: #{tpu_custom_call.1} parent=51 // pred_check_branch
        %5526 = sbr.rel (%p5524) target = $region56
      $region55: #{tpu_custom_call.1} parent=51 // pred_region
        _
      $region56: #{tpu_custom_call.1} parent=51 // pred_fallthru
        _
    $region52: #{tpu_custom_call.1} parent=5 // pred_fallthru
      _
    %p5527 = scmp.le.s32.totalorder 2, %s14
    // Predicated region
    $region57: #{tpu_custom_call.1} parent=5 // pred_check
      %p5528 = pneg %p5527
    $region58: #{tpu_custom_call.1} parent=5 // pred_check_branch
      %5530 = sbr.rel (%p5528) target = $region60
    $region59: #{tpu_custom_call.1} parent=5 // pred_region
      %s5531 = ssub.s32 %s14, 2
      // Predicated region
      $region61: #{tpu_custom_call.1} parent=59 // pred_check
        %p5532 = pneg %p216
      $region62: #{tpu_custom_call.1} parent=59 // pred_check_branch
        %5534 = sbr.rel (%p5532) target = $region64
      $region63: #{tpu_custom_call.1} parent=59 // pred_region
        %p5535 = scmp.lt.s32.totalorder %s20, 1
        %s5536 = scalar_select %p5535, %s20, 1
        %s5537 = smul.addr %s5536, 41
        %s5538 = smul.addr %s5537, 8
        %s5539 = scalar_lea.vmem %s8, %s5538
      $region64: #{tpu_custom_call.1} parent=59 // pred_fallthru
        _
    $region60: #{tpu_custom_call.1} parent=5 // pred_fallthru
      _
  $region6: #{tpu_custom_call.1} parent=0 // loop_footer
    %s18 = sadd.s32 1, %s14
  $region7: #{tpu_custom_call.1} parent=0 // loop_footer_branch
    %13 = sbr.rel target = $region3
  $region8: #{tpu_custom_call.1} parent=0 // loop_exit
    _

</llo_original>
